<compile_context>
chip_gen: v7x
topology: tpu7x:2x2x1
jax: 0.10.0
libtpu: 0.0.40
codegen_flags: <defaults>
</compile_context>

<pallas_src>
import math

import jax
import jax.numpy as jnp
from jax.experimental import pallas as pl
from jax.experimental.pallas import tpu as pltpu


def _round_up(x, m):
    return (x + m - 1) // m * m


def _cdiv(a, b):
    return (a + b - 1) // b


def _pick_toh(OH, OW, target_tm):
    """Whole output rows per tile.  TM = TOH*OW must be a multiple of 128 (lane-dense
    stores / legal non-full blocks) unless a single tile covers the whole image."""
    g = 128 // math.gcd(OW, 128)              # smallest TOH making (TOH*OW) % 128 == 0
    toh = max(1, target_tm // max(OW, 1))
    toh = max(g, (toh // g) * g)
    return OH if toh >= OH else toh


def conv2d_relu(x, weight, gamma, beta, *, stride=1, padding=0, eps=1e-5,
                target_tile_m=2048, mxu_dtype=jnp.bfloat16):
    """Conv2d (no bias) + BatchNorm2d (batch stats, biased var) + ReLU.

    x:      (N, C, H, W)    float32, NCHW
    weight: (OC, C, KH, KW) float32
    gamma, beta: (OC,)      float32
    returns (N, OC, OH, OW) float32
    """
    N, C, H, W = x.shape
    OC, _, KH, KW = weight.shape
    OH = (H + 2 * padding - KH) // stride + 1
    OW = (W + 2 * padding - KW) // stride + 1
    assert OH > 0 and OW > 0

    OCp = _round_up(OC, 8)          # sublane granule only -- no 128-wide OC padding
    M_img = OH * OW
    M_total = N * M_img

    TOH = _pick_toh(OH, OW, target_tile_m)
    tiles = _cdiv(OH, TOH)
    if N * tiles == 1 and OH > 1:
        # v7x megacore: try to give the second TensorCore at least one tile.
        g = 128 // math.gcd(OW, 128)
        toh2 = _round_up(_cdiv(OH, 2), g)
        if toh2 < OH:
            TOH, tiles = toh2, _cdiv(OH, toh2)
    TM = TOH * OW
    M_img_pad = tiles * TM
    needs_mask = (OH % TOH) != 0

    # ---- glue: NCHW -> NHWC once (input-sized), spatial zero-pad (+ extra bottom rows
    #      so the last row tile never reads out of bounds), cast to bf16 for the MXU.
    Hp = H + 2 * padding
    Wp = W + 2 * padding
    extra_h = max(0, (tiles * TOH - 1) * stride + KH - Hp)
    Hp_pad = Hp + extra_h
    x_nhwc = jnp.transpose(x, (0, 2, 3, 1))
    xp = jnp.pad(x_nhwc, ((0, 0), (padding, padding + extra_h),
                          (padding, padding), (0, 0))).astype(mxu_dtype)

    # Per-tap weight matrices: (OC, C, KH, KW) -> (KH*KW, C, OCp), OC zero-padded.
    w_k = jnp.transpose(weight, (2, 3, 1, 0)).reshape(KH * KW, C, OC)
    w_k = jnp.pad(w_k, ((0, 0), (0, 0), (0, OCp - OC))).astype(mxu_dtype)

    # Generation-aware VMEM budget (v5e/v6e: 128 MiB -> ~96 MiB; v7x: 64 MiB -> 48 MiB).
    try:
        vmem_cap = pltpu.get_tpu_info().vmem_capacity_bytes
    except Exception:
        vmem_cap = 64 * 1024 * 1024
    vmem_limit = min(int(vmem_cap * 0.75), 100 * 1024 * 1024)

    compiler_params = pltpu.CompilerParams(
        dimension_semantics=("parallel", "parallel"),
        vmem_limit_bytes=vmem_limit,
    )

    # ---------------- Pass 1: direct conv (shift-and-matmul) + BN partial stats ------
    def _conv_stats_kernel(x_ref, w_ref, y_ref, stats_ref):
        # x_ref:     (1, Hp_pad, Wp, C)  bf16  -- full padded image, resident per n
        # w_ref:     (KH*KW, C, OCp)     bf16  -- resident tap weights
        # y_ref:     (1, TM, OCp)        bf16  -- conv output tile (M-major)
        # stats_ref: (1, 1, 2, OCp)      f32   -- row 0: sum, row 1: sum of squares
        t = pl.program_id(1)
        h0 = t * (TOH * stride)
        acc = jnp.zeros((TM, OCp), jnp.float32)
        for k in range(KH * KW):                       # static loop over taps
            kh, kw = k // KW, k % KW
            if stride == 1:
                xs = x_ref[0, pl.ds(h0 + kh, TOH), pl.ds(kw, OW), :]
            else:
                xs = x_ref[0, pl.ds(h0 + kh, TOH, stride),
                           pl.ds(kw, OW, stride), :]
            # (TOH, OW, C) -> (TM, C): leading-dim merge, lane dim (C) unchanged.
            acc = acc + jnp.dot(xs.reshape(TM, C), w_ref[k],
                                preferred_element_type=jnp.float32)
        y_ref[0] = acc.astype(y_ref.dtype)

        if needs_mask:
            # Last row tile covers rows >= OH; exclude them from the batch statistics.
            valid_m = jnp.minimum(TOH, OH - t * TOH) * OW
            ridx = jax.lax.broadcasted_iota(jnp.int32, (TM, OCp), 0)
            accm = jnp.where(ridx < valid_m, acc, 0.0)
        else:
            accm = acc
        stats_ref[0, 0, 0:1, :] = jnp.sum(accm, axis=0, keepdims=True)
        stats_ref[0, 0, 1:2, :] = jnp.sum(accm * accm, axis=0, keepdims=True)

    y_flat, stats = pl.pallas_call(
        _conv_stats_kernel,
        out_shape=(
            jax.ShapeDtypeStruct((N, M_img_pad, OCp), mxu_dtype),
            jax.ShapeDtypeStruct((N, tiles, 2, OCp), jnp.float32),
        ),
        grid_spec=pltpu.PrefetchScalarGridSpec(
            num_scalar_prefetch=0,
            grid=(N, tiles),
            in_specs=[
                pl.BlockSpec((1, Hp_pad, Wp, C), lambda n, t: (n, 0, 0, 0)),
                pl.BlockSpec((KH * KW, C, OCp), lambda n, t: (0, 0, 0)),
            ],
            out_specs=[
                pl.BlockSpec((1, TM, OCp), lambda n, t: (n, t, 0)),
                pl.BlockSpec((1, 1, 2, OCp), lambda n, t: (n, t, 0, 0)),
            ],
        ),
        compiler_params=compiler_params,
        cost_estimate=pl.CostEstimate(
            flops=2 * N * M_img_pad * KH * KW * C * OCp,
            transcendentals=0,
            bytes_accessed=int(xp.size * xp.dtype.itemsize
                               + w_k.size * w_k.dtype.itemsize
                               + N * M_img_pad * OCp * jnp.dtype(mxu_dtype).itemsize
                               + N * tiles * 2 * OCp * 4),
        ),
    )(xp, w_k)

    # ---- tiny OC-sized glue: fold batch stats + gamma/beta into scale/shift ---------
    ch_sum = jnp.sum(stats[:, :, 0, :], axis=(0, 1))         # (OCp,)
    ch_sumsq = jnp.sum(stats[:, :, 1, :], axis=(0, 1))       # (OCp,)
    mean = ch_sum / M_total
    var = jnp.maximum(ch_sumsq / M_total - mean * mean, 0.0)  # biased (training) var
    inv_std = jax.lax.rsqrt(var + eps)
    gamma_p = jnp.pad(gamma.astype(jnp.float32), (0, OCp - OC))
    beta_p = jnp.pad(beta.astype(jnp.float32), (0, OCp - OC))
    scale = (gamma_p * inv_std).reshape(1, OCp)
    shift = (beta_p - mean * gamma_p * inv_std).reshape(1, OCp)

    # ---------------- Pass 2: folded BN affine + ReLU + in-kernel transpose ----------
    def _bn_relu_kernel(y_ref, scale_ref, shift_ref, out_ref):
        # y_ref: (1, TM, OCp) bf16; scale/shift: (1, OCp) f32; out_ref: (1, OCp, TM) f32
        z = y_ref[0].astype(jnp.float32) * scale_ref[...] + shift_ref[...]
        z = jnp.maximum(z, 0.0)
        # (TM, OCp) -> (OCp, TM): XLU is idle in this elementwise pass; writing the
        # OC-major layout makes the final NCHW result a free reshape and the output
        # stores lane-dense.
        out_ref[0] = jnp.transpose(z, (1, 0))

    out_ocm = pl.pallas_call(
        _bn_relu_kernel,
        out_shape=jax.ShapeDtypeStruct((N, OCp, M_img_pad), jnp.float32),
        grid_spec=pltpu.PrefetchScalarGridSpec(
            num_scalar_prefetch=0,
            grid=(N, tiles),
            in_specs=[
                pl.BlockSpec((1, TM, OCp), lambda n, t: (n, t, 0)),
                pl.BlockSpec((1, OCp), lambda n, t: (0, 0)),
                pl.BlockSpec((1, OCp), lambda n, t: (0, 0)),
            ],
            out_specs=pl.BlockSpec((1, OCp, TM), lambda n, t: (n, 0, t)),
        ),
        compiler_params=compiler_params,
        cost_estimate=pl.CostEstimate(
            flops=2 * N * M_img_pad * OCp,
            transcendentals=0,
            bytes_accessed=int(N * M_img_pad * OCp
                               * (jnp.dtype(mxu_dtype).itemsize + 4)),
        ),
    )(y_flat, scale, shift)

    # OC-major output: (N, OCp, M_img_pad) -> (N, OC, OH, OW); pure reshape when no pad.
    if OCp != OC or M_img_pad != M_img:
        out_ocm = out_ocm[:, :OC, :M_img]
    return out_ocm.reshape(N, OC, OH, OW)


def _reference(x, weight, gamma, beta, *, stride, padding, eps):
    """Pure-JAX f32 reference matching PyTorch Conv2d(bias=False)+BN(train)+ReLU."""
    y = jax.lax.conv_general_dilated(
        x, weight, window_strides=(stride, stride),
        padding=[(padding, padding), (padding, padding)],
        dimension_numbers=("NCHW", "OIHW", "NCHW"))
    mean = y.mean(axis=(0, 2, 3), keepdims=True)
    var = ((y - mean) ** 2).mean(axis=(0, 2, 3), keepdims=True)
    y_hat = (y - mean) * jax.lax.rsqrt(var + eps)
    z = y_hat * gamma.reshape(1, -1, 1, 1) + beta.reshape(1, -1, 1, 1)
    return jnp.maximum(z, 0.0)


if __name__ == "__main__":
    # Conv2dReLU(in_channels=4, out_channels=8, kernel_size=3, padding=1, use_batchnorm=True)
    key = jax.random.PRNGKey(0)
    k_x, k_w = jax.random.split(key)

    N, C, H, W = 2, 4, 16, 16
    OC, KH, KW = 8, 3, 3
    padding, stride, eps = 1, 1, 1e-5

    x = jax.random.normal(k_x, (N, C, H, W), dtype=jnp.float32)
    weight = jax.random.normal(k_w, (OC, C, KH, KW), dtype=jnp.float32) * 0.1
    gamma = jnp.ones((OC,), dtype=jnp.float32)   # BatchNorm2d default affine init
    beta = jnp.zeros((OC,), dtype=jnp.float32)

    fn = jax.jit(lambda a, b, c, d: conv2d_relu(a, b, c, d,
                                                stride=stride, padding=padding, eps=eps))
    out = fn(x, weight, gamma, beta)
    jax.block_until_ready(out)

    assert out.shape == (N, OC, H, W), out.shape

    ref = _reference(x, weight, gamma, beta, stride=stride, padding=padding, eps=eps)
    # bf16 MXU inputs + bf16 inter-pass tensor -> small deviation from the f32 reference.
    assert bool(jnp.allclose(out, ref, atol=1e-1, rtol=1e-1)), float(jnp.max(jnp.abs(out - ref)))
    assert bool(jnp.all(out >= 0.0))

    print("KERNEL_OK")
</pallas_src>

<mosaic_0001>
module attributes {stable_mosaic.version = 11 : i64} {
  func.func @_conv_stats_kernel(%arg0: i32, %arg1: i32, %arg2: memref<1x18x18x4xbf16, #tpu.memory_space<vmem>>, %arg3: memref<9x4x8xbf16, #tpu.memory_space<vmem>>, %arg4: memref<1x256x8xbf16, #tpu.memory_space<vmem>>, %arg5: memref<1x1x2x8xf32, #tpu.memory_space<vmem>>) attributes {dimension_semantics = [#tpu.dimension_semantics<parallel>, #tpu.dimension_semantics<parallel>], iteration_bounds = array<i64: 2, 1>, scalar_prefetch = 0 : i64, scratch_operands = 0 : i64, tpu.core_type = #tpu.core_type<tc>, window_params = [{transform_indices = @transform_0, window_bounds = array<i64: 1, 18, 18, 4>}, {pipeline_mode = #tpu.pipeline_mode<synchronous>, transform_indices = @transform_1, window_bounds = array<i64: 9, 4, 8>}, {transform_indices = @transform_2, window_bounds = array<i64: 1, 256, 8>}, {transform_indices = @transform_3, window_bounds = array<i64: 1, 1, 2, 8>}]} {
    %c16_i32 = arith.constant 16 : i32
    %0 = arith.muli %arg1, %c16_i32 : i32
    %cst = arith.constant 0.000000e+00 : f32
    %1 = vector.broadcast %cst : f32 to vector<256x8xf32>
    %c0_i32 = arith.constant 0 : i32
    %2 = arith.addi %0, %c0_i32 : i32
    %c0 = arith.constant 0 : index
    %3 = arith.index_cast %2 : i32 to index
    %c0_0 = arith.constant 0 : index
    %c0_1 = arith.constant 0 : index
    %4 = vector.load %arg2[%c0, %3, %c0_0, %c0_1] : memref<1x18x18x4xbf16, #tpu.memory_space<vmem>>, vector<1x16x16x4xbf16>
    %5 = vector.shape_cast %4 : vector<1x16x16x4xbf16> to vector<16x16x4xbf16>
    %6 = vector.shape_cast %5 : vector<16x16x4xbf16> to vector<256x4xbf16>
    %c0_2 = arith.constant 0 : index
    %c0_3 = arith.constant 0 : index
    %c0_4 = arith.constant 0 : index
    %7 = vector.load %arg3[%c0_2, %c0_3, %c0_4] : memref<9x4x8xbf16, #tpu.memory_space<vmem>>, vector<1x4x8xbf16>
    %8 = vector.shape_cast %7 : vector<1x4x8xbf16> to vector<4x8xbf16>
    %cst_5 = arith.constant dense<0.000000e+00> : vector<256x8xf32>
    %9 = tpu.matmul %6, %8, %cst_5 {dimension_numbers = #tpu.dot_dimension_numbers<[1], [0], [0], [1], [0, 0, 1, 1], [], []>} : vector<256x4xbf16>, vector<4x8xbf16>, vector<256x8xf32> -> vector<256x8xf32>
    %10 = arith.addf %1, %9 : vector<256x8xf32>
    %c0_i32_6 = arith.constant 0 : i32
    %11 = arith.addi %0, %c0_i32_6 : i32
    %c0_7 = arith.constant 0 : index
    %12 = arith.index_cast %11 : i32 to index
    %c1 = arith.constant 1 : index
    %c0_8 = arith.constant 0 : index
    %13 = vector.load %arg2[%c0_7, %12, %c1, %c0_8] : memref<1x18x18x4xbf16, #tpu.memory_space<vmem>>, vector<1x16x16x4xbf16>
    %14 = vector.shape_cast %13 : vector<1x16x16x4xbf16> to vector<16x16x4xbf16>
    %15 = vector.shape_cast %14 : vector<16x16x4xbf16> to vector<256x4xbf16>
    %c1_9 = arith.constant 1 : index
    %c0_10 = arith.constant 0 : index
    %c0_11 = arith.constant 0 : index
    %16 = vector.load %arg3[%c1_9, %c0_10, %c0_11] : memref<9x4x8xbf16, #tpu.memory_space<vmem>>, vector<1x4x8xbf16>
    %17 = vector.shape_cast %16 : vector<1x4x8xbf16> to vector<4x8xbf16>
    %cst_12 = arith.constant dense<0.000000e+00> : vector<256x8xf32>
    %18 = tpu.matmul %15, %17, %cst_12 {dimension_numbers = #tpu.dot_dimension_numbers<[1], [0], [0], [1], [0, 0, 1, 1], [], []>} : vector<256x4xbf16>, vector<4x8xbf16>, vector<256x8xf32> -> vector<256x8xf32>
    %19 = arith.addf %10, %18 : vector<256x8xf32>
    %c0_i32_13 = arith.constant 0 : i32
    %20 = arith.addi %0, %c0_i32_13 : i32
    %c0_14 = arith.constant 0 : index
    %21 = arith.index_cast %20 : i32 to index
    %c2 = arith.constant 2 : index
    %c0_15 = arith.constant 0 : index
    %22 = vector.load %arg2[%c0_14, %21, %c2, %c0_15] : memref<1x18x18x4xbf16, #tpu.memory_space<vmem>>, vector<1x16x16x4xbf16>
    %23 = vector.shape_cast %22 : vector<1x16x16x4xbf16> to vector<16x16x4xbf16>
    %24 = vector.shape_cast %23 : vector<16x16x4xbf16> to vector<256x4xbf16>
    %c2_16 = arith.constant 2 : index
    %c0_17 = arith.constant 0 : index
    %c0_18 = arith.constant 0 : index
    %25 = vector.load %arg3[%c2_16, %c0_17, %c0_18] : memref<9x4x8xbf16, #tpu.memory_space<vmem>>, vector<1x4x8xbf16>
    %26 = vector.shape_cast %25 : vector<1x4x8xbf16> to vector<4x8xbf16>
    %cst_19 = arith.constant dense<0.000000e+00> : vector<256x8xf32>
    %27 = tpu.matmul %24, %26, %cst_19 {dimension_numbers = #tpu.dot_dimension_numbers<[1], [0], [0], [1], [0, 0, 1, 1], [], []>} : vector<256x4xbf16>, vector<4x8xbf16>, vector<256x8xf32> -> vector<256x8xf32>
    %28 = arith.addf %19, %27 : vector<256x8xf32>
    %c1_i32 = arith.constant 1 : i32
    %29 = arith.addi %0, %c1_i32 : i32
    %c0_20 = arith.constant 0 : index
    %30 = arith.index_cast %29 : i32 to index
    %c0_21 = arith.constant 0 : index
    %c0_22 = arith.constant 0 : index
    %31 = vector.load %arg2[%c0_20, %30, %c0_21, %c0_22] : memref<1x18x18x4xbf16, #tpu.memory_space<vmem>>, vector<1x16x16x4xbf16>
    %32 = vector.shape_cast %31 : vector<1x16x16x4xbf16> to vector<16x16x4xbf16>
    %33 = vector.shape_cast %32 : vector<16x16x4xbf16> to vector<256x4xbf16>
    %c3 = arith.constant 3 : index
    %c0_23 = arith.constant 0 : index
    %c0_24 = arith.constant 0 : index
    %34 = vector.load %arg3[%c3, %c0_23, %c0_24] : memref<9x4x8xbf16, #tpu.memory_space<vmem>>, vector<1x4x8xbf16>
    %35 = vector.shape_cast %34 : vector<1x4x8xbf16> to vector<4x8xbf16>
    %cst_25 = arith.constant dense<0.000000e+00> : vector<256x8xf32>
    %36 = tpu.matmul %33, %35, %cst_25 {dimension_numbers = #tpu.dot_dimension_numbers<[1], [0], [0], [1], [0, 0, 1, 1], [], []>} : vector<256x4xbf16>, vector<4x8xbf16>, vector<256x8xf32> -> vector<256x8xf32>
    %37 = arith.addf %28, %36 : vector<256x8xf32>
    %c1_i32_26 = arith.constant 1 : i32
    %38 = arith.addi %0, %c1_i32_26 : i32
    %c0_27 = arith.constant 0 : index
    %39 = arith.index_cast %38 : i32 to index
    %c1_28 = arith.constant 1 : index
    %c0_29 = arith.constant 0 : index
    %40 = vector.load %arg2[%c0_27, %39, %c1_28, %c0_29] : memref<1x18x18x4xbf16, #tpu.memory_space<vmem>>, vector<1x16x16x4xbf16>
    %41 = vector.shape_cast %40 : vector<1x16x16x4xbf16> to vector<16x16x4xbf16>
    %42 = vector.shape_cast %41 : vector<16x16x4xbf16> to vector<256x4xbf16>
    %c4 = arith.constant 4 : index
    %c0_30 = arith.constant 0 : index
    %c0_31 = arith.constant 0 : index
    %43 = vector.load %arg3[%c4, %c0_30, %c0_31] : memref<9x4x8xbf16, #tpu.memory_space<vmem>>, vector<1x4x8xbf16>
    %44 = vector.shape_cast %43 : vector<1x4x8xbf16> to vector<4x8xbf16>
    %cst_32 = arith.constant dense<0.000000e+00> : vector<256x8xf32>
    %45 = tpu.matmul %42, %44, %cst_32 {dimension_numbers = #tpu.dot_dimension_numbers<[1], [0], [0], [1], [0, 0, 1, 1], [], []>} : vector<256x4xbf16>, vector<4x8xbf16>, vector<256x8xf32> -> vector<256x8xf32>
    %46 = arith.addf %37, %45 : vector<256x8xf32>
    %c1_i32_33 = arith.constant 1 : i32
    %47 = arith.addi %0, %c1_i32_33 : i32
    %c0_34 = arith.constant 0 : index
    %48 = arith.index_cast %47 : i32 to index
    %c2_35 = arith.constant 2 : index
    %c0_36 = arith.constant 0 : index
    %49 = vector.load %arg2[%c0_34, %48, %c2_35, %c0_36] : memref<1x18x18x4xbf16, #tpu.memory_space<vmem>>, vector<1x16x16x4xbf16>
    %50 = vector.shape_cast %49 : vector<1x16x16x4xbf16> to vector<16x16x4xbf16>
    %51 = vector.shape_cast %50 : vector<16x16x4xbf16> to vector<256x4xbf16>
    %c5 = arith.constant 5 : index
    %c0_37 = arith.constant 0 : index
    %c0_38 = arith.constant 0 : index
    %52 = vector.load %arg3[%c5, %c0_37, %c0_38] : memref<9x4x8xbf16, #tpu.memory_space<vmem>>, vector<1x4x8xbf16>
    %53 = vector.shape_cast %52 : vector<1x4x8xbf16> to vector<4x8xbf16>
    %cst_39 = arith.constant dense<0.000000e+00> : vector<256x8xf32>
    %54 = tpu.matmul %51, %53, %cst_39 {dimension_numbers = #tpu.dot_dimension_numbers<[1], [0], [0], [1], [0, 0, 1, 1], [], []>} : vector<256x4xbf16>, vector<4x8xbf16>, vector<256x8xf32> -> vector<256x8xf32>
    %55 = arith.addf %46, %54 : vector<256x8xf32>
    %c2_i32 = arith.constant 2 : i32
    %56 = arith.addi %0, %c2_i32 : i32
    %c0_40 = arith.constant 0 : index
    %57 = arith.index_cast %56 : i32 to index
    %c0_41 = arith.constant 0 : index
    %c0_42 = arith.constant 0 : index
    %58 = vector.load %arg2[%c0_40, %57, %c0_41, %c0_42] : memref<1x18x18x4xbf16, #tpu.memory_space<vmem>>, vector<1x16x16x4xbf16>
    %59 = vector.shape_cast %58 : vector<1x16x16x4xbf16> to vector<16x16x4xbf16>
    %60 = vector.shape_cast %59 : vector<16x16x4xbf16> to vector<256x4xbf16>
    %c6 = arith.constant 6 : index
    %c0_43 = arith.constant 0 : index
    %c0_44 = arith.constant 0 : index
    %61 = vector.load %arg3[%c6, %c0_43, %c0_44] : memref<9x4x8xbf16, #tpu.memory_space<vmem>>, vector<1x4x8xbf16>
    %62 = vector.shape_cast %61 : vector<1x4x8xbf16> to vector<4x8xbf16>
    %cst_45 = arith.constant dense<0.000000e+00> : vector<256x8xf32>
    %63 = tpu.matmul %60, %62, %cst_45 {dimension_numbers = #tpu.dot_dimension_numbers<[1], [0], [0], [1], [0, 0, 1, 1], [], []>} : vector<256x4xbf16>, vector<4x8xbf16>, vector<256x8xf32> -> vector<256x8xf32>
    %64 = arith.addf %55, %63 : vector<256x8xf32>
    %c2_i32_46 = arith.constant 2 : i32
    %65 = arith.addi %0, %c2_i32_46 : i32
    %c0_47 = arith.constant 0 : index
    %66 = arith.index_cast %65 : i32 to index
    %c1_48 = arith.constant 1 : index
    %c0_49 = arith.constant 0 : index
    %67 = vector.load %arg2[%c0_47, %66, %c1_48, %c0_49] : memref<1x18x18x4xbf16, #tpu.memory_space<vmem>>, vector<1x16x16x4xbf16>
    %68 = vector.shape_cast %67 : vector<1x16x16x4xbf16> to vector<16x16x4xbf16>
    %69 = vector.shape_cast %68 : vector<16x16x4xbf16> to vector<256x4xbf16>
    %c7 = arith.constant 7 : index
    %c0_50 = arith.constant 0 : index
    %c0_51 = arith.constant 0 : index
    %70 = vector.load %arg3[%c7, %c0_50, %c0_51] : memref<9x4x8xbf16, #tpu.memory_space<vmem>>, vector<1x4x8xbf16>
    %71 = vector.shape_cast %70 : vector<1x4x8xbf16> to vector<4x8xbf16>
    %cst_52 = arith.constant dense<0.000000e+00> : vector<256x8xf32>
    %72 = tpu.matmul %69, %71, %cst_52 {dimension_numbers = #tpu.dot_dimension_numbers<[1], [0], [0], [1], [0, 0, 1, 1], [], []>} : vector<256x4xbf16>, vector<4x8xbf16>, vector<256x8xf32> -> vector<256x8xf32>
    %73 = arith.addf %64, %72 : vector<256x8xf32>
    %c2_i32_53 = arith.constant 2 : i32
    %74 = arith.addi %0, %c2_i32_53 : i32
    %c0_54 = arith.constant 0 : index
    %75 = arith.index_cast %74 : i32 to index
    %c2_55 = arith.constant 2 : index
    %c0_56 = arith.constant 0 : index
    %76 = vector.load %arg2[%c0_54, %75, %c2_55, %c0_56] : memref<1x18x18x4xbf16, #tpu.memory_space<vmem>>, vector<1x16x16x4xbf16>
    %77 = vector.shape_cast %76 : vector<1x16x16x4xbf16> to vector<16x16x4xbf16>
    %78 = vector.shape_cast %77 : vector<16x16x4xbf16> to vector<256x4xbf16>
    %c8 = arith.constant 8 : index
    %c0_57 = arith.constant 0 : index
    %c0_58 = arith.constant 0 : index
    %79 = vector.load %arg3[%c8, %c0_57, %c0_58] : memref<9x4x8xbf16, #tpu.memory_space<vmem>>, vector<1x4x8xbf16>
    %80 = vector.shape_cast %79 : vector<1x4x8xbf16> to vector<4x8xbf16>
    %cst_59 = arith.constant dense<0.000000e+00> : vector<256x8xf32>
    %81 = tpu.matmul %78, %80, %cst_59 {dimension_numbers = #tpu.dot_dimension_numbers<[1], [0], [0], [1], [0, 0, 1, 1], [], []>} : vector<256x4xbf16>, vector<4x8xbf16>, vector<256x8xf32> -> vector<256x8xf32>
    %82 = arith.addf %73, %81 : vector<256x8xf32>
    %83 = arith.truncf %82 : vector<256x8xf32> to vector<256x8xbf16>
    %c0_60 = arith.constant 0 : index
    %c0_61 = arith.constant 0 : index
    %c0_62 = arith.constant 0 : index
    %84 = vector.load %arg4[%c0_60, %c0_61, %c0_62] : memref<1x256x8xbf16, #tpu.memory_space<vmem>>, vector<1x256x8xbf16>
    %85 = vector.shape_cast %84 : vector<1x256x8xbf16> to vector<256x8xbf16>
    %86 = vector.shape_cast %83 : vector<256x8xbf16> to vector<1x256x8xbf16>
    tpu.vector_store %arg4[%c0_60, %c0_61, %c0_62], %86 {strides = array<i32>} : memref<1x256x8xbf16, #tpu.memory_space<vmem>>, vector<1x256x8xbf16>,
    %cst_63 = arith.constant dense<0.000000e+00> : vector<8xf32>
    %87 = vector.multi_reduction <add>, %82, %cst_63 [0] : vector<256x8xf32> to vector<8xf32>
    %88 = vector.shape_cast %87 : vector<8xf32> to vector<1x8xf32>
    %c0_64 = arith.constant 0 : index
    %c0_65 = arith.constant 0 : index
    %c0_66 = arith.constant 0 : index
    %c0_67 = arith.constant 0 : index
    %89 = vector.load %arg5[%c0_64, %c0_65, %c0_66, %c0_67] : memref<1x1x2x8xf32, #tpu.memory_space<vmem>>, vector<1x1x1x8xf32>
    %90 = vector.shape_cast %89 : vector<1x1x1x8xf32> to vector<1x8xf32>
    %91 = vector.shape_cast %88 : vector<1x8xf32> to vector<1x1x1x8xf32>
    tpu.vector_store %arg5[%c0_64, %c0_65, %c0_66, %c0_67], %91 {strides = array<i32>} : memref<1x1x2x8xf32, #tpu.memory_space<vmem>>, vector<1x1x1x8xf32>,
    %92 = arith.mulf %82, %82 : vector<256x8xf32>
    %cst_68 = arith.constant dense<0.000000e+00> : vector<8xf32>
    %93 = vector.multi_reduction <add>, %92, %cst_68 [0] : vector<256x8xf32> to vector<8xf32>
    %94 = vector.shape_cast %93 : vector<8xf32> to vector<1x8xf32>
    %c0_69 = arith.constant 0 : index
    %c0_70 = arith.constant 0 : index
    %c1_71 = arith.constant 1 : index
    %c0_72 = arith.constant 0 : index
    %95 = vector.load %arg5[%c0_69, %c0_70, %c1_71, %c0_72] : memref<1x1x2x8xf32, #tpu.memory_space<vmem>>, vector<1x1x1x8xf32>
    %96 = vector.shape_cast %95 : vector<1x1x1x8xf32> to vector<1x8xf32>
    %97 = vector.shape_cast %94 : vector<1x8xf32> to vector<1x1x1x8xf32>
    tpu.vector_store %arg5[%c0_69, %c0_70, %c1_71, %c0_72], %97 {strides = array<i32>} : memref<1x1x2x8xf32, #tpu.memory_space<vmem>>, vector<1x1x1x8xf32>,
    return
  }
  func.func @transform_0(%arg0: i32, %arg1: i32) -> (i32, i32, i32, i32) {
    %c0_i32 = arith.constant 0 : i32
    %c0_i32_0 = arith.constant 0 : i32
    %c0_i32_1 = arith.constant 0 : i32
    %c0_i32_2 = arith.constant 0 : i32
    return %arg0, %c0_i32, %c0_i32_0, %c0_i32_1 : i32, i32, i32, i32
  }
  func.func @transform_1(%arg0: i32, %arg1: i32) -> (i32, i32, i32) {
    %c0_i32 = arith.constant 0 : i32
    %c0_i32_0 = arith.constant 0 : i32
    %c0_i32_1 = arith.constant 0 : i32
    %c0_i32_2 = arith.constant 0 : i32
    return %c0_i32, %c0_i32_0, %c0_i32_1 : i32, i32, i32
  }
  func.func @transform_2(%arg0: i32, %arg1: i32) -> (i32, i32, i32) {
    %c0_i32 = arith.constant 0 : i32
    %c0_i32_0 = arith.constant 0 : i32
    return %arg0, %arg1, %c0_i32 : i32, i32, i32
  }
  func.func @transform_3(%arg0: i32, %arg1: i32) -> (i32, i32, i32, i32) {
    %c0_i32 = arith.constant 0 : i32
    %c0_i32_0 = arith.constant 0 : i32
    %c0_i32_1 = arith.constant 0 : i32
    return %arg0, %arg1, %c0_i32, %c0_i32_0 : i32, i32, i32, i32
  }
}

module attributes {stable_mosaic.version = 11 : i64} {
  func.func @_bn_relu_kernel(%arg0: i32, %arg1: i32, %arg2: memref<1x256x8xbf16, #tpu.memory_space<vmem>>, %arg3: memref<1x8xf32, #tpu.memory_space<vmem>>, %arg4: memref<1x8xf32, #tpu.memory_space<vmem>>, %arg5: memref<1x8x256xf32, #tpu.memory_space<vmem>>) attributes {dimension_semantics = [#tpu.dimension_semantics<parallel>, #tpu.dimension_semantics<parallel>], iteration_bounds = array<i64: 2, 1>, scalar_prefetch = 0 : i64, scratch_operands = 0 : i64, tpu.core_type = #tpu.core_type<tc>, window_params = [{transform_indices = @transform_0, window_bounds = array<i64: 1, 256, 8>}, {pipeline_mode = #tpu.pipeline_mode<synchronous>, transform_indices = @transform_1, window_bounds = array<i64: 1, 8>}, {pipeline_mode = #tpu.pipeline_mode<synchronous>, transform_indices = @transform_2, window_bounds = array<i64: 1, 8>}, {transform_indices = @transform_3, window_bounds = array<i64: 1, 8, 256>}]} {
    %c0 = arith.constant 0 : index
    %c0_0 = arith.constant 0 : index
    %c0_1 = arith.constant 0 : index
    %0 = vector.load %arg2[%c0, %c0_0, %c0_1] : memref<1x256x8xbf16, #tpu.memory_space<vmem>>, vector<1x256x8xbf16>
    %1 = vector.shape_cast %0 : vector<1x256x8xbf16> to vector<256x8xbf16>
    %2 = arith.extf %1 : vector<256x8xbf16> to vector<256x8xf32>
    %c0_2 = arith.constant 0 : index
    %c0_3 = arith.constant 0 : index
    %3 = vector.load %arg3[%c0_2, %c0_3] : memref<1x8xf32, #tpu.memory_space<vmem>>, vector<1x8xf32>
    %4 = vector.broadcast %3 : vector<1x8xf32> to vector<256x8xf32>
    %5 = arith.mulf %2, %4 : vector<256x8xf32>
    %c0_4 = arith.constant 0 : index
    %c0_5 = arith.constant 0 : index
    %6 = vector.load %arg4[%c0_4, %c0_5] : memref<1x8xf32, #tpu.memory_space<vmem>>, vector<1x8xf32>
    %7 = vector.broadcast %6 : vector<1x8xf32> to vector<256x8xf32>
    %8 = arith.addf %5, %7 : vector<256x8xf32>
    %cst = arith.constant 0.000000e+00 : f32
    %9 = vector.broadcast %cst : f32 to vector<256x8xf32>
    %10 = arith.maximumf %8, %9 : vector<256x8xf32>
    %11 = tpu.transpose %10, [1, 0] : vector<256x8xf32> -> vector<8x256xf32>
    %c0_6 = arith.constant 0 : index
    %c0_7 = arith.constant 0 : index
    %c0_8 = arith.constant 0 : index
    %12 = vector.load %arg5[%c0_6, %c0_7, %c0_8] : memref<1x8x256xf32, #tpu.memory_space<vmem>>, vector<1x8x256xf32>
    %13 = vector.shape_cast %12 : vector<1x8x256xf32> to vector<8x256xf32>
    %14 = vector.shape_cast %11 : vector<8x256xf32> to vector<1x8x256xf32>
    tpu.vector_store %arg5[%c0_6, %c0_7, %c0_8], %14 {strides = array<i32>} : memref<1x8x256xf32, #tpu.memory_space<vmem>>, vector<1x8x256xf32>,
    return
  }
  func.func @transform_0(%arg0: i32, %arg1: i32) -> (i32, i32, i32) {
    %c0_i32 = arith.constant 0 : i32
    %c0_i32_0 = arith.constant 0 : i32
    return %arg0, %arg1, %c0_i32 : i32, i32, i32
  }
  func.func @transform_1(%arg0: i32, %arg1: i32) -> (i32, i32) {
    %c0_i32 = arith.constant 0 : i32
    %c0_i32_0 = arith.constant 0 : i32
    %c0_i32_1 = arith.constant 0 : i32
    return %c0_i32, %c0_i32_0 : i32, i32
  }
  func.func @transform_2(%arg0: i32, %arg1: i32) -> (i32, i32) {
    %c0_i32 = arith.constant 0 : i32
    %c0_i32_0 = arith.constant 0 : i32
    %c0_i32_1 = arith.constant 0 : i32
    return %c0_i32, %c0_i32_0 : i32, i32
  }
  func.func @transform_3(%arg0: i32, %arg1: i32) -> (i32, i32, i32) {
    %c0_i32 = arith.constant 0 : i32
    %c0_i32_0 = arith.constant 0 : i32
    return %arg0, %c0_i32, %arg1 : i32, i32, i32
  }
}

</mosaic_0001>

<llo_original>
// kernel: _lambda_.3
$region0: #{_lambda_.3}
  #allocation0 [shape = 'u32[]', space=smem, size = 0x4, offset = 0x4, fixed_abs, tag = 'smem constant byte address 0x4 - core index']
  #allocation1 [shape = 'u32[144,128]{1,0:T(1,128)}', space=vmem, size = 0x12000, scoped, tag = 'internal scratch']
  %s0 = inlined_call_operand.vmem [shape: bf16[2,256,8], index: 0, kind: input, shape index: {}]
  %s1 = inlined_call_operand.vmem [shape: f32[1,8], index: 1, kind: input, shape index: {}]
  %s2 = inlined_call_operand.vmem [shape: f32[1,8], index: 2, kind: input, shape index: {}]
  %s3 = inlined_call_operand.vmem [shape: f32[2,8,256], index: 3, kind: output, shape index: {}]
  %s4 = sld [smem:[#allocation0]]
  $region45: #{_lambda_.3} parent=0
    _
  %s6 = ssub.s32 1, %s4
  %s7 = scalar_select 0, %s6, %s4
  loop: start=0, step=1, limit=4
  $region2: #{_lambda_.3} parent=0 // loop_pre_header
    _
  $region3: #{_lambda_.3} parent=0 // loop_header
    %s9 = sphi 0, %s13
    %p10 = scmp.ge.s32.totalorder %s9, 4
    %s16 = sphi 0, %s28
    %s17 = sphi 0, %s24
    %s18 = sphi 0, %s16
    %s19 = sphi 0, %s17
    %s20 = sphi 0, %s18
    %s21 = sphi 0, %s19
    %s33 = sphi 0, %s35
    %s36 = sphi 0, %s33
    %s37 = sphi 0, %s36
    %s53 = sphi 0, %s37
    %s57 = sphi 0, %s57
    %s59 = sphi 0, %s57
    %s60 = sphi 0, %s59
    %s74 = sphi 0, %s60
    %s78 = sphi 0, %s78
    %s80 = sphi 0, %s78
    %s81 = sphi 0, %s80
    %s95 = sphi 0, %s81
    %s103 = sphi 0, %s105
    %s106 = sphi 0, %s103
    %s107 = sphi 0, %s106
    %s123 = sphi 0, %s107
  $region4: #{_lambda_.3} parent=0 // loop_header_branch
    %12 = sbr.rel (%p10) target = $region8
  $region5: #{_lambda_.3} parent=0 // loop_body
    %s14 = ssub.s32 %s9, 1
    %s15 = ssub.s32 %s9, 2
    %s22 = sadd.s32 1, %s17
    %p23 = scmp.ge.s32.totalorder %s22, 1
    %s24 = scalar_select %p23, 0, %s22
    %s25 = sadd.s32 1, %s16
    %s26 = scalar_select %p23, %s25, %s16
    %p27 = scmp.ge.s32.totalorder %s26, 2
    %s28 = scalar_select %p27, 0, %s26
    %s29 = ssub.s32 %s16, %s28
    %s30 = ssub.s32 %s17, %s24
    %s31 = sor.u32 %s29, %s30
    %p32 = scmp.eq.s32.totalorder %s31, 0
    %s34 = sadd.s32 %s33, 1
    %s35 = scalar_select %p32, %s33, %s34
    %p38 = pneg %p32
    %p39 = scmp.eq.s32.totalorder %s9, 1
    %p40 = por %p38, %p39
    %p41 = scmp.ne.s32.totalorder %s33, %s36
    %p42 = scmp.eq.s32.totalorder %s9, 0
    %p43 = por %p41, %p42
    %p44 = scmp.ne.s32.totalorder %s33, %s36
    %p45 = scmp.eq.s32.totalorder %s14, 1
    %p46 = por %p44, %p45
    %p47 = scmp.ne.s32.totalorder %s36, %s37
    %p48 = scmp.eq.s32.totalorder %s14, 0
    %p49 = por %p47, %p48
    %p50 = scmp.ne.s32.totalorder %s36, %s37
    %p51 = scmp.eq.s32.totalorder %s15, 1
    %p52 = por %p50, %p51
    %p54 = scmp.ne.s32.totalorder %s37, %s53
    %p55 = scmp.eq.s32.totalorder %s15, 0
    %p56 = por %p54, %p55
    %s58 = sadd.s32 %s57, 1
    %p61 = scmp.eq.s32.totalorder %s9, 1
    %p62 = scmp.ne.s32.totalorder %s57, %s59
    %p63 = scmp.eq.s32.totalorder %s9, 0
    %p64 = por %p62, %p63
    %p65 = scmp.ne.s32.totalorder %s57, %s59
    %p66 = scmp.eq.s32.totalorder %s14, 1
    %p67 = por %p65, %p66
    %p68 = scmp.ne.s32.totalorder %s59, %s60
    %p69 = scmp.eq.s32.totalorder %s14, 0
    %p70 = por %p68, %p69
    %p71 = scmp.ne.s32.totalorder %s59, %s60
    %p72 = scmp.eq.s32.totalorder %s15, 1
    %p73 = por %p71, %p72
    %p75 = scmp.ne.s32.totalorder %s60, %s74
    %p76 = scmp.eq.s32.totalorder %s15, 0
    %p77 = por %p75, %p76
    %s79 = sadd.s32 %s78, 1
    %p82 = scmp.eq.s32.totalorder %s9, 1
    %p83 = scmp.ne.s32.totalorder %s78, %s80
    %p84 = scmp.eq.s32.totalorder %s9, 0
    %p85 = por %p83, %p84
    %p86 = scmp.ne.s32.totalorder %s78, %s80
    %p87 = scmp.eq.s32.totalorder %s14, 1
    %p88 = por %p86, %p87
    %p89 = scmp.ne.s32.totalorder %s80, %s81
    %p90 = scmp.eq.s32.totalorder %s14, 0
    %p91 = por %p89, %p90
    %p92 = scmp.ne.s32.totalorder %s80, %s81
    %p93 = scmp.eq.s32.totalorder %s15, 1
    %p94 = por %p92, %p93
    %p96 = scmp.ne.s32.totalorder %s81, %s95
    %p97 = scmp.eq.s32.totalorder %s15, 0
    %p98 = por %p96, %p97
    %s99 = ssub.s32 %s16, %s28
    %s100 = ssub.s32 %s17, %s24
    %s101 = sor.u32 %s99, %s100
    %p102 = scmp.eq.s32.totalorder %s101, 0
    %s104 = sadd.s32 %s103, 1
    %s105 = scalar_select %p102, %s103, %s104
    %p108 = pneg %p102
    %p109 = scmp.eq.s32.totalorder %s9, 1
    %p110 = por %p108, %p109
    %p111 = scmp.ne.s32.totalorder %s103, %s106
    %p112 = scmp.eq.s32.totalorder %s9, 0
    %p113 = por %p111, %p112
    %p114 = scmp.ne.s32.totalorder %s103, %s106
    %p115 = scmp.eq.s32.totalorder %s14, 1
    %p116 = por %p114, %p115
    %p117 = scmp.ne.s32.totalorder %s106, %s107
    %p118 = scmp.eq.s32.totalorder %s14, 0
    %p119 = por %p117, %p118
    %p120 = scmp.ne.s32.totalorder %s106, %s107
    %p121 = scmp.eq.s32.totalorder %s15, 1
    %p122 = por %p120, %p121
    %p124 = scmp.ne.s32.totalorder %s107, %s123
    %p125 = scmp.eq.s32.totalorder %s15, 0
    %p126 = por %p124, %p125
    %p127 = scmp.le.s32.totalorder 1, %s9
    %p128 = scmp.lt.s32.totalorder %s9, 3
    %p129 = pnand %p127, %p128
    %p130 = pneg %p129
    // Predicated region
    $region9: #{_lambda_.3} parent=5 // pred_check
      _
    $region10: #{_lambda_.3} parent=5 // pred_check_branch
      %132 = sbr.rel (%p129) target = $region12
    $region11: #{_lambda_.3} parent=5 // pred_region
      %s133 = ssub.s32 %s9, 1
      // Predicated region
      $region13: #{_lambda_.3} parent=11 // pred_check
        %p134 = pneg %p70
      $region14: #{_lambda_.3} parent=11 // pred_check_branch
        %136 = sbr.rel (%p134) target = $region16
      $region15: #{_lambda_.3} parent=11 // pred_region
        _
      $region16: #{_lambda_.3} parent=11 // pred_fallthru
        _
      // Predicated region
      $region17: #{_lambda_.3} parent=11 // pred_check
        %p137 = pneg %p91
      $region18: #{_lambda_.3} parent=11 // pred_check_branch
        %139 = sbr.rel (%p137) target = $region20
      $region19: #{_lambda_.3} parent=11 // pred_region
        _
      $region20: #{_lambda_.3} parent=11 // pred_fallthru
        _
    $region12: #{_lambda_.3} parent=5 // pred_fallthru
      _
    %p140 = scmp.lt.s32.totalorder %s9, 2
    // Predicated region
    $region21: #{_lambda_.3} parent=5 // pred_check
      %p141 = pneg %p140
    $region22: #{_lambda_.3} parent=5 // pred_check_branch
      %143 = sbr.rel (%p141) target = $region24
    $region23: #{_lambda_.3} parent=5 // pred_region
      // Predicated region
      $region25: #{_lambda_.3} parent=23 // pred_check
        %p144 = pneg %p43
      $region26: #{_lambda_.3} parent=23 // pred_check_branch
        %146 = sbr.rel (%p144) target = $region28
      $region27: #{_lambda_.3} parent=23 // pred_region
        %s147 = smul.u32 32, %s17
        %p148 = scmp.lt.s32.totalorder %s16, 1
        %s149 = scalar_select %p148, %s16, 1
        %p150 = scmp.lt.s32.totalorder %s147, 31
        %s151 = scalar_select %p150, %s147, 31
        %s152 = smul.addr %s149, 32
        %s153 = sadd.s32 %s151, %s152
        %s154 = smul.addr %s153, 4
        %s155 = scalar_lea.vmem %s0, %s154
        %s156 = smul.u32 32, %s17
      $region28: #{_lambda_.3} parent=23 // pred_fallthru
        _
    $region24: #{_lambda_.3} parent=5 // pred_fallthru
      _
    %p157 = scmp.le.s32.totalorder 1, %s9
    %p158 = scmp.lt.s32.totalorder %s9, 3
    %p159 = pnand %p157, %p158
    %p160 = pneg %p159
    // Predicated region
    $region29: #{_lambda_.3} parent=5 // pred_check
      _
    $region30: #{_lambda_.3} parent=5 // pred_check_branch
      %162 = sbr.rel (%p159) target = $region32
    $region31: #{_lambda_.3} parent=5 // pred_region
      %s163 = ssub.s32 %s9, 1
      %s164 = smul.u32 32, %s19
      %p165 = scmp.lt.s32.totalorder %s18, 1
      %s166 = scalar_select %p165, %s18, 1
      %p167 = scmp.lt.s32.totalorder %s164, 31
      %s168 = scalar_select %p167, %s164, 31
      %s169 = smul.addr %s166, 32
      %s170 = sadd.s32 %s168, %s169
      %s171 = smul.addr %s170, 4
      %s172 = scalar_lea.vmem %s0, %s171
      %p173 = pneg %p49
      %p174 = pneg %p46
      %p175 = pneg %p70
      %p176 = pneg %p67
      %p177 = pneg %p91
      %p178 = pneg %p88
      %p179 = pneg %p119
      %p180 = pneg %p116
      %s181 = smul.u32 2, %s19
      %p182 = scmp.lt.s32.totalorder %s18, 1
      %s183 = scalar_select %p182, %s18, 1
      %p184 = scmp.lt.s32.totalorder %s181, 1
      %s185 = scalar_select %p184, %s181, 1
      %s186 = smul.addr %s183, 2
      %s187 = sadd.s32 %s185, %s186
      %s188 = smul.addr %s187, 8
      %s189 = scalar_lea.vmem %s3, %s188
      %s190 = smul.u32 32, %s19
      %p191 = scmp.lt.s32.totalorder %s18, 1
      %s192 = scalar_select %p191, %s18, 1
      %p193 = scmp.lt.s32.totalorder %s190, 31
      %s194 = scalar_select %p193, %s190, 31
      %s195 = smul.addr %s192, 32
      %s196 = sadd.s32 %s194, %s195
      %s197 = smul.addr %s196, 4
      %s198 = scalar_lea.vmem %s0, %s197
      %s199 = smul.u32 32, %s19
      %s200 = smul.u32 2, %s19
      %p201 = scmp.lt.s32.totalorder %s18, 1
      %s202 = scalar_select %p201, %s18, 1
      %p203 = scmp.lt.s32.totalorder %s200, 1
      %s204 = scalar_select %p203, %s200, 1
      %s205 = smul.addr %s202, 2
      %s206 = sadd.s32 %s204, %s205
      %s207 = smul.addr %s206, 8
      %s208 = scalar_lea.vmem %s3, %s207
      %s209 = smul.u32 2, %s19
      %v210 = vld [vmem:[%s198] sm:$0xf]
      %v211 = vld [vmem:[%s198 + $0x4] sm:$0xf]
      %v212 = vld [vmem:[%s198 + $0x8] sm:$0xf]
      %v213 = vld [vmem:[%s198 + $0xc] sm:$0xf]
      %v214 = vld [vmem:[%s198 + $0x10] sm:$0xf]
      %v215 = vld [vmem:[%s198 + $0x14] sm:$0xf]
      %v216 = vld [vmem:[%s198 + $0x18] sm:$0xf]
      %v217 = vld [vmem:[%s198 + $0x1c] sm:$0xf]
      %v218 = vld [vmem:[%s198 + $0x20] sm:$0xf]
      %v219 = vld [vmem:[%s198 + $0x24] sm:$0xf]
      %v220 = vld [vmem:[%s198 + $0x28] sm:$0xf]
      %v221 = vld [vmem:[%s198 + $0x2c] sm:$0xf]
      %v222 = vld [vmem:[%s198 + $0x30] sm:$0xf]
      %v223 = vld [vmem:[%s198 + $0x34] sm:$0xf]
      %v224 = vld [vmem:[%s198 + $0x38] sm:$0xf]
      %v225 = vld [vmem:[%s198 + $0x3c] sm:$0xf]
      %v226 = vld [vmem:[%s198 + $0x40] sm:$0xf]
      %v227 = vld [vmem:[%s198 + $0x44] sm:$0xf]
      %v228 = vld [vmem:[%s198 + $0x48] sm:$0xf]
      %v229 = vld [vmem:[%s198 + $0x4c] sm:$0xf]
      %v230 = vld [vmem:[%s198 + $0x50] sm:$0xf]
      %v231 = vld [vmem:[%s198 + $0x54] sm:$0xf]
      %v232 = vld [vmem:[%s198 + $0x58] sm:$0xf]
      %v233 = vld [vmem:[%s198 + $0x5c] sm:$0xf]
      %v234 = vld [vmem:[%s198 + $0x60] sm:$0xf]
      %v235 = vld [vmem:[%s198 + $0x64] sm:$0xf]
      %v236 = vld [vmem:[%s198 + $0x68] sm:$0xf]
      %v237 = vld [vmem:[%s198 + $0x6c] sm:$0xf]
      %v238 = vld [vmem:[%s198 + $0x70] sm:$0xf]
      %v239 = vld [vmem:[%s198 + $0x74] sm:$0xf]
      %v240 = vld [vmem:[%s198 + $0x78] sm:$0xf]
      %v241 = vld [vmem:[%s198 + $0x7c] sm:$0xf]
      %v242 = vunpack.c.l.bf16 %v210
      %v243 = vunpack.c.l.bf16 %v211
      %v244 = vunpack.c.l.bf16 %v212
      %v245 = vunpack.c.l.bf16 %v213
      %v246 = vunpack.c.l.bf16 %v214
      %v247 = vunpack.c.l.bf16 %v215
      %v248 = vunpack.c.l.bf16 %v216
      %v249 = vunpack.c.l.bf16 %v217
      %v250 = vunpack.c.l.bf16 %v218
      %v251 = vunpack.c.l.bf16 %v219
      %v252 = vunpack.c.l.bf16 %v220
      %v253 = vunpack.c.l.bf16 %v221
      %v254 = vunpack.c.l.bf16 %v222
      %v255 = vunpack.c.l.bf16 %v223
      %v256 = vunpack.c.l.bf16 %v224
      %v257 = vunpack.c.l.bf16 %v225
      %v258 = vunpack.c.l.bf16 %v226
      %v259 = vunpack.c.l.bf16 %v227
      %v260 = vunpack.c.l.bf16 %v228
      %v261 = vunpack.c.l.bf16 %v229
      %v262 = vunpack.c.l.bf16 %v230
      %v263 = vunpack.c.l.bf16 %v231
      %v264 = vunpack.c.l.bf16 %v232
      %v265 = vunpack.c.l.bf16 %v233
      %v266 = vunpack.c.l.bf16 %v234
      %v267 = vunpack.c.l.bf16 %v235
      %v268 = vunpack.c.l.bf16 %v236
      %v269 = vunpack.c.l.bf16 %v237
      %v270 = vunpack.c.l.bf16 %v238
      %v271 = vunpack.c.l.bf16 %v239
      %v272 = vunpack.c.l.bf16 %v240
      %v273 = vunpack.c.l.bf16 %v241
      %v274 = vld [vmem:[%s1] sm:$0x1]
      %v276 = vlaneseq
      %v277 = vshrl.u32 %v276, 7
      %v278 = vsub.s32 0, %v277
      %v279 = vrot.slane %v274, %v278
      %v281 = vmul.f32 %v242, %v279
      %v282 = vmul.f32 %v243, %v279
      %v283 = vmul.f32 %v244, %v279
      %v284 = vmul.f32 %v245, %v279
      %v285 = vmul.f32 %v246, %v279
      %v286 = vmul.f32 %v247, %v279
      %v287 = vmul.f32 %v248, %v279
      %v288 = vmul.f32 %v249, %v279
      %v289 = vmul.f32 %v250, %v279
      %v290 = vmul.f32 %v251, %v279
      %v291 = vmul.f32 %v252, %v279
      %v292 = vmul.f32 %v253, %v279
      %v293 = vmul.f32 %v254, %v279
      %v294 = vmul.f32 %v255, %v279
      %v295 = vmul.f32 %v256, %v279
      %v296 = vmul.f32 %v257, %v279
      %v297 = vmul.f32 %v258, %v279
      %v298 = vmul.f32 %v259, %v279
      %v299 = vmul.f32 %v260, %v279
      %v300 = vmul.f32 %v261, %v279
      %v301 = vmul.f32 %v262, %v279
      %v302 = vmul.f32 %v263, %v279
      %v303 = vmul.f32 %v264, %v279
      %v304 = vmul.f32 %v265, %v279
      %v305 = vmul.f32 %v266, %v279
      %v306 = vmul.f32 %v267, %v279
      %v307 = vmul.f32 %v268, %v279
      %v308 = vmul.f32 %v269, %v279
      %v309 = vmul.f32 %v270, %v279
      %v310 = vmul.f32 %v271, %v279
      %v311 = vmul.f32 %v272, %v279
      %v312 = vmul.f32 %v273, %v279
      %v313 = vld [vmem:[%s2] sm:$0x1]
      %v315 = vlaneseq
      %v316 = vshrl.u32 %v315, 7
      %v317 = vsub.s32 0, %v316
      %v318 = vrot.slane %v313, %v317
      %v320 = vadd.f32 %v281, %v318
      %v321 = vadd.f32 %v282, %v318
      %v322 = vadd.f32 %v283, %v318
      %v323 = vadd.f32 %v284, %v318
      %v324 = vadd.f32 %v285, %v318
      %v325 = vadd.f32 %v286, %v318
      %v326 = vadd.f32 %v287, %v318
      %v327 = vadd.f32 %v288, %v318
      %v328 = vadd.f32 %v289, %v318
      %v329 = vadd.f32 %v290, %v318
      %v330 = vadd.f32 %v291, %v318
      %v331 = vadd.f32 %v292, %v318
      %v332 = vadd.f32 %v293, %v318
      %v333 = vadd.f32 %v294, %v318
      %v334 = vadd.f32 %v295, %v318
      %v335 = vadd.f32 %v296, %v318
      %v336 = vadd.f32 %v297, %v318
      %v337 = vadd.f32 %v298, %v318
      %v338 = vadd.f32 %v299, %v318
      %v339 = vadd.f32 %v300, %v318
      %v340 = vadd.f32 %v301, %v318
      %v341 = vadd.f32 %v302, %v318
      %v342 = vadd.f32 %v303, %v318
      %v343 = vadd.f32 %v304, %v318
      %v344 = vadd.f32 %v305, %v318
      %v345 = vadd.f32 %v306, %v318
      %v346 = vadd.f32 %v307, %v318
      %v347 = vadd.f32 %v308, %v318
      %v348 = vadd.f32 %v309, %v318
      %v349 = vadd.f32 %v310, %v318
      %v350 = vadd.f32 %v311, %v318
      %v351 = vadd.f32 %v312, %v318
      %v352 = vmax.f32 %v320, 0.0
      %v353 = vmax.f32 %v321, 0.0
      %v354 = vmax.f32 %v322, 0.0
      %v355 = vmax.f32 %v323, 0.0
      %v356 = vmax.f32 %v324, 0.0
      %v357 = vmax.f32 %v325, 0.0
      %v358 = vmax.f32 %v326, 0.0
      %v359 = vmax.f32 %v327, 0.0
      %v360 = vmax.f32 %v328, 0.0
      %v361 = vmax.f32 %v329, 0.0
      %v362 = vmax.f32 %v330, 0.0
      %v363 = vmax.f32 %v331, 0.0
      %v364 = vmax.f32 %v332, 0.0
      %v365 = vmax.f32 %v333, 0.0
      %v366 = vmax.f32 %v334, 0.0
      %v367 = vmax.f32 %v335, 0.0
      %v368 = vmax.f32 %v336, 0.0
      %v369 = vmax.f32 %v337, 0.0
      %v370 = vmax.f32 %v338, 0.0
      %v371 = vmax.f32 %v339, 0.0
      %v372 = vmax.f32 %v340, 0.0
      %v373 = vmax.f32 %v341, 0.0
      %v374 = vmax.f32 %v342, 0.0
      %v375 = vmax.f32 %v343, 0.0
      %v376 = vmax.f32 %v344, 0.0
      %v377 = vmax.f32 %v345, 0.0
      %v378 = vmax.f32 %v346, 0.0
      %v379 = vmax.f32 %v347, 0.0
      %v380 = vmax.f32 %v348, 0.0
      %v381 = vmax.f32 %v349, 0.0
      %v382 = vmax.f32 %v350, 0.0
      %v383 = vmax.f32 %v351, 0.0
      %384 = vxpose.xlu0.b32.start [1/16] %v352, 128
      %385 = vxpose.xlu0.b32.cont [2/16] %v353, 128
      %386 = vxpose.xlu0.b32.cont [3/16] %v354, 128
      %387 = vxpose.xlu0.b32.cont [4/16] %v355, 128
      %388 = vxpose.xlu0.b32.cont [5/16] %v356, 128
      %389 = vxpose.xlu0.b32.cont [6/16] %v357, 128
      %390 = vxpose.xlu0.b32.cont [7/16] %v358, 128
      %391 = vxpose.xlu0.b32.cont [8/16] %v359, 128
      %392 = vxpose.xlu0.b32.cont [9/16] %v360, 128
      %393 = vxpose.xlu0.b32.cont [10/16] %v361, 128
      %394 = vxpose.xlu0.b32.cont [11/16] %v362, 128
      %395 = vxpose.xlu0.b32.cont [12/16] %v363, 128
      %396 = vxpose.xlu0.b32.cont [13/16] %v364, 128
      %397 = vxpose.xlu0.b32.cont [14/16] %v365, 128
      %398 = vxpose.xlu0.b32.cont [15/16] %v366, 128
      %399 = vxpose.xlu0.b32.end [16/16] %v367, 128
      %v400 = vpop.trf.xlu0
      %v401 = vpop.trf.xlu0
      %v402 = vpop.trf.xlu0
      %v403 = vpop.trf.xlu0
      %v404 = vpop.trf.xlu0
      %v405 = vpop.trf.xlu0
      %v406 = vpop.trf.xlu0
      %v407 = vpop.trf.xlu0
      %v408 = vpop.trf.xlu0
      %v409 = vpop.trf.xlu0
      %v410 = vpop.trf.xlu0
      %v411 = vpop.trf.xlu0
      %v412 = vpop.trf.xlu0
      %v413 = vpop.trf.xlu0
      %v414 = vpop.trf.xlu0
      %v415 = vpop.trf.xlu0
      %416 = vxpose.xlu0.b32.start [1/16] %v368, 128
      %417 = vxpose.xlu0.b32.cont [2/16] %v369, 128
      %418 = vxpose.xlu0.b32.cont [3/16] %v370, 128
      %419 = vxpose.xlu0.b32.cont [4/16] %v371, 128
      %420 = vxpose.xlu0.b32.cont [5/16] %v372, 128
      %421 = vxpose.xlu0.b32.cont [6/16] %v373, 128
      %422 = vxpose.xlu0.b32.cont [7/16] %v374, 128
      %423 = vxpose.xlu0.b32.cont [8/16] %v375, 128
      %424 = vxpose.xlu0.b32.cont [9/16] %v376, 128
      %425 = vxpose.xlu0.b32.cont [10/16] %v377, 128
      %426 = vxpose.xlu0.b32.cont [11/16] %v378, 128
      %427 = vxpose.xlu0.b32.cont [12/16] %v379, 128
      %428 = vxpose.xlu0.b32.cont [13/16] %v380, 128
      %429 = vxpose.xlu0.b32.cont [14/16] %v381, 128
      %430 = vxpose.xlu0.b32.cont [15/16] %v382, 128
      %431 = vxpose.xlu0.b32.end [16/16] %v383, 128
      %v432 = vpop.trf.xlu0
      %v433 = vpop.trf.xlu0
      %v434 = vpop.trf.xlu0
      %v435 = vpop.trf.xlu0
      %v436 = vpop.trf.xlu0
      %v437 = vpop.trf.xlu0
      %v438 = vpop.trf.xlu0
      %v439 = vpop.trf.xlu0
      %v440 = vpop.trf.xlu0
      %v441 = vpop.trf.xlu0
      %v442 = vpop.trf.xlu0
      %v443 = vpop.trf.xlu0
      %v444 = vpop.trf.xlu0
      %v445 = vpop.trf.xlu0
      %v446 = vpop.trf.xlu0
      %v447 = vpop.trf.xlu0
      %448 = vst [vmem:[%s208] sm:$0xff] %v400
      %449 = vst [vmem:[%s208 + $0x8] sm:$0xff] %v432
      %s450 = smul.u32 2, %s19
      %p451 = scmp.lt.s32.totalorder %s18, 1
      %s452 = scalar_select %p451, %s18, 1
      %p453 = scmp.lt.s32.totalorder %s450, 1
      %s454 = scalar_select %p453, %s450, 1
      %s455 = smul.addr %s452, 2
      %s456 = sadd.s32 %s454, %s455
      %s457 = smul.addr %s456, 8
      %s458 = scalar_lea.vmem %s3, %s457
      // Predicated region
      $region33: #{_lambda_.3} parent=31 // pred_check
        %p459 = pneg %p116
      $region34: #{_lambda_.3} parent=31 // pred_check_branch
        %461 = sbr.rel (%p459) target = $region36
      $region35: #{_lambda_.3} parent=31 // pred_region
        %s462 = smul.u32 2, %s19
      $region36: #{_lambda_.3} parent=31 // pred_fallthru
        _
    $region32: #{_lambda_.3} parent=5 // pred_fallthru
      _
    %p463 = scmp.le.s32.totalorder 2, %s9
    // Predicated region
    $region37: #{_lambda_.3} parent=5 // pred_check
      %p464 = pneg %p463
    $region38: #{_lambda_.3} parent=5 // pred_check_branch
      %466 = sbr.rel (%p464) target = $region40
    $region39: #{_lambda_.3} parent=5 // pred_region
      %s467 = ssub.s32 %s9, 2
      // Predicated region
      $region41: #{_lambda_.3} parent=39 // pred_check
        %p468 = pneg %p122
      $region42: #{_lambda_.3} parent=39 // pred_check_branch
        %470 = sbr.rel (%p468) target = $region44
      $region43: #{_lambda_.3} parent=39 // pred_region
        %s471 = smul.u32 2, %s21
        %p472 = scmp.lt.s32.totalorder %s20, 1
        %s473 = scalar_select %p472, %s20, 1
        %p474 = scmp.lt.s32.totalorder %s471, 1
        %s475 = scalar_select %p474, %s471, 1
        %s476 = smul.addr %s473, 2
        %s477 = sadd.s32 %s475, %s476
        %s478 = smul.addr %s477, 8
        %s479 = scalar_lea.vmem %s3, %s478
      $region44: #{_lambda_.3} parent=39 // pred_fallthru
        _
    $region40: #{_lambda_.3} parent=5 // pred_fallthru
      _
  $region6: #{_lambda_.3} parent=0 // loop_footer
    %s13 = sadd.s32 1, %s9
  $region7: #{_lambda_.3} parent=0 // loop_footer_branch
    %8 = sbr.rel target = $region3
  $region8: #{_lambda_.3} parent=0 // loop_exit
    _

// kernel: _lambda_.2
$region0: #{_lambda_.2}
  #allocation0 [shape = 'u32[]', space=smem, size = 0x4, offset = 0x4, fixed_abs, tag = 'smem constant byte address 0x4 - core index']
  #allocation1 [shape = 'u32[144,128]{1,0:T(1,128)}', space=vmem, size = 0x12000, scoped, tag = 'internal scratch']
  %s0 = inlined_call_operand.vmem [shape: bf16[2,18,18,4], index: 0, kind: input, shape index: {}]
  %s1 = inlined_call_operand.vmem [shape: bf16[9,4,8], index: 1, kind: input, shape index: {}]
  %s2 = inlined_call_operand.vmem [shape: bf16[2,256,8], index: 2, kind: output, shape index: {0}]
  %s3 = inlined_call_operand.vmem [shape: f32[2,1,2,8], index: 3, kind: output, shape index: {1}]
  %4 = xla_tuple %s2, %s3
  %s5 = sld [smem:[#allocation0]]
  $region49: #{_lambda_.2} parent=0
    _
  %s7 = ssub.s32 1, %s5
  %s8 = scalar_select 0, %s7, %s5
  loop: start=0, step=1, limit=4
  $region2: #{_lambda_.2} parent=0 // loop_pre_header
    _
  $region3: #{_lambda_.2} parent=0 // loop_header
    %s10 = sphi 0, %s14
    %p11 = scmp.ge.s32.totalorder %s10, 4
    %s17 = sphi 0, %s29
    %s18 = sphi 0, %s25
    %s19 = sphi 0, %s17
    %s20 = sphi 0, %s18
    %s21 = sphi 0, %s19
    %s22 = sphi 0, %s20
    %s32 = sphi 0, %s34
    %s35 = sphi 0, %s32
    %s36 = sphi 0, %s35
    %s52 = sphi 0, %s36
    %s56 = sphi 0, %s56
    %s58 = sphi 0, %s56
    %s59 = sphi 0, %s58
    %s73 = sphi 0, %s59
    %s81 = sphi 0, %s83
    %s84 = sphi 0, %s81
    %s85 = sphi 0, %s84
    %s101 = sphi 0, %s85
    %s109 = sphi 0, %s111
    %s112 = sphi 0, %s109
    %s113 = sphi 0, %s112
    %s129 = sphi 0, %s113
  $region4: #{_lambda_.2} parent=0 // loop_header_branch
    %13 = sbr.rel (%p11) target = $region8
  $region5: #{_lambda_.2} parent=0 // loop_body
    %s15 = ssub.s32 %s10, 1
    %s16 = ssub.s32 %s10, 2
    %s23 = sadd.s32 1, %s18
    %p24 = scmp.ge.s32.totalorder %s23, 1
    %s25 = scalar_select %p24, 0, %s23
    %s26 = sadd.s32 1, %s17
    %s27 = scalar_select %p24, %s26, %s17
    %p28 = scmp.ge.s32.totalorder %s27, 2
    %s29 = scalar_select %p28, 0, %s27
    %s30 = ssub.s32 %s17, %s29
    %p31 = scmp.eq.s32.totalorder %s30, 0
    %s33 = sadd.s32 %s32, 1
    %s34 = scalar_select %p31, %s32, %s33
    %p37 = pneg %p31
    %p38 = scmp.eq.s32.totalorder %s10, 1
    %p39 = por %p37, %p38
    %p40 = scmp.ne.s32.totalorder %s32, %s35
    %p41 = scmp.eq.s32.totalorder %s10, 0
    %p42 = por %p40, %p41
    %p43 = scmp.ne.s32.totalorder %s32, %s35
    %p44 = scmp.eq.s32.totalorder %s15, 1
    %p45 = por %p43, %p44
    %p46 = scmp.ne.s32.totalorder %s35, %s36
    %p47 = scmp.eq.s32.totalorder %s15, 0
    %p48 = por %p46, %p47
    %p49 = scmp.ne.s32.totalorder %s35, %s36
    %p50 = scmp.eq.s32.totalorder %s16, 1
    %p51 = por %p49, %p50
    %p53 = scmp.ne.s32.totalorder %s36, %s52
    %p54 = scmp.eq.s32.totalorder %s16, 0
    %p55 = por %p53, %p54
    %s57 = sadd.s32 %s56, 1
    %p60 = scmp.eq.s32.totalorder %s10, 1
    %p61 = scmp.ne.s32.totalorder %s56, %s58
    %p62 = scmp.eq.s32.totalorder %s10, 0
    %p63 = por %p61, %p62
    %p64 = scmp.ne.s32.totalorder %s56, %s58
    %p65 = scmp.eq.s32.totalorder %s15, 1
    %p66 = por %p64, %p65
    %p67 = scmp.ne.s32.totalorder %s58, %s59
    %p68 = scmp.eq.s32.totalorder %s15, 0
    %p69 = por %p67, %p68
    %p70 = scmp.ne.s32.totalorder %s58, %s59
    %p71 = scmp.eq.s32.totalorder %s16, 1
    %p72 = por %p70, %p71
    %p74 = scmp.ne.s32.totalorder %s59, %s73
    %p75 = scmp.eq.s32.totalorder %s16, 0
    %p76 = por %p74, %p75
    %s77 = ssub.s32 %s17, %s29
    %s78 = ssub.s32 %s18, %s25
    %s79 = sor.u32 %s77, %s78
    %p80 = scmp.eq.s32.totalorder %s79, 0
    %s82 = sadd.s32 %s81, 1
    %s83 = scalar_select %p80, %s81, %s82
    %p86 = pneg %p80
    %p87 = scmp.eq.s32.totalorder %s10, 1
    %p88 = por %p86, %p87
    %p89 = scmp.ne.s32.totalorder %s81, %s84
    %p90 = scmp.eq.s32.totalorder %s10, 0
    %p91 = por %p89, %p90
    %p92 = scmp.ne.s32.totalorder %s81, %s84
    %p93 = scmp.eq.s32.totalorder %s15, 1
    %p94 = por %p92, %p93
    %p95 = scmp.ne.s32.totalorder %s84, %s85
    %p96 = scmp.eq.s32.totalorder %s15, 0
    %p97 = por %p95, %p96
    %p98 = scmp.ne.s32.totalorder %s84, %s85
    %p99 = scmp.eq.s32.totalorder %s16, 1
    %p100 = por %p98, %p99
    %p102 = scmp.ne.s32.totalorder %s85, %s101
    %p103 = scmp.eq.s32.totalorder %s16, 0
    %p104 = por %p102, %p103
    %s105 = ssub.s32 %s17, %s29
    %s106 = ssub.s32 %s18, %s25
    %s107 = sor.u32 %s105, %s106
    %p108 = scmp.eq.s32.totalorder %s107, 0
    %s110 = sadd.s32 %s109, 1
    %s111 = scalar_select %p108, %s109, %s110
    %p114 = pneg %p108
    %p115 = scmp.eq.s32.totalorder %s10, 1
    %p116 = por %p114, %p115
    %p117 = scmp.ne.s32.totalorder %s109, %s112
    %p118 = scmp.eq.s32.totalorder %s10, 0
    %p119 = por %p117, %p118
    %p120 = scmp.ne.s32.totalorder %s109, %s112
    %p121 = scmp.eq.s32.totalorder %s15, 1
    %p122 = por %p120, %p121
    %p123 = scmp.ne.s32.totalorder %s112, %s113
    %p124 = scmp.eq.s32.totalorder %s15, 0
    %p125 = por %p123, %p124
    %p126 = scmp.ne.s32.totalorder %s112, %s113
    %p127 = scmp.eq.s32.totalorder %s16, 1
    %p128 = por %p126, %p127
    %p130 = scmp.ne.s32.totalorder %s113, %s129
    %p131 = scmp.eq.s32.totalorder %s16, 0
    %p132 = por %p130, %p131
    %p133 = scmp.le.s32.totalorder 1, %s10
    %p134 = scmp.lt.s32.totalorder %s10, 3
    %p135 = pnand %p133, %p134
    %p136 = pneg %p135
    // Predicated region
    $region9: #{_lambda_.2} parent=5 // pred_check
      _
    $region10: #{_lambda_.2} parent=5 // pred_check_branch
      %138 = sbr.rel (%p135) target = $region12
    $region11: #{_lambda_.2} parent=5 // pred_region
      %s139 = ssub.s32 %s10, 1
      // Predicated region
      $region13: #{_lambda_.2} parent=11 // pred_check
        %p140 = pneg %p69
      $region14: #{_lambda_.2} parent=11 // pred_check_branch
        %142 = sbr.rel (%p140) target = $region16
      $region15: #{_lambda_.2} parent=11 // pred_region
        _
      $region16: #{_lambda_.2} parent=11 // pred_fallthru
        _
    $region12: #{_lambda_.2} parent=5 // pred_fallthru
      _
    %p143 = scmp.lt.s32.totalorder %s10, 2
    // Predicated region
    $region17: #{_lambda_.2} parent=5 // pred_check
      %p144 = pneg %p143
    $region18: #{_lambda_.2} parent=5 // pred_check_branch
      %146 = sbr.rel (%p144) target = $region20
    $region19: #{_lambda_.2} parent=5 // pred_region
      // Predicated region
      $region21: #{_lambda_.2} parent=19 // pred_check
        %p147 = pneg %p42
      $region22: #{_lambda_.2} parent=19 // pred_check_branch
        %149 = sbr.rel (%p147) target = $region24
      $region23: #{_lambda_.2} parent=19 // pred_region
        %p150 = scmp.lt.s32.totalorder %s17, 1
        %s151 = scalar_select %p150, %s17, 1
        %s152 = smul.addr %s151, 54
        %s153 = smul.addr %s152, 4
        %s154 = scalar_lea.vmem %s0, %s153
      $region24: #{_lambda_.2} parent=19 // pred_fallthru
        _
    $region20: #{_lambda_.2} parent=5 // pred_fallthru
      _
    %p155 = scmp.le.s32.totalorder 1, %s10
    %p156 = scmp.lt.s32.totalorder %s10, 3
    %p157 = pnand %p155, %p156
    %p158 = pneg %p157
    // Predicated region
    $region25: #{_lambda_.2} parent=5 // pred_check
      _
    $region26: #{_lambda_.2} parent=5 // pred_check_branch
      %160 = sbr.rel (%p157) target = $region28
    $region27: #{_lambda_.2} parent=5 // pred_region
      %s161 = ssub.s32 %s10, 1
      %p162 = scmp.lt.s32.totalorder %s19, 1
      %s163 = scalar_select %p162, %s19, 1
      %s164 = smul.addr %s163, 54
      %s165 = smul.addr %s164, 4
      %s166 = scalar_lea.vmem %s0, %s165
      %p167 = pneg %p48
      %p168 = pneg %p45
      %p169 = pneg %p69
      %p170 = pneg %p66
      %p171 = pneg %p97
      %p172 = pneg %p94
      %s173 = smul.u32 32, %s20
      %p174 = scmp.lt.s32.totalorder %s19, 1
      %s175 = scalar_select %p174, %s19, 1
      %p176 = scmp.lt.s32.totalorder %s173, 31
      %s177 = scalar_select %p176, %s173, 31
      %s178 = smul.addr %s175, 32
      %s179 = sadd.s32 %s177, %s178
      %s180 = smul.addr %s179, 4
      %s181 = scalar_lea.vmem %s2, %s180
      %p182 = pneg %p125
      %p183 = pneg %p122
      %p184 = scmp.lt.s32.totalorder %s19, 1
      %s185 = scalar_select %p184, %s19, 1
      %p186 = scmp.lt.s32.totalorder %s20, 0
      %s187 = scalar_select %p186, %s20, 0
      %s188 = sadd.s32 %s187, %s185
      %s189 = smul.addr %s188, 2
      %s190 = scalar_lea.vmem %s3, %s189
      %p191 = scmp.lt.s32.totalorder %s19, 1
      %s192 = scalar_select %p191, %s19, 1
      %s193 = smul.addr %s192, 54
      %s194 = smul.addr %s193, 4
      %s195 = scalar_lea.vmem %s0, %s194
      %s196 = smul.u32 32, %s20
      %p197 = scmp.lt.s32.totalorder %s19, 1
      %s198 = scalar_select %p197, %s19, 1
      %p199 = scmp.lt.s32.totalorder %s196, 31
      %s200 = scalar_select %p199, %s196, 31
      %s201 = smul.addr %s198, 32
      %s202 = sadd.s32 %s200, %s201
      %s203 = smul.addr %s202, 4
      %s204 = scalar_lea.vmem %s2, %s203
      %s205 = smul.u32 32, %s20
      %p206 = scmp.lt.s32.totalorder %s19, 1
      %s207 = scalar_select %p206, %s19, 1
      %p208 = scmp.lt.s32.totalorder %s20, 0
      %s209 = scalar_select %p208, %s20, 0
      %s210 = sadd.s32 %s209, %s207
      %s211 = smul.addr %s210, 2
      %s212 = scalar_lea.vmem %s3, %s211
      %s214 = smul.u32 %s20, 16
      %s215 = smul.u32 %s214, 3
      %s216 = smul.addr %s215, 4
      %s217 = scalar_lea.vmem %s195, %s216
      %v218 = vld [vmem:[%s217] sm:$0xf]
      %v219 = vld [vmem:[%s217 + $0x4] sm:$0xf]
      %v220 = vld [vmem:[%s217 + $0xc] sm:$0xf]
      %v221 = vld [vmem:[%s217 + $0x10] sm:$0xf]
      %v222 = vld [vmem:[%s217 + $0x18] sm:$0xf]
      %v223 = vld [vmem:[%s217 + $0x1c] sm:$0xf]
      %v224 = vld [vmem:[%s217 + $0x24] sm:$0xf]
      %v225 = vld [vmem:[%s217 + $0x28] sm:$0xf]
      %v226 = vld [vmem:[%s217 + $0x30] sm:$0xf]
      %v227 = vld [vmem:[%s217 + $0x34] sm:$0xf]
      %v228 = vld [vmem:[%s217 + $0x3c] sm:$0xf]
      %v229 = vld [vmem:[%s217 + $0x40] sm:$0xf]
      %v230 = vld [vmem:[%s217 + $0x48] sm:$0xf]
      %v231 = vld [vmem:[%s217 + $0x4c] sm:$0xf]
      %v232 = vld [vmem:[%s217 + $0x54] sm:$0xf]
      %v233 = vld [vmem:[%s217 + $0x58] sm:$0xf]
      %v234 = vld [vmem:[%s217 + $0x60] sm:$0xf]
      %v235 = vld [vmem:[%s217 + $0x64] sm:$0xf]
      %v236 = vld [vmem:[%s217 + $0x6c] sm:$0xf]
      %v237 = vld [vmem:[%s217 + $0x70] sm:$0xf]
      %v238 = vld [vmem:[%s217 + $0x78] sm:$0xf]
      %v239 = vld [vmem:[%s217 + $0x7c] sm:$0xf]
      %v240 = vld [vmem:[%s217 + $0x84] sm:$0xf]
      %v241 = vld [vmem:[%s217 + $0x88] sm:$0xf]
      %v242 = vld [vmem:[%s217 + $0x90] sm:$0xf]
      %v243 = vld [vmem:[%s217 + $0x94] sm:$0xf]
      %v244 = vld [vmem:[%s217 + $0x9c] sm:$0xf]
      %v245 = vld [vmem:[%s217 + $0xa0] sm:$0xf]
      %v246 = vld [vmem:[%s217 + $0xa8] sm:$0xf]
      %v247 = vld [vmem:[%s217 + $0xac] sm:$0xf]
      %v248 = vld [vmem:[%s217 + $0xb4] sm:$0xf]
      %v249 = vld [vmem:[%s217 + $0xb8] sm:$0xf]
      %v250 = vld [vmem:[%s1] sm:$0x3]
      %v251 = vld [vmem:[%s217 + $0x8] sm:$0x1]
      %v252 = vld [vmem:[%s217 + $0x14] sm:$0x1]
      %v253 = vld [vmem:[%s217 + $0x20] sm:$0x1]
      %v254 = vld [vmem:[%s217 + $0x2c] sm:$0x1]
      %v255 = vld [vmem:[%s217 + $0x38] sm:$0x1]
      %v256 = vld [vmem:[%s217 + $0x44] sm:$0x1]
      %v257 = vld [vmem:[%s217 + $0x50] sm:$0x1]
      %v258 = vld [vmem:[%s217 + $0x5c] sm:$0x1]
      %v259 = vld [vmem:[%s217 + $0x68] sm:$0x1]
      %v260 = vld [vmem:[%s217 + $0x74] sm:$0x1]
      %v261 = vld [vmem:[%s217 + $0x80] sm:$0x1]
      %v262 = vld [vmem:[%s217 + $0x8c] sm:$0x1]
      %v263 = vld [vmem:[%s217 + $0x98] sm:$0x1]
      %v264 = vld [vmem:[%s217 + $0xa4] sm:$0x1]
      %v265 = vld [vmem:[%s217 + $0xb0] sm:$0x1]
      %v266 = vld [vmem:[%s217 + $0xbc] sm:$0x1]
      %vm267 = vsmask.f32 3328
      %vm268 = vsmask.f32 7440
      %vm269 = vmor %vm267, %vm268
      %v271 = vshrl.u32 %v218, 16
      %v273 = vrot.slane %v271, 4
      %v274 = vshll.u32 %v218, 16
      %v276 = vrot.slane %v274, 5
      %v277 = vor.u32 %v273, %v276
      %v278 = vrot.slane %v277, 4
      %v280 = vshll.u32 %v219, 16
      %v282 = vrot.slane %v280, 5
      %v283 = vsel %vm269, %v278, %v282
      %v284 = vshrl.u32 %v219, 16
      %v286 = vrot.slane %v284, 4
      %v287 = vor.u32 %v286, %v282
      %v288 = vrot.slane %v287, 4
      %v290 = vshll.u32 %v251, 16
      %v292 = vrot.slane %v290, 5
      %v293 = vsel %vm269, %v288, %v292
      %v295 = vshrl.u32 %v220, 16
      %v297 = vrot.slane %v295, 4
      %v298 = vshll.u32 %v220, 16
      %v300 = vrot.slane %v298, 5
      %v301 = vor.u32 %v297, %v300
      %v302 = vrot.slane %v301, 4
      %v304 = vshll.u32 %v221, 16
      %v306 = vrot.slane %v304, 5
      %v307 = vsel %vm269, %v302, %v306
      %v308 = vshrl.u32 %v221, 16
      %v310 = vrot.slane %v308, 4
      %v311 = vor.u32 %v310, %v306
      %v312 = vrot.slane %v311, 4
      %v314 = vshll.u32 %v252, 16
      %v316 = vrot.slane %v314, 5
      %v317 = vsel %vm269, %v312, %v316
      %v319 = vshrl.u32 %v222, 16
      %v321 = vrot.slane %v319, 4
      %v322 = vshll.u32 %v222, 16
      %v324 = vrot.slane %v322, 5
      %v325 = vor.u32 %v321, %v324
      %v326 = vrot.slane %v325, 4
      %v328 = vshll.u32 %v223, 16
      %v330 = vrot.slane %v328, 5
      %v331 = vsel %vm269, %v326, %v330
      %v332 = vshrl.u32 %v223, 16
      %v334 = vrot.slane %v332, 4
      %v335 = vor.u32 %v334, %v330
      %v336 = vrot.slane %v335, 4
      %v338 = vshll.u32 %v253, 16
      %v340 = vrot.slane %v338, 5
      %v341 = vsel %vm269, %v336, %v340
      %v343 = vshrl.u32 %v224, 16
      %v345 = vrot.slane %v343, 4
      %v346 = vshll.u32 %v224, 16
      %v348 = vrot.slane %v346, 5
      %v349 = vor.u32 %v345, %v348
      %v350 = vrot.slane %v349, 4
      %v352 = vshll.u32 %v225, 16
      %v354 = vrot.slane %v352, 5
      %v355 = vsel %vm269, %v350, %v354
      %v356 = vshrl.u32 %v225, 16
      %v358 = vrot.slane %v356, 4
      %v359 = vor.u32 %v358, %v354
      %v360 = vrot.slane %v359, 4
      %v362 = vshll.u32 %v254, 16
      %v364 = vrot.slane %v362, 5
      %v365 = vsel %vm269, %v360, %v364
      %v367 = vshrl.u32 %v226, 16
      %v369 = vrot.slane %v367, 4
      %v370 = vshll.u32 %v226, 16
      %v372 = vrot.slane %v370, 5
      %v373 = vor.u32 %v369, %v372
      %v374 = vrot.slane %v373, 4
      %v376 = vshll.u32 %v227, 16
      %v378 = vrot.slane %v376, 5
      %v379 = vsel %vm269, %v374, %v378
      %v380 = vshrl.u32 %v227, 16
      %v382 = vrot.slane %v380, 4
      %v383 = vor.u32 %v382, %v378
      %v384 = vrot.slane %v383, 4
      %v386 = vshll.u32 %v255, 16
      %v388 = vrot.slane %v386, 5
      %v389 = vsel %vm269, %v384, %v388
      %v391 = vshrl.u32 %v228, 16
      %v393 = vrot.slane %v391, 4
      %v394 = vshll.u32 %v228, 16
      %v396 = vrot.slane %v394, 5
      %v397 = vor.u32 %v393, %v396
      %v398 = vrot.slane %v397, 4
      %v400 = vshll.u32 %v229, 16
      %v402 = vrot.slane %v400, 5
      %v403 = vsel %vm269, %v398, %v402
      %v404 = vshrl.u32 %v229, 16
      %v406 = vrot.slane %v404, 4
      %v407 = vor.u32 %v406, %v402
      %v408 = vrot.slane %v407, 4
      %v410 = vshll.u32 %v256, 16
      %v412 = vrot.slane %v410, 5
      %v413 = vsel %vm269, %v408, %v412
      %v415 = vshrl.u32 %v230, 16
      %v417 = vrot.slane %v415, 4
      %v418 = vshll.u32 %v230, 16
      %v420 = vrot.slane %v418, 5
      %v421 = vor.u32 %v417, %v420
      %v422 = vrot.slane %v421, 4
      %v424 = vshll.u32 %v231, 16
      %v426 = vrot.slane %v424, 5
      %v427 = vsel %vm269, %v422, %v426
      %v428 = vshrl.u32 %v231, 16
      %v430 = vrot.slane %v428, 4
      %v431 = vor.u32 %v430, %v426
      %v432 = vrot.slane %v431, 4
      %v434 = vshll.u32 %v257, 16
      %v436 = vrot.slane %v434, 5
      %v437 = vsel %vm269, %v432, %v436
      %v439 = vshrl.u32 %v232, 16
      %v441 = vrot.slane %v439, 4
      %v442 = vshll.u32 %v232, 16
      %v444 = vrot.slane %v442, 5
      %v445 = vor.u32 %v441, %v444
      %v446 = vrot.slane %v445, 4
      %v448 = vshll.u32 %v233, 16
      %v450 = vrot.slane %v448, 5
      %v451 = vsel %vm269, %v446, %v450
      %v452 = vshrl.u32 %v233, 16
      %v454 = vrot.slane %v452, 4
      %v455 = vor.u32 %v454, %v450
      %v456 = vrot.slane %v455, 4
      %v458 = vshll.u32 %v258, 16
      %v460 = vrot.slane %v458, 5
      %v461 = vsel %vm269, %v456, %v460
      %v463 = vshrl.u32 %v234, 16
      %v465 = vrot.slane %v463, 4
      %v466 = vshll.u32 %v234, 16
      %v468 = vrot.slane %v466, 5
      %v469 = vor.u32 %v465, %v468
      %v470 = vrot.slane %v469, 4
      %v472 = vshll.u32 %v235, 16
      %v474 = vrot.slane %v472, 5
      %v475 = vsel %vm269, %v470, %v474
      %v476 = vshrl.u32 %v235, 16
      %v478 = vrot.slane %v476, 4
      %v479 = vor.u32 %v478, %v474
      %v480 = vrot.slane %v479, 4
      %v482 = vshll.u32 %v259, 16
      %v484 = vrot.slane %v482, 5
      %v485 = vsel %vm269, %v480, %v484
      %v487 = vshrl.u32 %v236, 16
      %v489 = vrot.slane %v487, 4
      %v490 = vshll.u32 %v236, 16
      %v492 = vrot.slane %v490, 5
      %v493 = vor.u32 %v489, %v492
      %v494 = vrot.slane %v493, 4
      %v496 = vshll.u32 %v237, 16
      %v498 = vrot.slane %v496, 5
      %v499 = vsel %vm269, %v494, %v498
      %v500 = vshrl.u32 %v237, 16
      %v502 = vrot.slane %v500, 4
      %v503 = vor.u32 %v502, %v498
      %v504 = vrot.slane %v503, 4
      %v506 = vshll.u32 %v260, 16
      %v508 = vrot.slane %v506, 5
      %v509 = vsel %vm269, %v504, %v508
      %v511 = vshrl.u32 %v238, 16
      %v513 = vrot.slane %v511, 4
      %v514 = vshll.u32 %v238, 16
      %v516 = vrot.slane %v514, 5
      %v517 = vor.u32 %v513, %v516
      %v518 = vrot.slane %v517, 4
      %v520 = vshll.u32 %v239, 16
      %v522 = vrot.slane %v520, 5
      %v523 = vsel %vm269, %v518, %v522
      %v524 = vshrl.u32 %v239, 16
      %v526 = vrot.slane %v524, 4
      %v527 = vor.u32 %v526, %v522
      %v528 = vrot.slane %v527, 4
      %v530 = vshll.u32 %v261, 16
      %v532 = vrot.slane %v530, 5
      %v533 = vsel %vm269, %v528, %v532
      %v535 = vshrl.u32 %v240, 16
      %v537 = vrot.slane %v535, 4
      %v538 = vshll.u32 %v240, 16
      %v540 = vrot.slane %v538, 5
      %v541 = vor.u32 %v537, %v540
      %v542 = vrot.slane %v541, 4
      %v544 = vshll.u32 %v241, 16
      %v546 = vrot.slane %v544, 5
      %v547 = vsel %vm269, %v542, %v546
      %v548 = vshrl.u32 %v241, 16
      %v550 = vrot.slane %v548, 4
      %v551 = vor.u32 %v550, %v546
      %v552 = vrot.slane %v551, 4
      %v554 = vshll.u32 %v262, 16
      %v556 = vrot.slane %v554, 5
      %v557 = vsel %vm269, %v552, %v556
      %v559 = vshrl.u32 %v242, 16
      %v561 = vrot.slane %v559, 4
      %v562 = vshll.u32 %v242, 16
      %v564 = vrot.slane %v562, 5
      %v565 = vor.u32 %v561, %v564
      %v566 = vrot.slane %v565, 4
      %v568 = vshll.u32 %v243, 16
      %v570 = vrot.slane %v568, 5
      %v571 = vsel %vm269, %v566, %v570
      %v572 = vshrl.u32 %v243, 16
      %v574 = vrot.slane %v572, 4
      %v575 = vor.u32 %v574, %v570
      %v576 = vrot.slane %v575, 4
      %v578 = vshll.u32 %v263, 16
      %v580 = vrot.slane %v578, 5
      %v581 = vsel %vm269, %v576, %v580
      %v583 = vshrl.u32 %v244, 16
      %v585 = vrot.slane %v583, 4
      %v586 = vshll.u32 %v244, 16
      %v588 = vrot.slane %v586, 5
      %v589 = vor.u32 %v585, %v588
      %v590 = vrot.slane %v589, 4
      %v592 = vshll.u32 %v245, 16
      %v594 = vrot.slane %v592, 5
      %v595 = vsel %vm269, %v590, %v594
      %v596 = vshrl.u32 %v245, 16
      %v598 = vrot.slane %v596, 4
      %v599 = vor.u32 %v598, %v594
      %v600 = vrot.slane %v599, 4
      %v602 = vshll.u32 %v264, 16
      %v604 = vrot.slane %v602, 5
      %v605 = vsel %vm269, %v600, %v604
      %v607 = vshrl.u32 %v246, 16
      %v609 = vrot.slane %v607, 4
      %v610 = vshll.u32 %v246, 16
      %v612 = vrot.slane %v610, 5
      %v613 = vor.u32 %v609, %v612
      %v614 = vrot.slane %v613, 4
      %v616 = vshll.u32 %v247, 16
      %v618 = vrot.slane %v616, 5
      %v619 = vsel %vm269, %v614, %v618
      %v620 = vshrl.u32 %v247, 16
      %v622 = vrot.slane %v620, 4
      %v623 = vor.u32 %v622, %v618
      %v624 = vrot.slane %v623, 4
      %v626 = vshll.u32 %v265, 16
      %v628 = vrot.slane %v626, 5
      %v629 = vsel %vm269, %v624, %v628
      %v631 = vshrl.u32 %v248, 16
      %v633 = vrot.slane %v631, 4
      %v634 = vshll.u32 %v248, 16
      %v636 = vrot.slane %v634, 5
      %v637 = vor.u32 %v633, %v636
      %v638 = vrot.slane %v637, 4
      %v640 = vshll.u32 %v249, 16
      %v642 = vrot.slane %v640, 5
      %v643 = vsel %vm269, %v638, %v642
      %v644 = vshrl.u32 %v249, 16
      %v646 = vrot.slane %v644, 4
      %v647 = vor.u32 %v646, %v642
      %v648 = vrot.slane %v647, 4
      %v650 = vshll.u32 %v266, 16
      %v652 = vrot.slane %v650, 5
      %v653 = vsel %vm269, %v648, %v652
      %s654 = scalar_lea.vmem %s1, 2
      %v655 = vld [vmem:[%s654] sm:$0x3]
      %v656 = vunpack.c.l.b16 %v283
      %v657 = vunpack.c.l.b16 %v293
      %v658 = vunpack.c.l.b16 %v307
      %v659 = vunpack.c.l.b16 %v317
      %v660 = vunpack.c.l.b16 %v331
      %v661 = vunpack.c.l.b16 %v341
      %v662 = vunpack.c.l.b16 %v355
      %v663 = vunpack.c.l.b16 %v365
      %v664 = vunpack.c.l.b16 %v379
      %v665 = vunpack.c.l.b16 %v389
      %v666 = vunpack.c.l.b16 %v403
      %v667 = vunpack.c.l.b16 %v413
      %v668 = vunpack.c.l.b16 %v427
      %v669 = vunpack.c.l.b16 %v437
      %v670 = vunpack.c.l.b16 %v451
      %v671 = vunpack.c.l.b16 %v461
      %v672 = vunpack.c.l.b16 %v475
      %v673 = vunpack.c.l.b16 %v485
      %v674 = vunpack.c.l.b16 %v499
      %v675 = vunpack.c.l.b16 %v509
      %v676 = vunpack.c.l.b16 %v523
      %v677 = vunpack.c.l.b16 %v533
      %v678 = vunpack.c.l.b16 %v547
      %v679 = vunpack.c.l.b16 %v557
      %v680 = vunpack.c.l.b16 %v571
      %v681 = vunpack.c.l.b16 %v581
      %v682 = vunpack.c.l.b16 %v595
      %v683 = vunpack.c.l.b16 %v605
      %v684 = vunpack.c.l.b16 %v619
      %v685 = vunpack.c.l.b16 %v629
      %v686 = vunpack.c.l.b16 %v643
      %v687 = vunpack.c.l.b16 %v653
      %v688 = vpack.c.b16 %v657, %v656
      %v689 = vpack.c.b16 %v659, %v658
      %v690 = vpack.c.b16 %v661, %v660
      %v691 = vpack.c.b16 %v663, %v662
      %v692 = vpack.c.b16 %v665, %v664
      %v693 = vpack.c.b16 %v667, %v666
      %v694 = vpack.c.b16 %v669, %v668
      %v695 = vpack.c.b16 %v671, %v670
      %v696 = vpack.c.b16 %v673, %v672
      %v697 = vpack.c.b16 %v675, %v674
      %v698 = vpack.c.b16 %v677, %v676
      %v699 = vpack.c.b16 %v679, %v678
      %v700 = vpack.c.b16 %v681, %v680
      %v701 = vpack.c.b16 %v683, %v682
      %v702 = vpack.c.b16 %v685, %v684
      %v703 = vpack.c.b16 %v687, %v686
      %vm704 = vcmask 31744
      %v706 = vsel %vm704, %v688, 0
      %v709 = vsel %vm704, %v689, 0
      %v712 = vsel %vm704, %v690, 0
      %v715 = vsel %vm704, %v691, 0
      %v718 = vsel %vm704, %v692, 0
      %v721 = vsel %vm704, %v693, 0
      %v724 = vsel %vm704, %v694, 0
      %v727 = vsel %vm704, %v695, 0
      %v730 = vsel %vm704, %v696, 0
      %v733 = vsel %vm704, %v697, 0
      %v736 = vsel %vm704, %v698, 0
      %v739 = vsel %vm704, %v699, 0
      %v742 = vsel %vm704, %v700, 0
      %v745 = vsel %vm704, %v701, 0
      %v748 = vsel %vm704, %v702, 0
      %v751 = vsel %vm704, %v703, 0
      %vm753 = vcmask 1041408
      %v755 = vsel %vm753, %v655, 0
      %757 = vmatprep.subr.bf16.mxu0 0
      %758 = vmatpush1.bf16.msra.mxu0 %v755
      %759 = vmatprep.subr.bf16.mxu0 0
      %760 = vmatpush1.bf16.msra.mxu0 0
      %761 = vmatprep.subr.bf16.mxu0 0
      %762 = vmatpush1.bf16.msra.mxu0 0
      %763 = vmatprep.subr.bf16.mxu0 0
      %764 = vmatpush1.bf16.msra.mxu0 0
      %765 = vmatprep.subr.bf16.mxu0 0
      %766 = vmatpush1.bf16.msra.mxu0 0
      %767 = vmatprep.subr.bf16.mxu0 0
      %768 = vmatpush1.bf16.msra.mxu0 0
      %769 = vmatprep.subr.bf16.mxu0 0
      %770 = vmatpush1.bf16.msra.mxu0 0
      %771 = vmatprep.subr.bf16.mxu0 0
      %772 = vmatpush1.bf16.msra.mxu0 0
      %773 = vmatprep.subr.bf16.mxu0 0
      %774 = vmatpush1.bf16.msra.mxu0 0
      %775 = vmatprep.subr.bf16.mxu0 0
      %776 = vmatpush1.bf16.msra.mxu0 0
      %777 = vmatprep.subr.bf16.mxu0 0
      %778 = vmatpush1.bf16.msra.mxu0 0
      %779 = vmatprep.subr.bf16.mxu0 0
      %780 = vmatpush1.bf16.msra.mxu0 0
      %781 = vmatprep.subr.bf16.mxu0 0
      %782 = vmatpush1.bf16.msra.mxu0 0
      %783 = vmatprep.subr.bf16.mxu0 0
      %784 = vmatpush1.bf16.msra.mxu0 0
      %785 = vmatprep.subr.bf16.mxu0 0
      %786 = vmatpush1.bf16.msra.mxu0 0
      %787 = vmatprep.subr.bf16.mxu0 0
      %788 = vmatpush1.bf16.msra.mxu0 0
      %789 = vmatprep.mubr.bf16.mxu0 0
      %790 = vmatmul.mubr.bf16.gmra.mrb[0].mxu0 %v706
      %v791 = vpop.f32.mrb[0].mxu0
      %v792 = vadd.f32 0.0, %v791
      %v793 = vpop.f32.mrb[0].mxu0
      %v794 = vpop.f32.mrb[0].mxu0
      %v795 = vadd.f32 0.0, %v794
      %v796 = vpop.f32.mrb[0].mxu0
      %797 = vmatprep.mubr.bf16.mxu0 0
      %798 = vmatmul.mubr.bf16.gmra.mrb[0].mxu0 %v709
      %v799 = vpop.f32.mrb[0].mxu0
      %v800 = vadd.f32 0.0, %v799
      %v801 = vpop.f32.mrb[0].mxu0
      %v802 = vpop.f32.mrb[0].mxu0
      %v803 = vadd.f32 0.0, %v802
      %v804 = vpop.f32.mrb[0].mxu0
      %805 = vmatprep.mubr.bf16.mxu0 0
      %806 = vmatmul.mubr.bf16.gmra.mrb[0].mxu0 %v712
      %v807 = vpop.f32.mrb[0].mxu0
      %v808 = vadd.f32 0.0, %v807
      %v809 = vpop.f32.mrb[0].mxu0
      %v810 = vpop.f32.mrb[0].mxu0
      %v811 = vadd.f32 0.0, %v810
      %v812 = vpop.f32.mrb[0].mxu0
      %813 = vmatprep.mubr.bf16.mxu0 0
      %814 = vmatmul.mubr.bf16.gmra.mrb[0].mxu0 %v715
      %v815 = vpop.f32.mrb[0].mxu0
      %v816 = vadd.f32 0.0, %v815
      %v817 = vpop.f32.mrb[0].mxu0
      %v818 = vpop.f32.mrb[0].mxu0
      %v819 = vadd.f32 0.0, %v818
      %v820 = vpop.f32.mrb[0].mxu0
      %821 = vmatprep.mubr.bf16.mxu0 0
      %822 = vmatmul.mubr.bf16.gmra.mrb[0].mxu0 %v718
      %v823 = vpop.f32.mrb[0].mxu0
      %v824 = vadd.f32 0.0, %v823
      %v825 = vpop.f32.mrb[0].mxu0
      %v826 = vpop.f32.mrb[0].mxu0
      %v827 = vadd.f32 0.0, %v826
      %v828 = vpop.f32.mrb[0].mxu0
      %829 = vmatprep.mubr.bf16.mxu0 0
      %830 = vmatmul.mubr.bf16.gmra.mrb[0].mxu0 %v721
      %v831 = vpop.f32.mrb[0].mxu0
      %v832 = vadd.f32 0.0, %v831
      %v833 = vpop.f32.mrb[0].mxu0
      %v834 = vpop.f32.mrb[0].mxu0
      %v835 = vadd.f32 0.0, %v834
      %v836 = vpop.f32.mrb[0].mxu0
      %837 = vmatprep.mubr.bf16.mxu0 0
      %838 = vmatmul.mubr.bf16.gmra.mrb[0].mxu0 %v724
      %v839 = vpop.f32.mrb[0].mxu0
      %v840 = vadd.f32 0.0, %v839
      %v841 = vpop.f32.mrb[0].mxu0
      %v842 = vpop.f32.mrb[0].mxu0
      %v843 = vadd.f32 0.0, %v842
      %v844 = vpop.f32.mrb[0].mxu0
      %845 = vmatprep.mubr.bf16.mxu0 0
      %846 = vmatmul.mubr.bf16.gmra.mrb[0].mxu0 %v727
      %v847 = vpop.f32.mrb[0].mxu0
      %v848 = vadd.f32 0.0, %v847
      %v849 = vpop.f32.mrb[0].mxu0
      %v850 = vpop.f32.mrb[0].mxu0
      %v851 = vadd.f32 0.0, %v850
      %v852 = vpop.f32.mrb[0].mxu0
      %853 = vmatprep.mubr.bf16.mxu0 0
      %854 = vmatmul.mubr.bf16.gmra.mrb[0].mxu0 %v730
      %v855 = vpop.f32.mrb[0].mxu0
      %v856 = vadd.f32 0.0, %v855
      %v857 = vpop.f32.mrb[0].mxu0
      %v858 = vpop.f32.mrb[0].mxu0
      %v859 = vadd.f32 0.0, %v858
      %v860 = vpop.f32.mrb[0].mxu0
      %861 = vmatprep.mubr.bf16.mxu0 0
      %862 = vmatmul.mubr.bf16.gmra.mrb[0].mxu0 %v733
      %v863 = vpop.f32.mrb[0].mxu0
      %v864 = vadd.f32 0.0, %v863
      %v865 = vpop.f32.mrb[0].mxu0
      %v866 = vpop.f32.mrb[0].mxu0
      %v867 = vadd.f32 0.0, %v866
      %v868 = vpop.f32.mrb[0].mxu0
      %869 = vmatprep.mubr.bf16.mxu0 0
      %870 = vmatmul.mubr.bf16.gmra.mrb[0].mxu0 %v736
      %v871 = vpop.f32.mrb[0].mxu0
      %v872 = vadd.f32 0.0, %v871
      %v873 = vpop.f32.mrb[0].mxu0
      %v874 = vpop.f32.mrb[0].mxu0
      %v875 = vadd.f32 0.0, %v874
      %v876 = vpop.f32.mrb[0].mxu0
      %877 = vmatprep.mubr.bf16.mxu0 0
      %878 = vmatmul.mubr.bf16.gmra.mrb[0].mxu0 %v739
      %v879 = vpop.f32.mrb[0].mxu0
      %v880 = vadd.f32 0.0, %v879
      %v881 = vpop.f32.mrb[0].mxu0
      %v882 = vpop.f32.mrb[0].mxu0
      %v883 = vadd.f32 0.0, %v882
      %v884 = vpop.f32.mrb[0].mxu0
      %885 = vmatprep.mubr.bf16.mxu0 0
      %886 = vmatmul.mubr.bf16.gmra.mrb[0].mxu0 %v742
      %v887 = vpop.f32.mrb[0].mxu0
      %v888 = vadd.f32 0.0, %v887
      %v889 = vpop.f32.mrb[0].mxu0
      %v890 = vpop.f32.mrb[0].mxu0
      %v891 = vadd.f32 0.0, %v890
      %v892 = vpop.f32.mrb[0].mxu0
      %893 = vmatprep.mubr.bf16.mxu0 0
      %894 = vmatmul.mubr.bf16.gmra.mrb[0].mxu0 %v745
      %v895 = vpop.f32.mrb[0].mxu0
      %v896 = vadd.f32 0.0, %v895
      %v897 = vpop.f32.mrb[0].mxu0
      %v898 = vpop.f32.mrb[0].mxu0
      %v899 = vadd.f32 0.0, %v898
      %v900 = vpop.f32.mrb[0].mxu0
      %901 = vmatprep.mubr.bf16.mxu0 0
      %902 = vmatmul.mubr.bf16.gmra.mrb[0].mxu0 %v748
      %v903 = vpop.f32.mrb[0].mxu0
      %v904 = vadd.f32 0.0, %v903
      %v905 = vpop.f32.mrb[0].mxu0
      %v906 = vpop.f32.mrb[0].mxu0
      %v907 = vadd.f32 0.0, %v906
      %v908 = vpop.f32.mrb[0].mxu0
      %909 = vmatprep.mubr.bf16.mxu0 0
      %910 = vmatmul.mubr.bf16.gmra.mrb[0].mxu0 %v751
      %v911 = vpop.f32.mrb[0].mxu0
      %v912 = vadd.f32 0.0, %v911
      %v913 = vpop.f32.mrb[0].mxu0
      %v914 = vpop.f32.mrb[0].mxu0
      %v915 = vadd.f32 0.0, %v914
      %v916 = vpop.f32.mrb[0].mxu0
      %917 = vdwg.mxu0
      %v950 = vunpack.c.l.b16 %v218
      %v951 = vunpack.c.l.b16 %v219
      %v952 = vunpack.c.l.b16 %v220
      %v953 = vunpack.c.l.b16 %v221
      %v954 = vunpack.c.l.b16 %v222
      %v955 = vunpack.c.l.b16 %v223
      %v956 = vunpack.c.l.b16 %v224
      %v957 = vunpack.c.l.b16 %v225
      %v958 = vunpack.c.l.b16 %v226
      %v959 = vunpack.c.l.b16 %v227
      %v960 = vunpack.c.l.b16 %v228
      %v961 = vunpack.c.l.b16 %v229
      %v962 = vunpack.c.l.b16 %v230
      %v963 = vunpack.c.l.b16 %v231
      %v964 = vunpack.c.l.b16 %v232
      %v965 = vunpack.c.l.b16 %v233
      %v966 = vunpack.c.l.b16 %v234
      %v967 = vunpack.c.l.b16 %v235
      %v968 = vunpack.c.l.b16 %v236
      %v969 = vunpack.c.l.b16 %v237
      %v970 = vunpack.c.l.b16 %v238
      %v971 = vunpack.c.l.b16 %v239
      %v972 = vunpack.c.l.b16 %v240
      %v973 = vunpack.c.l.b16 %v241
      %v974 = vunpack.c.l.b16 %v242
      %v975 = vunpack.c.l.b16 %v243
      %v976 = vunpack.c.l.b16 %v244
      %v977 = vunpack.c.l.b16 %v245
      %v978 = vunpack.c.l.b16 %v246
      %v979 = vunpack.c.l.b16 %v247
      %v980 = vunpack.c.l.b16 %v248
      %v981 = vunpack.c.l.b16 %v249
      %v982 = vpack.c.b16 %v951, %v950
      %v983 = vpack.c.b16 %v953, %v952
      %v984 = vpack.c.b16 %v955, %v954
      %v985 = vpack.c.b16 %v957, %v956
      %v986 = vpack.c.b16 %v959, %v958
      %v987 = vpack.c.b16 %v961, %v960
      %v988 = vpack.c.b16 %v963, %v962
      %v989 = vpack.c.b16 %v965, %v964
      %v990 = vpack.c.b16 %v967, %v966
      %v991 = vpack.c.b16 %v969, %v968
      %v992 = vpack.c.b16 %v971, %v970
      %v993 = vpack.c.b16 %v973, %v972
      %v994 = vpack.c.b16 %v975, %v974
      %v995 = vpack.c.b16 %v977, %v976
      %v996 = vpack.c.b16 %v979, %v978
      %v997 = vpack.c.b16 %v981, %v980
      %v999 = vsel %vm704, %v982, 0
      %v1002 = vsel %vm704, %v983, 0
      %v1005 = vsel %vm704, %v984, 0
      %v1008 = vsel %vm704, %v985, 0
      %v1011 = vsel %vm704, %v986, 0
      %v1014 = vsel %vm704, %v987, 0
      %v1017 = vsel %vm704, %v988, 0
      %v1020 = vsel %vm704, %v989, 0
      %v1023 = vsel %vm704, %v990, 0
      %v1026 = vsel %vm704, %v991, 0
      %v1029 = vsel %vm704, %v992, 0
      %v1032 = vsel %vm704, %v993, 0
      %v1035 = vsel %vm704, %v994, 0
      %v1038 = vsel %vm704, %v995, 0
      %v1041 = vsel %vm704, %v996, 0
      %v1044 = vsel %vm704, %v997, 0
      %v1047 = vsel %vm753, %v250, 0
      %1049 = vmatprep.subr.bf16.mxu0 0
      %1050 = vmatpush1.bf16.msra.mxu0 %v1047
      %1051 = vmatprep.subr.bf16.mxu0 0
      %1052 = vmatpush1.bf16.msra.mxu0 0
      %1053 = vmatprep.subr.bf16.mxu0 0
      %1054 = vmatpush1.bf16.msra.mxu0 0
      %1055 = vmatprep.subr.bf16.mxu0 0
      %1056 = vmatpush1.bf16.msra.mxu0 0
      %1057 = vmatprep.subr.bf16.mxu0 0
      %1058 = vmatpush1.bf16.msra.mxu0 0
      %1059 = vmatprep.subr.bf16.mxu0 0
      %1060 = vmatpush1.bf16.msra.mxu0 0
      %1061 = vmatprep.subr.bf16.mxu0 0
      %1062 = vmatpush1.bf16.msra.mxu0 0
      %1063 = vmatprep.subr.bf16.mxu0 0
      %1064 = vmatpush1.bf16.msra.mxu0 0
      %1065 = vmatprep.subr.bf16.mxu0 0
      %1066 = vmatpush1.bf16.msra.mxu0 0
      %1067 = vmatprep.subr.bf16.mxu0 0
      %1068 = vmatpush1.bf16.msra.mxu0 0
      %1069 = vmatprep.subr.bf16.mxu0 0
      %1070 = vmatpush1.bf16.msra.mxu0 0
      %1071 = vmatprep.subr.bf16.mxu0 0
      %1072 = vmatpush1.bf16.msra.mxu0 0
      %1073 = vmatprep.subr.bf16.mxu0 0
      %1074 = vmatpush1.bf16.msra.mxu0 0
      %1075 = vmatprep.subr.bf16.mxu0 0
      %1076 = vmatpush1.bf16.msra.mxu0 0
      %1077 = vmatprep.subr.bf16.mxu0 0
      %1078 = vmatpush1.bf16.msra.mxu0 0
      %1079 = vmatprep.subr.bf16.mxu0 0
      %1080 = vmatpush1.bf16.msra.mxu0 0
      %1081 = vmatprep.mubr.bf16.mxu0 0
      %1082 = vmatmul.mubr.bf16.gmra.mrb[0].mxu0 %v999
      %v1083 = vpop.f32.mrb[0].mxu0
      %v1084 = vadd.f32 %v792, %v1083
      %v1085 = vpop.f32.mrb[0].mxu0
      %v1086 = vpop.f32.mrb[0].mxu0
      %v1087 = vadd.f32 %v795, %v1086
      %v1088 = vpop.f32.mrb[0].mxu0
      %1089 = vmatprep.mubr.bf16.mxu0 0
      %1090 = vmatmul.mubr.bf16.gmra.mrb[0].mxu0 %v1002
      %v1091 = vpop.f32.mrb[0].mxu0
      %v1092 = vadd.f32 %v800, %v1091
      %v1093 = vpop.f32.mrb[0].mxu0
      %v1094 = vpop.f32.mrb[0].mxu0
      %v1095 = vadd.f32 %v803, %v1094
      %v1096 = vpop.f32.mrb[0].mxu0
      %1097 = vmatprep.mubr.bf16.mxu0 0
      %1098 = vmatmul.mubr.bf16.gmra.mrb[0].mxu0 %v1005
      %v1099 = vpop.f32.mrb[0].mxu0
      %v1100 = vadd.f32 %v808, %v1099
      %v1101 = vpop.f32.mrb[0].mxu0
      %v1102 = vpop.f32.mrb[0].mxu0
      %v1103 = vadd.f32 %v811, %v1102
      %v1104 = vpop.f32.mrb[0].mxu0
      %1105 = vmatprep.mubr.bf16.mxu0 0
      %1106 = vmatmul.mubr.bf16.gmra.mrb[0].mxu0 %v1008
      %v1107 = vpop.f32.mrb[0].mxu0
      %v1108 = vadd.f32 %v816, %v1107
      %v1109 = vpop.f32.mrb[0].mxu0
      %v1110 = vpop.f32.mrb[0].mxu0
      %v1111 = vadd.f32 %v819, %v1110
      %v1112 = vpop.f32.mrb[0].mxu0
      %1113 = vmatprep.mubr.bf16.mxu0 0
      %1114 = vmatmul.mubr.bf16.gmra.mrb[0].mxu0 %v1011
      %v1115 = vpop.f32.mrb[0].mxu0
      %v1116 = vadd.f32 %v824, %v1115
      %v1117 = vpop.f32.mrb[0].mxu0
      %v1118 = vpop.f32.mrb[0].mxu0
      %v1119 = vadd.f32 %v827, %v1118
      %v1120 = vpop.f32.mrb[0].mxu0
      %1121 = vmatprep.mubr.bf16.mxu0 0
      %1122 = vmatmul.mubr.bf16.gmra.mrb[0].mxu0 %v1014
      %v1123 = vpop.f32.mrb[0].mxu0
      %v1124 = vadd.f32 %v832, %v1123
      %v1125 = vpop.f32.mrb[0].mxu0
      %v1126 = vpop.f32.mrb[0].mxu0
      %v1127 = vadd.f32 %v835, %v1126
      %v1128 = vpop.f32.mrb[0].mxu0
      %1129 = vmatprep.mubr.bf16.mxu0 0
      %1130 = vmatmul.mubr.bf16.gmra.mrb[0].mxu0 %v1017
      %v1131 = vpop.f32.mrb[0].mxu0
      %v1132 = vadd.f32 %v840, %v1131
      %v1133 = vpop.f32.mrb[0].mxu0
      %v1134 = vpop.f32.mrb[0].mxu0
      %v1135 = vadd.f32 %v843, %v1134
      %v1136 = vpop.f32.mrb[0].mxu0
      %1137 = vmatprep.mubr.bf16.mxu0 0
      %1138 = vmatmul.mubr.bf16.gmra.mrb[0].mxu0 %v1020
      %v1139 = vpop.f32.mrb[0].mxu0
      %v1140 = vadd.f32 %v848, %v1139
      %v1141 = vpop.f32.mrb[0].mxu0
      %v1142 = vpop.f32.mrb[0].mxu0
      %v1143 = vadd.f32 %v851, %v1142
      %v1144 = vpop.f32.mrb[0].mxu0
      %1145 = vmatprep.mubr.bf16.mxu0 0
      %1146 = vmatmul.mubr.bf16.gmra.mrb[0].mxu0 %v1023
      %v1147 = vpop.f32.mrb[0].mxu0
      %v1148 = vadd.f32 %v856, %v1147
      %v1149 = vpop.f32.mrb[0].mxu0
      %v1150 = vpop.f32.mrb[0].mxu0
      %v1151 = vadd.f32 %v859, %v1150
      %v1152 = vpop.f32.mrb[0].mxu0
      %1153 = vmatprep.mubr.bf16.mxu0 0
      %1154 = vmatmul.mubr.bf16.gmra.mrb[0].mxu0 %v1026
      %v1155 = vpop.f32.mrb[0].mxu0
      %v1156 = vadd.f32 %v864, %v1155
      %v1157 = vpop.f32.mrb[0].mxu0
      %v1158 = vpop.f32.mrb[0].mxu0
      %v1159 = vadd.f32 %v867, %v1158
      %v1160 = vpop.f32.mrb[0].mxu0
      %1161 = vmatprep.mubr.bf16.mxu0 0
      %1162 = vmatmul.mubr.bf16.gmra.mrb[0].mxu0 %v1029
      %v1163 = vpop.f32.mrb[0].mxu0
      %v1164 = vadd.f32 %v872, %v1163
      %v1165 = vpop.f32.mrb[0].mxu0
      %v1166 = vpop.f32.mrb[0].mxu0
      %v1167 = vadd.f32 %v875, %v1166
      %v1168 = vpop.f32.mrb[0].mxu0
      %1169 = vmatprep.mubr.bf16.mxu0 0
      %1170 = vmatmul.mubr.bf16.gmra.mrb[0].mxu0 %v1032
      %v1171 = vpop.f32.mrb[0].mxu0
      %v1172 = vadd.f32 %v880, %v1171
      %v1173 = vpop.f32.mrb[0].mxu0
      %v1174 = vpop.f32.mrb[0].mxu0
      %v1175 = vadd.f32 %v883, %v1174
      %v1176 = vpop.f32.mrb[0].mxu0
      %1177 = vmatprep.mubr.bf16.mxu0 0
      %1178 = vmatmul.mubr.bf16.gmra.mrb[0].mxu0 %v1035
      %v1179 = vpop.f32.mrb[0].mxu0
      %v1180 = vadd.f32 %v888, %v1179
      %v1181 = vpop.f32.mrb[0].mxu0
      %v1182 = vpop.f32.mrb[0].mxu0
      %v1183 = vadd.f32 %v891, %v1182
      %v1184 = vpop.f32.mrb[0].mxu0
      %1185 = vmatprep.mubr.bf16.mxu0 0
      %1186 = vmatmul.mubr.bf16.gmra.mrb[0].mxu0 %v1038
      %v1187 = vpop.f32.mrb[0].mxu0
      %v1188 = vadd.f32 %v896, %v1187
      %v1189 = vpop.f32.mrb[0].mxu0
      %v1190 = vpop.f32.mrb[0].mxu0
      %v1191 = vadd.f32 %v899, %v1190
      %v1192 = vpop.f32.mrb[0].mxu0
      %1193 = vmatprep.mubr.bf16.mxu0 0
      %1194 = vmatmul.mubr.bf16.gmra.mrb[0].mxu0 %v1041
      %v1195 = vpop.f32.mrb[0].mxu0
      %v1196 = vadd.f32 %v904, %v1195
      %v1197 = vpop.f32.mrb[0].mxu0
      %v1198 = vpop.f32.mrb[0].mxu0
      %v1199 = vadd.f32 %v907, %v1198
      %v1200 = vpop.f32.mrb[0].mxu0
      %1201 = vmatprep.mubr.bf16.mxu0 0
      %1202 = vmatmul.mubr.bf16.gmra.mrb[0].mxu0 %v1044
      %v1203 = vpop.f32.mrb[0].mxu0
      %v1204 = vadd.f32 %v912, %v1203
      %v1205 = vpop.f32.mrb[0].mxu0
      %v1206 = vpop.f32.mrb[0].mxu0
      %v1207 = vadd.f32 %v915, %v1206
      %v1208 = vpop.f32.mrb[0].mxu0
      %1209 = vdwg.mxu0
      %v1210 = vld [vmem:[%s217] sm:$0xe]
      %v1211 = vld [vmem:[%s217 + $0xc] sm:$0xe]
      %v1212 = vld [vmem:[%s217 + $0x18] sm:$0xe]
      %v1213 = vld [vmem:[%s217 + $0x24] sm:$0xe]
      %v1214 = vld [vmem:[%s217 + $0x30] sm:$0xe]
      %v1215 = vld [vmem:[%s217 + $0x3c] sm:$0xe]
      %v1216 = vld [vmem:[%s217 + $0x48] sm:$0xe]
      %v1217 = vld [vmem:[%s217 + $0x54] sm:$0xe]
      %v1218 = vld [vmem:[%s217 + $0x60] sm:$0xe]
      %v1219 = vld [vmem:[%s217 + $0x6c] sm:$0xe]
      %v1220 = vld [vmem:[%s217 + $0x78] sm:$0xe]
      %v1221 = vld [vmem:[%s217 + $0x84] sm:$0xe]
      %v1222 = vld [vmem:[%s217 + $0x90] sm:$0xe]
      %v1223 = vld [vmem:[%s217 + $0x9c] sm:$0xe]
      %v1224 = vld [vmem:[%s217 + $0xa8] sm:$0xe]
      %v1225 = vld [vmem:[%s217 + $0xb4] sm:$0xe]
      %vm1258 = vcmask 1042432
      %vm1259 = vcmask 1046532
      %vm1260 = vmor %vm1258, %vm1259
      %v1261 = vrot.slane %v1210, 5
      %v1262 = vrot.slane %v1261, 4
      %v1263 = vrot.slane %v219, 5
      %v1264 = vsel %vm1260, %v1262, %v1263
      %v1265 = vrot.slane %v1263, 4
      %v1266 = vrot.slane %v251, 5
      %v1267 = vsel %vm1260, %v1265, %v1266
      %v1268 = vrot.slane %v1211, 5
      %v1269 = vrot.slane %v1268, 4
      %v1270 = vrot.slane %v221, 5
      %v1271 = vsel %vm1260, %v1269, %v1270
      %v1272 = vrot.slane %v1270, 4
      %v1273 = vrot.slane %v252, 5
      %v1274 = vsel %vm1260, %v1272, %v1273
      %v1275 = vrot.slane %v1212, 5
      %v1276 = vrot.slane %v1275, 4
      %v1277 = vrot.slane %v223, 5
      %v1278 = vsel %vm1260, %v1276, %v1277
      %v1279 = vrot.slane %v1277, 4
      %v1280 = vrot.slane %v253, 5
      %v1281 = vsel %vm1260, %v1279, %v1280
      %v1282 = vrot.slane %v1213, 5
      %v1283 = vrot.slane %v1282, 4
      %v1284 = vrot.slane %v225, 5
      %v1285 = vsel %vm1260, %v1283, %v1284
      %v1286 = vrot.slane %v1284, 4
      %v1287 = vrot.slane %v254, 5
      %v1288 = vsel %vm1260, %v1286, %v1287
      %v1289 = vrot.slane %v1214, 5
      %v1290 = vrot.slane %v1289, 4
      %v1291 = vrot.slane %v227, 5
      %v1292 = vsel %vm1260, %v1290, %v1291
      %v1293 = vrot.slane %v1291, 4
      %v1294 = vrot.slane %v255, 5
      %v1295 = vsel %vm1260, %v1293, %v1294
      %v1296 = vrot.slane %v1215, 5
      %v1297 = vrot.slane %v1296, 4
      %v1298 = vrot.slane %v229, 5
      %v1299 = vsel %vm1260, %v1297, %v1298
      %v1300 = vrot.slane %v1298, 4
      %v1301 = vrot.slane %v256, 5
      %v1302 = vsel %vm1260, %v1300, %v1301
      %v1303 = vrot.slane %v1216, 5
      %v1304 = vrot.slane %v1303, 4
      %v1305 = vrot.slane %v231, 5
      %v1306 = vsel %vm1260, %v1304, %v1305
      %v1307 = vrot.slane %v1305, 4
      %v1308 = vrot.slane %v257, 5
      %v1309 = vsel %vm1260, %v1307, %v1308
      %v1310 = vrot.slane %v1217, 5
      %v1311 = vrot.slane %v1310, 4
      %v1312 = vrot.slane %v233, 5
      %v1313 = vsel %vm1260, %v1311, %v1312
      %v1314 = vrot.slane %v1312, 4
      %v1315 = vrot.slane %v258, 5
      %v1316 = vsel %vm1260, %v1314, %v1315
      %v1317 = vrot.slane %v1218, 5
      %v1318 = vrot.slane %v1317, 4
      %v1319 = vrot.slane %v235, 5
      %v1320 = vsel %vm1260, %v1318, %v1319
      %v1321 = vrot.slane %v1319, 4
      %v1322 = vrot.slane %v259, 5
      %v1323 = vsel %vm1260, %v1321, %v1322
      %v1324 = vrot.slane %v1219, 5
      %v1325 = vrot.slane %v1324, 4
      %v1326 = vrot.slane %v237, 5
      %v1327 = vsel %vm1260, %v1325, %v1326
      %v1328 = vrot.slane %v1326, 4
      %v1329 = vrot.slane %v260, 5
      %v1330 = vsel %vm1260, %v1328, %v1329
      %v1331 = vrot.slane %v1220, 5
      %v1332 = vrot.slane %v1331, 4
      %v1333 = vrot.slane %v239, 5
      %v1334 = vsel %vm1260, %v1332, %v1333
      %v1335 = vrot.slane %v1333, 4
      %v1336 = vrot.slane %v261, 5
      %v1337 = vsel %vm1260, %v1335, %v1336
      %v1338 = vrot.slane %v1221, 5
      %v1339 = vrot.slane %v1338, 4
      %v1340 = vrot.slane %v241, 5
      %v1341 = vsel %vm1260, %v1339, %v1340
      %v1342 = vrot.slane %v1340, 4
      %v1343 = vrot.slane %v262, 5
      %v1344 = vsel %vm1260, %v1342, %v1343
      %v1345 = vrot.slane %v1222, 5
      %v1346 = vrot.slane %v1345, 4
      %v1347 = vrot.slane %v243, 5
      %v1348 = vsel %vm1260, %v1346, %v1347
      %v1349 = vrot.slane %v1347, 4
      %v1350 = vrot.slane %v263, 5
      %v1351 = vsel %vm1260, %v1349, %v1350
      %v1352 = vrot.slane %v1223, 5
      %v1353 = vrot.slane %v1352, 4
      %v1354 = vrot.slane %v245, 5
      %v1355 = vsel %vm1260, %v1353, %v1354
      %v1356 = vrot.slane %v1354, 4
      %v1357 = vrot.slane %v264, 5
      %v1358 = vsel %vm1260, %v1356, %v1357
      %v1359 = vrot.slane %v1224, 5
      %v1360 = vrot.slane %v1359, 4
      %v1361 = vrot.slane %v247, 5
      %v1362 = vsel %vm1260, %v1360, %v1361
      %v1363 = vrot.slane %v1361, 4
      %v1364 = vrot.slane %v265, 5
      %v1365 = vsel %vm1260, %v1363, %v1364
      %v1366 = vrot.slane %v1225, 5
      %v1367 = vrot.slane %v1366, 4
      %v1368 = vrot.slane %v249, 5
      %v1369 = vsel %vm1260, %v1367, %v1368
      %v1370 = vrot.slane %v1368, 4
      %v1371 = vrot.slane %v266, 5
      %v1372 = vsel %vm1260, %v1370, %v1371
      %s1373 = scalar_lea.vmem %s1, 4
      %v1374 = vld [vmem:[%s1373] sm:$0x3]
      %v1375 = vunpack.c.l.b16 %v1264
      %v1376 = vunpack.c.l.b16 %v1267
      %v1377 = vunpack.c.l.b16 %v1271
      %v1378 = vunpack.c.l.b16 %v1274
      %v1379 = vunpack.c.l.b16 %v1278
      %v1380 = vunpack.c.l.b16 %v1281
      %v1381 = vunpack.c.l.b16 %v1285
      %v1382 = vunpack.c.l.b16 %v1288
      %v1383 = vunpack.c.l.b16 %v1292
      %v1384 = vunpack.c.l.b16 %v1295
      %v1385 = vunpack.c.l.b16 %v1299
      %v1386 = vunpack.c.l.b16 %v1302
      %v1387 = vunpack.c.l.b16 %v1306
      %v1388 = vunpack.c.l.b16 %v1309
      %v1389 = vunpack.c.l.b16 %v1313
      %v1390 = vunpack.c.l.b16 %v1316
      %v1391 = vunpack.c.l.b16 %v1320
      %v1392 = vunpack.c.l.b16 %v1323
      %v1393 = vunpack.c.l.b16 %v1327
      %v1394 = vunpack.c.l.b16 %v1330
      %v1395 = vunpack.c.l.b16 %v1334
      %v1396 = vunpack.c.l.b16 %v1337
      %v1397 = vunpack.c.l.b16 %v1341
      %v1398 = vunpack.c.l.b16 %v1344
      %v1399 = vunpack.c.l.b16 %v1348
      %v1400 = vunpack.c.l.b16 %v1351
      %v1401 = vunpack.c.l.b16 %v1355
      %v1402 = vunpack.c.l.b16 %v1358
      %v1403 = vunpack.c.l.b16 %v1362
      %v1404 = vunpack.c.l.b16 %v1365
      %v1405 = vunpack.c.l.b16 %v1369
      %v1406 = vunpack.c.l.b16 %v1372
      %v1407 = vpack.c.b16 %v1376, %v1375
      %v1408 = vpack.c.b16 %v1378, %v1377
      %v1409 = vpack.c.b16 %v1380, %v1379
      %v1410 = vpack.c.b16 %v1382, %v1381
      %v1411 = vpack.c.b16 %v1384, %v1383
      %v1412 = vpack.c.b16 %v1386, %v1385
      %v1413 = vpack.c.b16 %v1388, %v1387
      %v1414 = vpack.c.b16 %v1390, %v1389
      %v1415 = vpack.c.b16 %v1392, %v1391
      %v1416 = vpack.c.b16 %v1394, %v1393
      %v1417 = vpack.c.b16 %v1396, %v1395
      %v1418 = vpack.c.b16 %v1398, %v1397
      %v1419 = vpack.c.b16 %v1400, %v1399
      %v1420 = vpack.c.b16 %v1402, %v1401
      %v1421 = vpack.c.b16 %v1404, %v1403
      %v1422 = vpack.c.b16 %v1406, %v1405
      %v1424 = vsel %vm704, %v1407, 0
      %v1427 = vsel %vm704, %v1408, 0
      %v1430 = vsel %vm704, %v1409, 0
      %v1433 = vsel %vm704, %v1410, 0
      %v1436 = vsel %vm704, %v1411, 0
      %v1439 = vsel %vm704, %v1412, 0
      %v1442 = vsel %vm704, %v1413, 0
      %v1445 = vsel %vm704, %v1414, 0
      %v1448 = vsel %vm704, %v1415, 0
      %v1451 = vsel %vm704, %v1416, 0
      %v1454 = vsel %vm704, %v1417, 0
      %v1457 = vsel %vm704, %v1418, 0
      %v1460 = vsel %vm704, %v1419, 0
      %v1463 = vsel %vm704, %v1420, 0
      %v1466 = vsel %vm704, %v1421, 0
      %v1469 = vsel %vm704, %v1422, 0
      %v1472 = vsel %vm753, %v1374, 0
      %1474 = vmatprep.subr.bf16.mxu0 0
      %1475 = vmatpush1.bf16.msra.mxu0 %v1472
      %1476 = vmatprep.subr.bf16.mxu0 0
      %1477 = vmatpush1.bf16.msra.mxu0 0
      %1478 = vmatprep.subr.bf16.mxu0 0
      %1479 = vmatpush1.bf16.msra.mxu0 0
      %1480 = vmatprep.subr.bf16.mxu0 0
      %1481 = vmatpush1.bf16.msra.mxu0 0
      %1482 = vmatprep.subr.bf16.mxu0 0
      %1483 = vmatpush1.bf16.msra.mxu0 0
      %1484 = vmatprep.subr.bf16.mxu0 0
      %1485 = vmatpush1.bf16.msra.mxu0 0
      %1486 = vmatprep.subr.bf16.mxu0 0
      %1487 = vmatpush1.bf16.msra.mxu0 0
      %1488 = vmatprep.subr.bf16.mxu0 0
      %1489 = vmatpush1.bf16.msra.mxu0 0
      %1490 = vmatprep.subr.bf16.mxu0 0
      %1491 = vmatpush1.bf16.msra.mxu0 0
      %1492 = vmatprep.subr.bf16.mxu0 0
      %1493 = vmatpush1.bf16.msra.mxu0 0
      %1494 = vmatprep.subr.bf16.mxu0 0
      %1495 = vmatpush1.bf16.msra.mxu0 0
      %1496 = vmatprep.subr.bf16.mxu0 0
      %1497 = vmatpush1.bf16.msra.mxu0 0
      %1498 = vmatprep.subr.bf16.mxu0 0
      %1499 = vmatpush1.bf16.msra.mxu0 0
      %1500 = vmatprep.subr.bf16.mxu0 0
      %1501 = vmatpush1.bf16.msra.mxu0 0
      %1502 = vmatprep.subr.bf16.mxu0 0
      %1503 = vmatpush1.bf16.msra.mxu0 0
      %1504 = vmatprep.subr.bf16.mxu0 0
      %1505 = vmatpush1.bf16.msra.mxu0 0
      %1506 = vmatprep.mubr.bf16.mxu0 0
      %1507 = vmatmul.mubr.bf16.gmra.mrb[0].mxu0 %v1424
      %v1508 = vpop.f32.mrb[0].mxu0
      %v1509 = vadd.f32 0.0, %v1508
      %v1510 = vpop.f32.mrb[0].mxu0
      %v1511 = vpop.f32.mrb[0].mxu0
      %v1512 = vadd.f32 0.0, %v1511
      %v1513 = vpop.f32.mrb[0].mxu0
      %1514 = vmatprep.mubr.bf16.mxu0 0
      %1515 = vmatmul.mubr.bf16.gmra.mrb[0].mxu0 %v1427
      %v1516 = vpop.f32.mrb[0].mxu0
      %v1517 = vadd.f32 0.0, %v1516
      %v1518 = vpop.f32.mrb[0].mxu0
      %v1519 = vpop.f32.mrb[0].mxu0
      %v1520 = vadd.f32 0.0, %v1519
      %v1521 = vpop.f32.mrb[0].mxu0
      %1522 = vmatprep.mubr.bf16.mxu0 0
      %1523 = vmatmul.mubr.bf16.gmra.mrb[0].mxu0 %v1430
      %v1524 = vpop.f32.mrb[0].mxu0
      %v1525 = vadd.f32 0.0, %v1524
      %v1526 = vpop.f32.mrb[0].mxu0
      %v1527 = vpop.f32.mrb[0].mxu0
      %v1528 = vadd.f32 0.0, %v1527
      %v1529 = vpop.f32.mrb[0].mxu0
      %1530 = vmatprep.mubr.bf16.mxu0 0
      %1531 = vmatmul.mubr.bf16.gmra.mrb[0].mxu0 %v1433
      %v1532 = vpop.f32.mrb[0].mxu0
      %v1533 = vadd.f32 0.0, %v1532
      %v1534 = vpop.f32.mrb[0].mxu0
      %v1535 = vpop.f32.mrb[0].mxu0
      %v1536 = vadd.f32 0.0, %v1535
      %v1537 = vpop.f32.mrb[0].mxu0
      %1538 = vmatprep.mubr.bf16.mxu0 0
      %1539 = vmatmul.mubr.bf16.gmra.mrb[0].mxu0 %v1436
      %v1540 = vpop.f32.mrb[0].mxu0
      %v1541 = vadd.f32 0.0, %v1540
      %v1542 = vpop.f32.mrb[0].mxu0
      %v1543 = vpop.f32.mrb[0].mxu0
      %v1544 = vadd.f32 0.0, %v1543
      %v1545 = vpop.f32.mrb[0].mxu0
      %1546 = vmatprep.mubr.bf16.mxu0 0
      %1547 = vmatmul.mubr.bf16.gmra.mrb[0].mxu0 %v1439
      %v1548 = vpop.f32.mrb[0].mxu0
      %v1549 = vadd.f32 0.0, %v1548
      %v1550 = vpop.f32.mrb[0].mxu0
      %v1551 = vpop.f32.mrb[0].mxu0
      %v1552 = vadd.f32 0.0, %v1551
      %v1553 = vpop.f32.mrb[0].mxu0
      %1554 = vmatprep.mubr.bf16.mxu0 0
      %1555 = vmatmul.mubr.bf16.gmra.mrb[0].mxu0 %v1442
      %v1556 = vpop.f32.mrb[0].mxu0
      %v1557 = vadd.f32 0.0, %v1556
      %v1558 = vpop.f32.mrb[0].mxu0
      %v1559 = vpop.f32.mrb[0].mxu0
      %v1560 = vadd.f32 0.0, %v1559
      %v1561 = vpop.f32.mrb[0].mxu0
      %1562 = vmatprep.mubr.bf16.mxu0 0
      %1563 = vmatmul.mubr.bf16.gmra.mrb[0].mxu0 %v1445
      %v1564 = vpop.f32.mrb[0].mxu0
      %v1565 = vadd.f32 0.0, %v1564
      %v1566 = vpop.f32.mrb[0].mxu0
      %v1567 = vpop.f32.mrb[0].mxu0
      %v1568 = vadd.f32 0.0, %v1567
      %v1569 = vpop.f32.mrb[0].mxu0
      %1570 = vmatprep.mubr.bf16.mxu0 0
      %1571 = vmatmul.mubr.bf16.gmra.mrb[0].mxu0 %v1448
      %v1572 = vpop.f32.mrb[0].mxu0
      %v1573 = vadd.f32 0.0, %v1572
      %v1574 = vpop.f32.mrb[0].mxu0
      %v1575 = vpop.f32.mrb[0].mxu0
      %v1576 = vadd.f32 0.0, %v1575
      %v1577 = vpop.f32.mrb[0].mxu0
      %1578 = vmatprep.mubr.bf16.mxu0 0
      %1579 = vmatmul.mubr.bf16.gmra.mrb[0].mxu0 %v1451
      %v1580 = vpop.f32.mrb[0].mxu0
      %v1581 = vadd.f32 0.0, %v1580
      %v1582 = vpop.f32.mrb[0].mxu0
      %v1583 = vpop.f32.mrb[0].mxu0
      %v1584 = vadd.f32 0.0, %v1583
      %v1585 = vpop.f32.mrb[0].mxu0
      %1586 = vmatprep.mubr.bf16.mxu0 0
      %1587 = vmatmul.mubr.bf16.gmra.mrb[0].mxu0 %v1454
      %v1588 = vpop.f32.mrb[0].mxu0
      %v1589 = vadd.f32 0.0, %v1588
      %v1590 = vpop.f32.mrb[0].mxu0
      %v1591 = vpop.f32.mrb[0].mxu0
      %v1592 = vadd.f32 0.0, %v1591
      %v1593 = vpop.f32.mrb[0].mxu0
      %1594 = vmatprep.mubr.bf16.mxu0 0
      %1595 = vmatmul.mubr.bf16.gmra.mrb[0].mxu0 %v1457
      %v1596 = vpop.f32.mrb[0].mxu0
      %v1597 = vadd.f32 0.0, %v1596
      %v1598 = vpop.f32.mrb[0].mxu0
      %v1599 = vpop.f32.mrb[0].mxu0
      %v1600 = vadd.f32 0.0, %v1599
      %v1601 = vpop.f32.mrb[0].mxu0
      %1602 = vmatprep.mubr.bf16.mxu0 0
      %1603 = vmatmul.mubr.bf16.gmra.mrb[0].mxu0 %v1460
      %v1604 = vpop.f32.mrb[0].mxu0
      %v1605 = vadd.f32 0.0, %v1604
      %v1606 = vpop.f32.mrb[0].mxu0
      %v1607 = vpop.f32.mrb[0].mxu0
      %v1608 = vadd.f32 0.0, %v1607
      %v1609 = vpop.f32.mrb[0].mxu0
      %1610 = vmatprep.mubr.bf16.mxu0 0
      %1611 = vmatmul.mubr.bf16.gmra.mrb[0].mxu0 %v1463
      %v1612 = vpop.f32.mrb[0].mxu0
      %v1613 = vadd.f32 0.0, %v1612
      %v1614 = vpop.f32.mrb[0].mxu0
      %v1615 = vpop.f32.mrb[0].mxu0
      %v1616 = vadd.f32 0.0, %v1615
      %v1617 = vpop.f32.mrb[0].mxu0
      %1618 = vmatprep.mubr.bf16.mxu0 0
      %1619 = vmatmul.mubr.bf16.gmra.mrb[0].mxu0 %v1466
      %v1620 = vpop.f32.mrb[0].mxu0
      %v1621 = vadd.f32 0.0, %v1620
      %v1622 = vpop.f32.mrb[0].mxu0
      %v1623 = vpop.f32.mrb[0].mxu0
      %v1624 = vadd.f32 0.0, %v1623
      %v1625 = vpop.f32.mrb[0].mxu0
      %1626 = vmatprep.mubr.bf16.mxu0 0
      %1627 = vmatmul.mubr.bf16.gmra.mrb[0].mxu0 %v1469
      %v1628 = vpop.f32.mrb[0].mxu0
      %v1629 = vadd.f32 0.0, %v1628
      %v1630 = vpop.f32.mrb[0].mxu0
      %v1631 = vpop.f32.mrb[0].mxu0
      %v1632 = vadd.f32 0.0, %v1631
      %v1633 = vpop.f32.mrb[0].mxu0
      %1634 = vdwg.mxu0
      %v1635 = vadd.f32 %v1084, %v1509
      %v1636 = vadd.f32 %v1087, %v1512
      %v1637 = vadd.f32 %v1092, %v1517
      %v1638 = vadd.f32 %v1095, %v1520
      %v1639 = vadd.f32 %v1100, %v1525
      %v1640 = vadd.f32 %v1103, %v1528
      %v1641 = vadd.f32 %v1108, %v1533
      %v1642 = vadd.f32 %v1111, %v1536
      %v1643 = vadd.f32 %v1116, %v1541
      %v1644 = vadd.f32 %v1119, %v1544
      %v1645 = vadd.f32 %v1124, %v1549
      %v1646 = vadd.f32 %v1127, %v1552
      %v1647 = vadd.f32 %v1132, %v1557
      %v1648 = vadd.f32 %v1135, %v1560
      %v1649 = vadd.f32 %v1140, %v1565
      %v1650 = vadd.f32 %v1143, %v1568
      %v1651 = vadd.f32 %v1148, %v1573
      %v1652 = vadd.f32 %v1151, %v1576
      %v1653 = vadd.f32 %v1156, %v1581
      %v1654 = vadd.f32 %v1159, %v1584
      %v1655 = vadd.f32 %v1164, %v1589
      %v1656 = vadd.f32 %v1167, %v1592
      %v1657 = vadd.f32 %v1172, %v1597
      %v1658 = vadd.f32 %v1175, %v1600
      %v1659 = vadd.f32 %v1180, %v1605
      %v1660 = vadd.f32 %v1183, %v1608
      %v1661 = vadd.f32 %v1188, %v1613
      %v1662 = vadd.f32 %v1191, %v1616
      %v1663 = vadd.f32 %v1196, %v1621
      %v1664 = vadd.f32 %v1199, %v1624
      %v1665 = vadd.f32 %v1204, %v1629
      %v1666 = vadd.f32 %v1207, %v1632
      %s1667 = sadd.s32 %s214, 1
      %s1668 = smul.u32 %s1667, 3
      %s1669 = smul.addr %s1668, 4
      %s1670 = scalar_lea.vmem %s195, %s1669
      %v1671 = vld [vmem:[%s1670] sm:$0xf]
      %v1672 = vld [vmem:[%s1670 + $0x4] sm:$0xf]
      %v1673 = vld [vmem:[%s1670 + $0xc] sm:$0xf]
      %v1674 = vld [vmem:[%s1670 + $0x10] sm:$0xf]
      %v1675 = vld [vmem:[%s1670 + $0x18] sm:$0xf]
      %v1676 = vld [vmem:[%s1670 + $0x1c] sm:$0xf]
      %v1677 = vld [vmem:[%s1670 + $0x24] sm:$0xf]
      %v1678 = vld [vmem:[%s1670 + $0x28] sm:$0xf]
      %v1679 = vld [vmem:[%s1670 + $0x30] sm:$0xf]
      %v1680 = vld [vmem:[%s1670 + $0x34] sm:$0xf]
      %v1681 = vld [vmem:[%s1670 + $0x3c] sm:$0xf]
      %v1682 = vld [vmem:[%s1670 + $0x40] sm:$0xf]
      %v1683 = vld [vmem:[%s1670 + $0x48] sm:$0xf]
      %v1684 = vld [vmem:[%s1670 + $0x4c] sm:$0xf]
      %v1685 = vld [vmem:[%s1670 + $0x54] sm:$0xf]
      %v1686 = vld [vmem:[%s1670 + $0x58] sm:$0xf]
      %v1687 = vld [vmem:[%s1670 + $0x60] sm:$0xf]
      %v1688 = vld [vmem:[%s1670 + $0x64] sm:$0xf]
      %v1689 = vld [vmem:[%s1670 + $0x6c] sm:$0xf]
      %v1690 = vld [vmem:[%s1670 + $0x70] sm:$0xf]
      %v1691 = vld [vmem:[%s1670 + $0x78] sm:$0xf]
      %v1692 = vld [vmem:[%s1670 + $0x7c] sm:$0xf]
      %v1693 = vld [vmem:[%s1670 + $0x84] sm:$0xf]
      %v1694 = vld [vmem:[%s1670 + $0x88] sm:$0xf]
      %v1695 = vld [vmem:[%s1670 + $0x90] sm:$0xf]
      %v1696 = vld [vmem:[%s1670 + $0x94] sm:$0xf]
      %v1697 = vld [vmem:[%s1670 + $0x9c] sm:$0xf]
      %v1698 = vld [vmem:[%s1670 + $0xa0] sm:$0xf]
      %v1699 = vld [vmem:[%s1670 + $0xa8] sm:$0xf]
      %v1700 = vld [vmem:[%s1670 + $0xac] sm:$0xf]
      %v1701 = vld [vmem:[%s1670 + $0xb4] sm:$0xf]
      %v1702 = vld [vmem:[%s1670 + $0xb8] sm:$0xf]
      %s1703 = scalar_lea.vmem %s1, 6
      %v1704 = vld [vmem:[%s1703] sm:$0x3]
      %v1737 = vunpack.c.l.b16 %v1671
      %v1738 = vunpack.c.l.b16 %v1672
      %v1739 = vunpack.c.l.b16 %v1673
      %v1740 = vunpack.c.l.b16 %v1674
      %v1741 = vunpack.c.l.b16 %v1675
      %v1742 = vunpack.c.l.b16 %v1676
      %v1743 = vunpack.c.l.b16 %v1677
      %v1744 = vunpack.c.l.b16 %v1678
      %v1745 = vunpack.c.l.b16 %v1679
      %v1746 = vunpack.c.l.b16 %v1680
      %v1747 = vunpack.c.l.b16 %v1681
      %v1748 = vunpack.c.l.b16 %v1682
      %v1749 = vunpack.c.l.b16 %v1683
      %v1750 = vunpack.c.l.b16 %v1684
      %v1751 = vunpack.c.l.b16 %v1685
      %v1752 = vunpack.c.l.b16 %v1686
      %v1753 = vunpack.c.l.b16 %v1687
      %v1754 = vunpack.c.l.b16 %v1688
      %v1755 = vunpack.c.l.b16 %v1689
      %v1756 = vunpack.c.l.b16 %v1690
      %v1757 = vunpack.c.l.b16 %v1691
      %v1758 = vunpack.c.l.b16 %v1692
      %v1759 = vunpack.c.l.b16 %v1693
      %v1760 = vunpack.c.l.b16 %v1694
      %v1761 = vunpack.c.l.b16 %v1695
      %v1762 = vunpack.c.l.b16 %v1696
      %v1763 = vunpack.c.l.b16 %v1697
      %v1764 = vunpack.c.l.b16 %v1698
      %v1765 = vunpack.c.l.b16 %v1699
      %v1766 = vunpack.c.l.b16 %v1700
      %v1767 = vunpack.c.l.b16 %v1701
      %v1768 = vunpack.c.l.b16 %v1702
      %v1769 = vpack.c.b16 %v1738, %v1737
      %v1770 = vpack.c.b16 %v1740, %v1739
      %v1771 = vpack.c.b16 %v1742, %v1741
      %v1772 = vpack.c.b16 %v1744, %v1743
      %v1773 = vpack.c.b16 %v1746, %v1745
      %v1774 = vpack.c.b16 %v1748, %v1747
      %v1775 = vpack.c.b16 %v1750, %v1749
      %v1776 = vpack.c.b16 %v1752, %v1751
      %v1777 = vpack.c.b16 %v1754, %v1753
      %v1778 = vpack.c.b16 %v1756, %v1755
      %v1779 = vpack.c.b16 %v1758, %v1757
      %v1780 = vpack.c.b16 %v1760, %v1759
      %v1781 = vpack.c.b16 %v1762, %v1761
      %v1782 = vpack.c.b16 %v1764, %v1763
      %v1783 = vpack.c.b16 %v1766, %v1765
      %v1784 = vpack.c.b16 %v1768, %v1767
      %v1786 = vsel %vm704, %v1769, 0
      %v1789 = vsel %vm704, %v1770, 0
      %v1792 = vsel %vm704, %v1771, 0
      %v1795 = vsel %vm704, %v1772, 0
      %v1798 = vsel %vm704, %v1773, 0
      %v1801 = vsel %vm704, %v1774, 0
      %v1804 = vsel %vm704, %v1775, 0
      %v1807 = vsel %vm704, %v1776, 0
      %v1810 = vsel %vm704, %v1777, 0
      %v1813 = vsel %vm704, %v1778, 0
      %v1816 = vsel %vm704, %v1779, 0
      %v1819 = vsel %vm704, %v1780, 0
      %v1822 = vsel %vm704, %v1781, 0
      %v1825 = vsel %vm704, %v1782, 0
      %v1828 = vsel %vm704, %v1783, 0
      %v1831 = vsel %vm704, %v1784, 0
      %v1834 = vsel %vm753, %v1704, 0
      %1836 = vmatprep.subr.bf16.mxu0 0
      %1837 = vmatpush1.bf16.msra.mxu0 %v1834
      %1838 = vmatprep.subr.bf16.mxu0 0
      %1839 = vmatpush1.bf16.msra.mxu0 0
      %1840 = vmatprep.subr.bf16.mxu0 0
      %1841 = vmatpush1.bf16.msra.mxu0 0
      %1842 = vmatprep.subr.bf16.mxu0 0
      %1843 = vmatpush1.bf16.msra.mxu0 0
      %1844 = vmatprep.subr.bf16.mxu0 0
      %1845 = vmatpush1.bf16.msra.mxu0 0
      %1846 = vmatprep.subr.bf16.mxu0 0
      %1847 = vmatpush1.bf16.msra.mxu0 0
      %1848 = vmatprep.subr.bf16.mxu0 0
      %1849 = vmatpush1.bf16.msra.mxu0 0
      %1850 = vmatprep.subr.bf16.mxu0 0
      %1851 = vmatpush1.bf16.msra.mxu0 0
      %1852 = vmatprep.subr.bf16.mxu0 0
      %1853 = vmatpush1.bf16.msra.mxu0 0
      %1854 = vmatprep.subr.bf16.mxu0 0
      %1855 = vmatpush1.bf16.msra.mxu0 0
      %1856 = vmatprep.subr.bf16.mxu0 0
      %1857 = vmatpush1.bf16.msra.mxu0 0
      %1858 = vmatprep.subr.bf16.mxu0 0
      %1859 = vmatpush1.bf16.msra.mxu0 0
      %1860 = vmatprep.subr.bf16.mxu0 0
      %1861 = vmatpush1.bf16.msra.mxu0 0
      %1862 = vmatprep.subr.bf16.mxu0 0
      %1863 = vmatpush1.bf16.msra.mxu0 0
      %1864 = vmatprep.subr.bf16.mxu0 0
      %1865 = vmatpush1.bf16.msra.mxu0 0
      %1866 = vmatprep.subr.bf16.mxu0 0
      %1867 = vmatpush1.bf16.msra.mxu0 0
      %1868 = vmatprep.mubr.bf16.mxu0 0
      %1869 = vmatmul.mubr.bf16.gmra.mrb[0].mxu0 %v1786
      %v1870 = vpop.f32.mrb[0].mxu0
      %v1871 = vadd.f32 0.0, %v1870
      %v1872 = vpop.f32.mrb[0].mxu0
      %v1873 = vpop.f32.mrb[0].mxu0
      %v1874 = vadd.f32 0.0, %v1873
      %v1875 = vpop.f32.mrb[0].mxu0
      %1876 = vmatprep.mubr.bf16.mxu0 0
      %1877 = vmatmul.mubr.bf16.gmra.mrb[0].mxu0 %v1789
      %v1878 = vpop.f32.mrb[0].mxu0
      %v1879 = vadd.f32 0.0, %v1878
      %v1880 = vpop.f32.mrb[0].mxu0
      %v1881 = vpop.f32.mrb[0].mxu0
      %v1882 = vadd.f32 0.0, %v1881
      %v1883 = vpop.f32.mrb[0].mxu0
      %1884 = vmatprep.mubr.bf16.mxu0 0
      %1885 = vmatmul.mubr.bf16.gmra.mrb[0].mxu0 %v1792
      %v1886 = vpop.f32.mrb[0].mxu0
      %v1887 = vadd.f32 0.0, %v1886
      %v1888 = vpop.f32.mrb[0].mxu0
      %v1889 = vpop.f32.mrb[0].mxu0
      %v1890 = vadd.f32 0.0, %v1889
      %v1891 = vpop.f32.mrb[0].mxu0
      %1892 = vmatprep.mubr.bf16.mxu0 0
      %1893 = vmatmul.mubr.bf16.gmra.mrb[0].mxu0 %v1795
      %v1894 = vpop.f32.mrb[0].mxu0
      %v1895 = vadd.f32 0.0, %v1894
      %v1896 = vpop.f32.mrb[0].mxu0
      %v1897 = vpop.f32.mrb[0].mxu0
      %v1898 = vadd.f32 0.0, %v1897
      %v1899 = vpop.f32.mrb[0].mxu0
      %1900 = vmatprep.mubr.bf16.mxu0 0
      %1901 = vmatmul.mubr.bf16.gmra.mrb[0].mxu0 %v1798
      %v1902 = vpop.f32.mrb[0].mxu0
      %v1903 = vadd.f32 0.0, %v1902
      %v1904 = vpop.f32.mrb[0].mxu0
      %v1905 = vpop.f32.mrb[0].mxu0
      %v1906 = vadd.f32 0.0, %v1905
      %v1907 = vpop.f32.mrb[0].mxu0
      %1908 = vmatprep.mubr.bf16.mxu0 0
      %1909 = vmatmul.mubr.bf16.gmra.mrb[0].mxu0 %v1801
      %v1910 = vpop.f32.mrb[0].mxu0
      %v1911 = vadd.f32 0.0, %v1910
      %v1912 = vpop.f32.mrb[0].mxu0
      %v1913 = vpop.f32.mrb[0].mxu0
      %v1914 = vadd.f32 0.0, %v1913
      %v1915 = vpop.f32.mrb[0].mxu0
      %1916 = vmatprep.mubr.bf16.mxu0 0
      %1917 = vmatmul.mubr.bf16.gmra.mrb[0].mxu0 %v1804
      %v1918 = vpop.f32.mrb[0].mxu0
      %v1919 = vadd.f32 0.0, %v1918
      %v1920 = vpop.f32.mrb[0].mxu0
      %v1921 = vpop.f32.mrb[0].mxu0
      %v1922 = vadd.f32 0.0, %v1921
      %v1923 = vpop.f32.mrb[0].mxu0
      %1924 = vmatprep.mubr.bf16.mxu0 0
      %1925 = vmatmul.mubr.bf16.gmra.mrb[0].mxu0 %v1807
      %v1926 = vpop.f32.mrb[0].mxu0
      %v1927 = vadd.f32 0.0, %v1926
      %v1928 = vpop.f32.mrb[0].mxu0
      %v1929 = vpop.f32.mrb[0].mxu0
      %v1930 = vadd.f32 0.0, %v1929
      %v1931 = vpop.f32.mrb[0].mxu0
      %1932 = vmatprep.mubr.bf16.mxu0 0
      %1933 = vmatmul.mubr.bf16.gmra.mrb[0].mxu0 %v1810
      %v1934 = vpop.f32.mrb[0].mxu0
      %v1935 = vadd.f32 0.0, %v1934
      %v1936 = vpop.f32.mrb[0].mxu0
      %v1937 = vpop.f32.mrb[0].mxu0
      %v1938 = vadd.f32 0.0, %v1937
      %v1939 = vpop.f32.mrb[0].mxu0
      %1940 = vmatprep.mubr.bf16.mxu0 0
      %1941 = vmatmul.mubr.bf16.gmra.mrb[0].mxu0 %v1813
      %v1942 = vpop.f32.mrb[0].mxu0
      %v1943 = vadd.f32 0.0, %v1942
      %v1944 = vpop.f32.mrb[0].mxu0
      %v1945 = vpop.f32.mrb[0].mxu0
      %v1946 = vadd.f32 0.0, %v1945
      %v1947 = vpop.f32.mrb[0].mxu0
      %1948 = vmatprep.mubr.bf16.mxu0 0
      %1949 = vmatmul.mubr.bf16.gmra.mrb[0].mxu0 %v1816
      %v1950 = vpop.f32.mrb[0].mxu0
      %v1951 = vadd.f32 0.0, %v1950
      %v1952 = vpop.f32.mrb[0].mxu0
      %v1953 = vpop.f32.mrb[0].mxu0
      %v1954 = vadd.f32 0.0, %v1953
      %v1955 = vpop.f32.mrb[0].mxu0
      %1956 = vmatprep.mubr.bf16.mxu0 0
      %1957 = vmatmul.mubr.bf16.gmra.mrb[0].mxu0 %v1819
      %v1958 = vpop.f32.mrb[0].mxu0
      %v1959 = vadd.f32 0.0, %v1958
      %v1960 = vpop.f32.mrb[0].mxu0
      %v1961 = vpop.f32.mrb[0].mxu0
      %v1962 = vadd.f32 0.0, %v1961
      %v1963 = vpop.f32.mrb[0].mxu0
      %1964 = vmatprep.mubr.bf16.mxu0 0
      %1965 = vmatmul.mubr.bf16.gmra.mrb[0].mxu0 %v1822
      %v1966 = vpop.f32.mrb[0].mxu0
      %v1967 = vadd.f32 0.0, %v1966
      %v1968 = vpop.f32.mrb[0].mxu0
      %v1969 = vpop.f32.mrb[0].mxu0
      %v1970 = vadd.f32 0.0, %v1969
      %v1971 = vpop.f32.mrb[0].mxu0
      %1972 = vmatprep.mubr.bf16.mxu0 0
      %1973 = vmatmul.mubr.bf16.gmra.mrb[0].mxu0 %v1825
      %v1974 = vpop.f32.mrb[0].mxu0
      %v1975 = vadd.f32 0.0, %v1974
      %v1976 = vpop.f32.mrb[0].mxu0
      %v1977 = vpop.f32.mrb[0].mxu0
      %v1978 = vadd.f32 0.0, %v1977
      %v1979 = vpop.f32.mrb[0].mxu0
      %1980 = vmatprep.mubr.bf16.mxu0 0
      %1981 = vmatmul.mubr.bf16.gmra.mrb[0].mxu0 %v1828
      %v1982 = vpop.f32.mrb[0].mxu0
      %v1983 = vadd.f32 0.0, %v1982
      %v1984 = vpop.f32.mrb[0].mxu0
      %v1985 = vpop.f32.mrb[0].mxu0
      %v1986 = vadd.f32 0.0, %v1985
      %v1987 = vpop.f32.mrb[0].mxu0
      %1988 = vmatprep.mubr.bf16.mxu0 0
      %1989 = vmatmul.mubr.bf16.gmra.mrb[0].mxu0 %v1831
      %v1990 = vpop.f32.mrb[0].mxu0
      %v1991 = vadd.f32 0.0, %v1990
      %v1992 = vpop.f32.mrb[0].mxu0
      %v1993 = vpop.f32.mrb[0].mxu0
      %v1994 = vadd.f32 0.0, %v1993
      %v1995 = vpop.f32.mrb[0].mxu0
      %1996 = vdwg.mxu0
      %v1997 = vadd.f32 %v1635, %v1871
      %v1998 = vadd.f32 %v1636, %v1874
      %v1999 = vadd.f32 %v1637, %v1879
      %v2000 = vadd.f32 %v1638, %v1882
      %v2001 = vadd.f32 %v1639, %v1887
      %v2002 = vadd.f32 %v1640, %v1890
      %v2003 = vadd.f32 %v1641, %v1895
      %v2004 = vadd.f32 %v1642, %v1898
      %v2005 = vadd.f32 %v1643, %v1903
      %v2006 = vadd.f32 %v1644, %v1906
      %v2007 = vadd.f32 %v1645, %v1911
      %v2008 = vadd.f32 %v1646, %v1914
      %v2009 = vadd.f32 %v1647, %v1919
      %v2010 = vadd.f32 %v1648, %v1922
      %v2011 = vadd.f32 %v1649, %v1927
      %v2012 = vadd.f32 %v1650, %v1930
      %v2013 = vadd.f32 %v1651, %v1935
      %v2014 = vadd.f32 %v1652, %v1938
      %v2015 = vadd.f32 %v1653, %v1943
      %v2016 = vadd.f32 %v1654, %v1946
      %v2017 = vadd.f32 %v1655, %v1951
      %v2018 = vadd.f32 %v1656, %v1954
      %v2019 = vadd.f32 %v1657, %v1959
      %v2020 = vadd.f32 %v1658, %v1962
      %v2021 = vadd.f32 %v1659, %v1967
      %v2022 = vadd.f32 %v1660, %v1970
      %v2023 = vadd.f32 %v1661, %v1975
      %v2024 = vadd.f32 %v1662, %v1978
      %v2025 = vadd.f32 %v1663, %v1983
      %v2026 = vadd.f32 %v1664, %v1986
      %v2027 = vadd.f32 %v1665, %v1991
      %v2028 = vadd.f32 %v1666, %v1994
      %v2029 = vld [vmem:[%s1670] sm:$0xf]
      %v2030 = vld [vmem:[%s1670 + $0x4] sm:$0xf]
      %v2031 = vld [vmem:[%s1670 + $0x8] sm:$0x1]
      %v2032 = vld [vmem:[%s1670 + $0xc] sm:$0xf]
      %v2033 = vld [vmem:[%s1670 + $0x10] sm:$0xf]
      %v2034 = vld [vmem:[%s1670 + $0x14] sm:$0x1]
      %v2035 = vld [vmem:[%s1670 + $0x18] sm:$0xf]
      %v2036 = vld [vmem:[%s1670 + $0x1c] sm:$0xf]
      %v2037 = vld [vmem:[%s1670 + $0x20] sm:$0x1]
      %v2038 = vld [vmem:[%s1670 + $0x24] sm:$0xf]
      %v2039 = vld [vmem:[%s1670 + $0x28] sm:$0xf]
      %v2040 = vld [vmem:[%s1670 + $0x2c] sm:$0x1]
      %v2041 = vld [vmem:[%s1670 + $0x30] sm:$0xf]
      %v2042 = vld [vmem:[%s1670 + $0x34] sm:$0xf]
      %v2043 = vld [vmem:[%s1670 + $0x38] sm:$0x1]
      %v2044 = vld [vmem:[%s1670 + $0x3c] sm:$0xf]
      %v2045 = vld [vmem:[%s1670 + $0x40] sm:$0xf]
      %v2046 = vld [vmem:[%s1670 + $0x44] sm:$0x1]
      %v2047 = vld [vmem:[%s1670 + $0x48] sm:$0xf]
      %v2048 = vld [vmem:[%s1670 + $0x4c] sm:$0xf]
      %v2049 = vld [vmem:[%s1670 + $0x50] sm:$0x1]
      %v2050 = vld [vmem:[%s1670 + $0x54] sm:$0xf]
      %v2051 = vld [vmem:[%s1670 + $0x58] sm:$0xf]
      %v2052 = vld [vmem:[%s1670 + $0x5c] sm:$0x1]
      %v2053 = vld [vmem:[%s1670 + $0x60] sm:$0xf]
      %v2054 = vld [vmem:[%s1670 + $0x64] sm:$0xf]
      %v2055 = vld [vmem:[%s1670 + $0x68] sm:$0x1]
      %v2056 = vld [vmem:[%s1670 + $0x6c] sm:$0xf]
      %v2057 = vld [vmem:[%s1670 + $0x70] sm:$0xf]
      %v2058 = vld [vmem:[%s1670 + $0x74] sm:$0x1]
      %v2059 = vld [vmem:[%s1670 + $0x78] sm:$0xf]
      %v2060 = vld [vmem:[%s1670 + $0x7c] sm:$0xf]
      %v2061 = vld [vmem:[%s1670 + $0x80] sm:$0x1]
      %v2062 = vld [vmem:[%s1670 + $0x84] sm:$0xf]
      %v2063 = vld [vmem:[%s1670 + $0x88] sm:$0xf]
      %v2064 = vld [vmem:[%s1670 + $0x8c] sm:$0x1]
      %v2065 = vld [vmem:[%s1670 + $0x90] sm:$0xf]
      %v2066 = vld [vmem:[%s1670 + $0x94] sm:$0xf]
      %v2067 = vld [vmem:[%s1670 + $0x98] sm:$0x1]
      %v2068 = vld [vmem:[%s1670 + $0x9c] sm:$0xf]
      %v2069 = vld [vmem:[%s1670 + $0xa0] sm:$0xf]
      %v2070 = vld [vmem:[%s1670 + $0xa4] sm:$0x1]
      %v2071 = vld [vmem:[%s1670 + $0xa8] sm:$0xf]
      %v2072 = vld [vmem:[%s1670 + $0xac] sm:$0xf]
      %v2073 = vld [vmem:[%s1670 + $0xb0] sm:$0x1]
      %v2074 = vld [vmem:[%s1670 + $0xb4] sm:$0xf]
      %v2075 = vld [vmem:[%s1670 + $0xb8] sm:$0xf]
      %v2076 = vld [vmem:[%s1670 + $0xbc] sm:$0x1]
      %v2078 = vshrl.u32 %v2029, 16
      %v2080 = vrot.slane %v2078, 4
      %v2081 = vshll.u32 %v2029, 16
      %v2083 = vrot.slane %v2081, 5
      %v2084 = vor.u32 %v2080, %v2083
      %v2085 = vrot.slane %v2084, 4
      %v2087 = vshll.u32 %v2030, 16
      %v2089 = vrot.slane %v2087, 5
      %v2090 = vsel %vm269, %v2085, %v2089
      %v2091 = vshrl.u32 %v2030, 16
      %v2093 = vrot.slane %v2091, 4
      %v2094 = vor.u32 %v2093, %v2089
      %v2095 = vrot.slane %v2094, 4
      %v2097 = vshll.u32 %v2031, 16
      %v2099 = vrot.slane %v2097, 5
      %v2100 = vsel %vm269, %v2095, %v2099
      %v2102 = vshrl.u32 %v2032, 16
      %v2104 = vrot.slane %v2102, 4
      %v2105 = vshll.u32 %v2032, 16
      %v2107 = vrot.slane %v2105, 5
      %v2108 = vor.u32 %v2104, %v2107
      %v2109 = vrot.slane %v2108, 4
      %v2111 = vshll.u32 %v2033, 16
      %v2113 = vrot.slane %v2111, 5
      %v2114 = vsel %vm269, %v2109, %v2113
      %v2115 = vshrl.u32 %v2033, 16
      %v2117 = vrot.slane %v2115, 4
      %v2118 = vor.u32 %v2117, %v2113
      %v2119 = vrot.slane %v2118, 4
      %v2121 = vshll.u32 %v2034, 16
      %v2123 = vrot.slane %v2121, 5
      %v2124 = vsel %vm269, %v2119, %v2123
      %v2126 = vshrl.u32 %v2035, 16
      %v2128 = vrot.slane %v2126, 4
      %v2129 = vshll.u32 %v2035, 16
      %v2131 = vrot.slane %v2129, 5
      %v2132 = vor.u32 %v2128, %v2131
      %v2133 = vrot.slane %v2132, 4
      %v2135 = vshll.u32 %v2036, 16
      %v2137 = vrot.slane %v2135, 5
      %v2138 = vsel %vm269, %v2133, %v2137
      %v2139 = vshrl.u32 %v2036, 16
      %v2141 = vrot.slane %v2139, 4
      %v2142 = vor.u32 %v2141, %v2137
      %v2143 = vrot.slane %v2142, 4
      %v2145 = vshll.u32 %v2037, 16
      %v2147 = vrot.slane %v2145, 5
      %v2148 = vsel %vm269, %v2143, %v2147
      %v2150 = vshrl.u32 %v2038, 16
      %v2152 = vrot.slane %v2150, 4
      %v2153 = vshll.u32 %v2038, 16
      %v2155 = vrot.slane %v2153, 5
      %v2156 = vor.u32 %v2152, %v2155
      %v2157 = vrot.slane %v2156, 4
      %v2159 = vshll.u32 %v2039, 16
      %v2161 = vrot.slane %v2159, 5
      %v2162 = vsel %vm269, %v2157, %v2161
      %v2163 = vshrl.u32 %v2039, 16
      %v2165 = vrot.slane %v2163, 4
      %v2166 = vor.u32 %v2165, %v2161
      %v2167 = vrot.slane %v2166, 4
      %v2169 = vshll.u32 %v2040, 16
      %v2171 = vrot.slane %v2169, 5
      %v2172 = vsel %vm269, %v2167, %v2171
      %v2174 = vshrl.u32 %v2041, 16
      %v2176 = vrot.slane %v2174, 4
      %v2177 = vshll.u32 %v2041, 16
      %v2179 = vrot.slane %v2177, 5
      %v2180 = vor.u32 %v2176, %v2179
      %v2181 = vrot.slane %v2180, 4
      %v2183 = vshll.u32 %v2042, 16
      %v2185 = vrot.slane %v2183, 5
      %v2186 = vsel %vm269, %v2181, %v2185
      %v2187 = vshrl.u32 %v2042, 16
      %v2189 = vrot.slane %v2187, 4
      %v2190 = vor.u32 %v2189, %v2185
      %v2191 = vrot.slane %v2190, 4
      %v2193 = vshll.u32 %v2043, 16
      %v2195 = vrot.slane %v2193, 5
      %v2196 = vsel %vm269, %v2191, %v2195
      %v2198 = vshrl.u32 %v2044, 16
      %v2200 = vrot.slane %v2198, 4
      %v2201 = vshll.u32 %v2044, 16
      %v2203 = vrot.slane %v2201, 5
      %v2204 = vor.u32 %v2200, %v2203
      %v2205 = vrot.slane %v2204, 4
      %v2207 = vshll.u32 %v2045, 16
      %v2209 = vrot.slane %v2207, 5
      %v2210 = vsel %vm269, %v2205, %v2209
      %v2211 = vshrl.u32 %v2045, 16
      %v2213 = vrot.slane %v2211, 4
      %v2214 = vor.u32 %v2213, %v2209
      %v2215 = vrot.slane %v2214, 4
      %v2217 = vshll.u32 %v2046, 16
      %v2219 = vrot.slane %v2217, 5
      %v2220 = vsel %vm269, %v2215, %v2219
      %v2222 = vshrl.u32 %v2047, 16
      %v2224 = vrot.slane %v2222, 4
      %v2225 = vshll.u32 %v2047, 16
      %v2227 = vrot.slane %v2225, 5
      %v2228 = vor.u32 %v2224, %v2227
      %v2229 = vrot.slane %v2228, 4
      %v2231 = vshll.u32 %v2048, 16
      %v2233 = vrot.slane %v2231, 5
      %v2234 = vsel %vm269, %v2229, %v2233
      %v2235 = vshrl.u32 %v2048, 16
      %v2237 = vrot.slane %v2235, 4
      %v2238 = vor.u32 %v2237, %v2233
      %v2239 = vrot.slane %v2238, 4
      %v2241 = vshll.u32 %v2049, 16
      %v2243 = vrot.slane %v2241, 5
      %v2244 = vsel %vm269, %v2239, %v2243
      %v2246 = vshrl.u32 %v2050, 16
      %v2248 = vrot.slane %v2246, 4
      %v2249 = vshll.u32 %v2050, 16
      %v2251 = vrot.slane %v2249, 5
      %v2252 = vor.u32 %v2248, %v2251
      %v2253 = vrot.slane %v2252, 4
      %v2255 = vshll.u32 %v2051, 16
      %v2257 = vrot.slane %v2255, 5
      %v2258 = vsel %vm269, %v2253, %v2257
      %v2259 = vshrl.u32 %v2051, 16
      %v2261 = vrot.slane %v2259, 4
      %v2262 = vor.u32 %v2261, %v2257
      %v2263 = vrot.slane %v2262, 4
      %v2265 = vshll.u32 %v2052, 16
      %v2267 = vrot.slane %v2265, 5
      %v2268 = vsel %vm269, %v2263, %v2267
      %v2270 = vshrl.u32 %v2053, 16
      %v2272 = vrot.slane %v2270, 4
      %v2273 = vshll.u32 %v2053, 16
      %v2275 = vrot.slane %v2273, 5
      %v2276 = vor.u32 %v2272, %v2275
      %v2277 = vrot.slane %v2276, 4
      %v2279 = vshll.u32 %v2054, 16
      %v2281 = vrot.slane %v2279, 5
      %v2282 = vsel %vm269, %v2277, %v2281
      %v2283 = vshrl.u32 %v2054, 16
      %v2285 = vrot.slane %v2283, 4
      %v2286 = vor.u32 %v2285, %v2281
      %v2287 = vrot.slane %v2286, 4
      %v2289 = vshll.u32 %v2055, 16
      %v2291 = vrot.slane %v2289, 5
      %v2292 = vsel %vm269, %v2287, %v2291
      %v2294 = vshrl.u32 %v2056, 16
      %v2296 = vrot.slane %v2294, 4
      %v2297 = vshll.u32 %v2056, 16
      %v2299 = vrot.slane %v2297, 5
      %v2300 = vor.u32 %v2296, %v2299
      %v2301 = vrot.slane %v2300, 4
      %v2303 = vshll.u32 %v2057, 16
      %v2305 = vrot.slane %v2303, 5
      %v2306 = vsel %vm269, %v2301, %v2305
      %v2307 = vshrl.u32 %v2057, 16
      %v2309 = vrot.slane %v2307, 4
      %v2310 = vor.u32 %v2309, %v2305
      %v2311 = vrot.slane %v2310, 4
      %v2313 = vshll.u32 %v2058, 16
      %v2315 = vrot.slane %v2313, 5
      %v2316 = vsel %vm269, %v2311, %v2315
      %v2318 = vshrl.u32 %v2059, 16
      %v2320 = vrot.slane %v2318, 4
      %v2321 = vshll.u32 %v2059, 16
      %v2323 = vrot.slane %v2321, 5
      %v2324 = vor.u32 %v2320, %v2323
      %v2325 = vrot.slane %v2324, 4
      %v2327 = vshll.u32 %v2060, 16
      %v2329 = vrot.slane %v2327, 5
      %v2330 = vsel %vm269, %v2325, %v2329
      %v2331 = vshrl.u32 %v2060, 16
      %v2333 = vrot.slane %v2331, 4
      %v2334 = vor.u32 %v2333, %v2329
      %v2335 = vrot.slane %v2334, 4
      %v2337 = vshll.u32 %v2061, 16
      %v2339 = vrot.slane %v2337, 5
      %v2340 = vsel %vm269, %v2335, %v2339
      %v2342 = vshrl.u32 %v2062, 16
      %v2344 = vrot.slane %v2342, 4
      %v2345 = vshll.u32 %v2062, 16
      %v2347 = vrot.slane %v2345, 5
      %v2348 = vor.u32 %v2344, %v2347
      %v2349 = vrot.slane %v2348, 4
      %v2351 = vshll.u32 %v2063, 16
      %v2353 = vrot.slane %v2351, 5
      %v2354 = vsel %vm269, %v2349, %v2353
      %v2355 = vshrl.u32 %v2063, 16
      %v2357 = vrot.slane %v2355, 4
      %v2358 = vor.u32 %v2357, %v2353
      %v2359 = vrot.slane %v2358, 4
      %v2361 = vshll.u32 %v2064, 16
      %v2363 = vrot.slane %v2361, 5
      %v2364 = vsel %vm269, %v2359, %v2363
      %v2366 = vshrl.u32 %v2065, 16
      %v2368 = vrot.slane %v2366, 4
      %v2369 = vshll.u32 %v2065, 16
      %v2371 = vrot.slane %v2369, 5
      %v2372 = vor.u32 %v2368, %v2371
      %v2373 = vrot.slane %v2372, 4
      %v2375 = vshll.u32 %v2066, 16
      %v2377 = vrot.slane %v2375, 5
      %v2378 = vsel %vm269, %v2373, %v2377
      %v2379 = vshrl.u32 %v2066, 16
      %v2381 = vrot.slane %v2379, 4
      %v2382 = vor.u32 %v2381, %v2377
      %v2383 = vrot.slane %v2382, 4
      %v2385 = vshll.u32 %v2067, 16
      %v2387 = vrot.slane %v2385, 5
      %v2388 = vsel %vm269, %v2383, %v2387
      %v2390 = vshrl.u32 %v2068, 16
      %v2392 = vrot.slane %v2390, 4
      %v2393 = vshll.u32 %v2068, 16
      %v2395 = vrot.slane %v2393, 5
      %v2396 = vor.u32 %v2392, %v2395
      %v2397 = vrot.slane %v2396, 4
      %v2399 = vshll.u32 %v2069, 16
      %v2401 = vrot.slane %v2399, 5
      %v2402 = vsel %vm269, %v2397, %v2401
      %v2403 = vshrl.u32 %v2069, 16
      %v2405 = vrot.slane %v2403, 4
      %v2406 = vor.u32 %v2405, %v2401
      %v2407 = vrot.slane %v2406, 4
      %v2409 = vshll.u32 %v2070, 16
      %v2411 = vrot.slane %v2409, 5
      %v2412 = vsel %vm269, %v2407, %v2411
      %v2414 = vshrl.u32 %v2071, 16
      %v2416 = vrot.slane %v2414, 4
      %v2417 = vshll.u32 %v2071, 16
      %v2419 = vrot.slane %v2417, 5
      %v2420 = vor.u32 %v2416, %v2419
      %v2421 = vrot.slane %v2420, 4
      %v2423 = vshll.u32 %v2072, 16
      %v2425 = vrot.slane %v2423, 5
      %v2426 = vsel %vm269, %v2421, %v2425
      %v2427 = vshrl.u32 %v2072, 16
      %v2429 = vrot.slane %v2427, 4
      %v2430 = vor.u32 %v2429, %v2425
      %v2431 = vrot.slane %v2430, 4
      %v2433 = vshll.u32 %v2073, 16
      %v2435 = vrot.slane %v2433, 5
      %v2436 = vsel %vm269, %v2431, %v2435
      %v2438 = vshrl.u32 %v2074, 16
      %v2440 = vrot.slane %v2438, 4
      %v2441 = vshll.u32 %v2074, 16
      %v2443 = vrot.slane %v2441, 5
      %v2444 = vor.u32 %v2440, %v2443
      %v2445 = vrot.slane %v2444, 4
      %v2447 = vshll.u32 %v2075, 16
      %v2449 = vrot.slane %v2447, 5
      %v2450 = vsel %vm269, %v2445, %v2449
      %v2451 = vshrl.u32 %v2075, 16
      %v2453 = vrot.slane %v2451, 4
      %v2454 = vor.u32 %v2453, %v2449
      %v2455 = vrot.slane %v2454, 4
      %v2457 = vshll.u32 %v2076, 16
      %v2459 = vrot.slane %v2457, 5
      %v2460 = vsel %vm269, %v2455, %v2459
      %s2461 = scalar_lea.vmem %s1, 8
      %v2462 = vld [vmem:[%s2461] sm:$0x3]
      %v2463 = vunpack.c.l.b16 %v2090
      %v2464 = vunpack.c.l.b16 %v2100
      %v2465 = vunpack.c.l.b16 %v2114
      %v2466 = vunpack.c.l.b16 %v2124
      %v2467 = vunpack.c.l.b16 %v2138
      %v2468 = vunpack.c.l.b16 %v2148
      %v2469 = vunpack.c.l.b16 %v2162
      %v2470 = vunpack.c.l.b16 %v2172
      %v2471 = vunpack.c.l.b16 %v2186
      %v2472 = vunpack.c.l.b16 %v2196
      %v2473 = vunpack.c.l.b16 %v2210
      %v2474 = vunpack.c.l.b16 %v2220
      %v2475 = vunpack.c.l.b16 %v2234
      %v2476 = vunpack.c.l.b16 %v2244
      %v2477 = vunpack.c.l.b16 %v2258
      %v2478 = vunpack.c.l.b16 %v2268
      %v2479 = vunpack.c.l.b16 %v2282
      %v2480 = vunpack.c.l.b16 %v2292
      %v2481 = vunpack.c.l.b16 %v2306
      %v2482 = vunpack.c.l.b16 %v2316
      %v2483 = vunpack.c.l.b16 %v2330
      %v2484 = vunpack.c.l.b16 %v2340
      %v2485 = vunpack.c.l.b16 %v2354
      %v2486 = vunpack.c.l.b16 %v2364
      %v2487 = vunpack.c.l.b16 %v2378
      %v2488 = vunpack.c.l.b16 %v2388
      %v2489 = vunpack.c.l.b16 %v2402
      %v2490 = vunpack.c.l.b16 %v2412
      %v2491 = vunpack.c.l.b16 %v2426
      %v2492 = vunpack.c.l.b16 %v2436
      %v2493 = vunpack.c.l.b16 %v2450
      %v2494 = vunpack.c.l.b16 %v2460
      %v2495 = vpack.c.b16 %v2464, %v2463
      %v2496 = vpack.c.b16 %v2466, %v2465
      %v2497 = vpack.c.b16 %v2468, %v2467
      %v2498 = vpack.c.b16 %v2470, %v2469
      %v2499 = vpack.c.b16 %v2472, %v2471
      %v2500 = vpack.c.b16 %v2474, %v2473
      %v2501 = vpack.c.b16 %v2476, %v2475
      %v2502 = vpack.c.b16 %v2478, %v2477
      %v2503 = vpack.c.b16 %v2480, %v2479
      %v2504 = vpack.c.b16 %v2482, %v2481
      %v2505 = vpack.c.b16 %v2484, %v2483
      %v2506 = vpack.c.b16 %v2486, %v2485
      %v2507 = vpack.c.b16 %v2488, %v2487
      %v2508 = vpack.c.b16 %v2490, %v2489
      %v2509 = vpack.c.b16 %v2492, %v2491
      %v2510 = vpack.c.b16 %v2494, %v2493
      %v2512 = vsel %vm704, %v2495, 0
      %v2515 = vsel %vm704, %v2496, 0
      %v2518 = vsel %vm704, %v2497, 0
      %v2521 = vsel %vm704, %v2498, 0
      %v2524 = vsel %vm704, %v2499, 0
      %v2527 = vsel %vm704, %v2500, 0
      %v2530 = vsel %vm704, %v2501, 0
      %v2533 = vsel %vm704, %v2502, 0
      %v2536 = vsel %vm704, %v2503, 0
      %v2539 = vsel %vm704, %v2504, 0
      %v2542 = vsel %vm704, %v2505, 0
      %v2545 = vsel %vm704, %v2506, 0
      %v2548 = vsel %vm704, %v2507, 0
      %v2551 = vsel %vm704, %v2508, 0
      %v2554 = vsel %vm704, %v2509, 0
      %v2557 = vsel %vm704, %v2510, 0
      %v2560 = vsel %vm753, %v2462, 0
      %2562 = vmatprep.subr.bf16.mxu0 0
      %2563 = vmatpush1.bf16.msra.mxu0 %v2560
      %2564 = vmatprep.subr.bf16.mxu0 0
      %2565 = vmatpush1.bf16.msra.mxu0 0
      %2566 = vmatprep.subr.bf16.mxu0 0
      %2567 = vmatpush1.bf16.msra.mxu0 0
      %2568 = vmatprep.subr.bf16.mxu0 0
      %2569 = vmatpush1.bf16.msra.mxu0 0
      %2570 = vmatprep.subr.bf16.mxu0 0
      %2571 = vmatpush1.bf16.msra.mxu0 0
      %2572 = vmatprep.subr.bf16.mxu0 0
      %2573 = vmatpush1.bf16.msra.mxu0 0
      %2574 = vmatprep.subr.bf16.mxu0 0
      %2575 = vmatpush1.bf16.msra.mxu0 0
      %2576 = vmatprep.subr.bf16.mxu0 0
      %2577 = vmatpush1.bf16.msra.mxu0 0
      %2578 = vmatprep.subr.bf16.mxu0 0
      %2579 = vmatpush1.bf16.msra.mxu0 0
      %2580 = vmatprep.subr.bf16.mxu0 0
      %2581 = vmatpush1.bf16.msra.mxu0 0
      %2582 = vmatprep.subr.bf16.mxu0 0
      %2583 = vmatpush1.bf16.msra.mxu0 0
      %2584 = vmatprep.subr.bf16.mxu0 0
      %2585 = vmatpush1.bf16.msra.mxu0 0
      %2586 = vmatprep.subr.bf16.mxu0 0
      %2587 = vmatpush1.bf16.msra.mxu0 0
      %2588 = vmatprep.subr.bf16.mxu0 0
      %2589 = vmatpush1.bf16.msra.mxu0 0
      %2590 = vmatprep.subr.bf16.mxu0 0
      %2591 = vmatpush1.bf16.msra.mxu0 0
      %2592 = vmatprep.subr.bf16.mxu0 0
      %2593 = vmatpush1.bf16.msra.mxu0 0
      %2594 = vmatprep.mubr.bf16.mxu0 0
      %2595 = vmatmul.mubr.bf16.gmra.mrb[0].mxu0 %v2512
      %v2596 = vpop.f32.mrb[0].mxu0
      %v2597 = vadd.f32 0.0, %v2596
      %v2598 = vpop.f32.mrb[0].mxu0
      %v2599 = vpop.f32.mrb[0].mxu0
      %v2600 = vadd.f32 0.0, %v2599
      %v2601 = vpop.f32.mrb[0].mxu0
      %2602 = vmatprep.mubr.bf16.mxu0 0
      %2603 = vmatmul.mubr.bf16.gmra.mrb[0].mxu0 %v2515
      %v2604 = vpop.f32.mrb[0].mxu0
      %v2605 = vadd.f32 0.0, %v2604
      %v2606 = vpop.f32.mrb[0].mxu0
      %v2607 = vpop.f32.mrb[0].mxu0
      %v2608 = vadd.f32 0.0, %v2607
      %v2609 = vpop.f32.mrb[0].mxu0
      %2610 = vmatprep.mubr.bf16.mxu0 0
      %2611 = vmatmul.mubr.bf16.gmra.mrb[0].mxu0 %v2518
      %v2612 = vpop.f32.mrb[0].mxu0
      %v2613 = vadd.f32 0.0, %v2612
      %v2614 = vpop.f32.mrb[0].mxu0
      %v2615 = vpop.f32.mrb[0].mxu0
      %v2616 = vadd.f32 0.0, %v2615
      %v2617 = vpop.f32.mrb[0].mxu0
      %2618 = vmatprep.mubr.bf16.mxu0 0
      %2619 = vmatmul.mubr.bf16.gmra.mrb[0].mxu0 %v2521
      %v2620 = vpop.f32.mrb[0].mxu0
      %v2621 = vadd.f32 0.0, %v2620
      %v2622 = vpop.f32.mrb[0].mxu0
      %v2623 = vpop.f32.mrb[0].mxu0
      %v2624 = vadd.f32 0.0, %v2623
      %v2625 = vpop.f32.mrb[0].mxu0
      %2626 = vmatprep.mubr.bf16.mxu0 0
      %2627 = vmatmul.mubr.bf16.gmra.mrb[0].mxu0 %v2524
      %v2628 = vpop.f32.mrb[0].mxu0
      %v2629 = vadd.f32 0.0, %v2628
      %v2630 = vpop.f32.mrb[0].mxu0
      %v2631 = vpop.f32.mrb[0].mxu0
      %v2632 = vadd.f32 0.0, %v2631
      %v2633 = vpop.f32.mrb[0].mxu0
      %2634 = vmatprep.mubr.bf16.mxu0 0
      %2635 = vmatmul.mubr.bf16.gmra.mrb[0].mxu0 %v2527
      %v2636 = vpop.f32.mrb[0].mxu0
      %v2637 = vadd.f32 0.0, %v2636
      %v2638 = vpop.f32.mrb[0].mxu0
      %v2639 = vpop.f32.mrb[0].mxu0
      %v2640 = vadd.f32 0.0, %v2639
      %v2641 = vpop.f32.mrb[0].mxu0
      %2642 = vmatprep.mubr.bf16.mxu0 0
      %2643 = vmatmul.mubr.bf16.gmra.mrb[0].mxu0 %v2530
      %v2644 = vpop.f32.mrb[0].mxu0
      %v2645 = vadd.f32 0.0, %v2644
      %v2646 = vpop.f32.mrb[0].mxu0
      %v2647 = vpop.f32.mrb[0].mxu0
      %v2648 = vadd.f32 0.0, %v2647
      %v2649 = vpop.f32.mrb[0].mxu0
      %2650 = vmatprep.mubr.bf16.mxu0 0
      %2651 = vmatmul.mubr.bf16.gmra.mrb[0].mxu0 %v2533
      %v2652 = vpop.f32.mrb[0].mxu0
      %v2653 = vadd.f32 0.0, %v2652
      %v2654 = vpop.f32.mrb[0].mxu0
      %v2655 = vpop.f32.mrb[0].mxu0
      %v2656 = vadd.f32 0.0, %v2655
      %v2657 = vpop.f32.mrb[0].mxu0
      %2658 = vmatprep.mubr.bf16.mxu0 0
      %2659 = vmatmul.mubr.bf16.gmra.mrb[0].mxu0 %v2536
      %v2660 = vpop.f32.mrb[0].mxu0
      %v2661 = vadd.f32 0.0, %v2660
      %v2662 = vpop.f32.mrb[0].mxu0
      %v2663 = vpop.f32.mrb[0].mxu0
      %v2664 = vadd.f32 0.0, %v2663
      %v2665 = vpop.f32.mrb[0].mxu0
      %2666 = vmatprep.mubr.bf16.mxu0 0
      %2667 = vmatmul.mubr.bf16.gmra.mrb[0].mxu0 %v2539
      %v2668 = vpop.f32.mrb[0].mxu0
      %v2669 = vadd.f32 0.0, %v2668
      %v2670 = vpop.f32.mrb[0].mxu0
      %v2671 = vpop.f32.mrb[0].mxu0
      %v2672 = vadd.f32 0.0, %v2671
      %v2673 = vpop.f32.mrb[0].mxu0
      %2674 = vmatprep.mubr.bf16.mxu0 0
      %2675 = vmatmul.mubr.bf16.gmra.mrb[0].mxu0 %v2542
      %v2676 = vpop.f32.mrb[0].mxu0
      %v2677 = vadd.f32 0.0, %v2676
      %v2678 = vpop.f32.mrb[0].mxu0
      %v2679 = vpop.f32.mrb[0].mxu0
      %v2680 = vadd.f32 0.0, %v2679
      %v2681 = vpop.f32.mrb[0].mxu0
      %2682 = vmatprep.mubr.bf16.mxu0 0
      %2683 = vmatmul.mubr.bf16.gmra.mrb[0].mxu0 %v2545
      %v2684 = vpop.f32.mrb[0].mxu0
      %v2685 = vadd.f32 0.0, %v2684
      %v2686 = vpop.f32.mrb[0].mxu0
      %v2687 = vpop.f32.mrb[0].mxu0
      %v2688 = vadd.f32 0.0, %v2687
      %v2689 = vpop.f32.mrb[0].mxu0
      %2690 = vmatprep.mubr.bf16.mxu0 0
      %2691 = vmatmul.mubr.bf16.gmra.mrb[0].mxu0 %v2548
      %v2692 = vpop.f32.mrb[0].mxu0
      %v2693 = vadd.f32 0.0, %v2692
      %v2694 = vpop.f32.mrb[0].mxu0
      %v2695 = vpop.f32.mrb[0].mxu0
      %v2696 = vadd.f32 0.0, %v2695
      %v2697 = vpop.f32.mrb[0].mxu0
      %2698 = vmatprep.mubr.bf16.mxu0 0
      %2699 = vmatmul.mubr.bf16.gmra.mrb[0].mxu0 %v2551
      %v2700 = vpop.f32.mrb[0].mxu0
      %v2701 = vadd.f32 0.0, %v2700
      %v2702 = vpop.f32.mrb[0].mxu0
      %v2703 = vpop.f32.mrb[0].mxu0
      %v2704 = vadd.f32 0.0, %v2703
      %v2705 = vpop.f32.mrb[0].mxu0
      %2706 = vmatprep.mubr.bf16.mxu0 0
      %2707 = vmatmul.mubr.bf16.gmra.mrb[0].mxu0 %v2554
      %v2708 = vpop.f32.mrb[0].mxu0
      %v2709 = vadd.f32 0.0, %v2708
      %v2710 = vpop.f32.mrb[0].mxu0
      %v2711 = vpop.f32.mrb[0].mxu0
      %v2712 = vadd.f32 0.0, %v2711
      %v2713 = vpop.f32.mrb[0].mxu0
      %2714 = vmatprep.mubr.bf16.mxu0 0
      %2715 = vmatmul.mubr.bf16.gmra.mrb[0].mxu0 %v2557
      %v2716 = vpop.f32.mrb[0].mxu0
      %v2717 = vadd.f32 0.0, %v2716
      %v2718 = vpop.f32.mrb[0].mxu0
      %v2719 = vpop.f32.mrb[0].mxu0
      %v2720 = vadd.f32 0.0, %v2719
      %v2721 = vpop.f32.mrb[0].mxu0
      %2722 = vdwg.mxu0
      %v2723 = vadd.f32 %v1997, %v2597
      %v2724 = vadd.f32 %v1998, %v2600
      %v2725 = vadd.f32 %v1999, %v2605
      %v2726 = vadd.f32 %v2000, %v2608
      %v2727 = vadd.f32 %v2001, %v2613
      %v2728 = vadd.f32 %v2002, %v2616
      %v2729 = vadd.f32 %v2003, %v2621
      %v2730 = vadd.f32 %v2004, %v2624
      %v2731 = vadd.f32 %v2005, %v2629
      %v2732 = vadd.f32 %v2006, %v2632
      %v2733 = vadd.f32 %v2007, %v2637
      %v2734 = vadd.f32 %v2008, %v2640
      %v2735 = vadd.f32 %v2009, %v2645
      %v2736 = vadd.f32 %v2010, %v2648
      %v2737 = vadd.f32 %v2011, %v2653
      %v2738 = vadd.f32 %v2012, %v2656
      %v2739 = vadd.f32 %v2013, %v2661
      %v2740 = vadd.f32 %v2014, %v2664
      %v2741 = vadd.f32 %v2015, %v2669
      %v2742 = vadd.f32 %v2016, %v2672
      %v2743 = vadd.f32 %v2017, %v2677
      %v2744 = vadd.f32 %v2018, %v2680
      %v2745 = vadd.f32 %v2019, %v2685
      %v2746 = vadd.f32 %v2020, %v2688
      %v2747 = vadd.f32 %v2021, %v2693
      %v2748 = vadd.f32 %v2022, %v2696
      %v2749 = vadd.f32 %v2023, %v2701
      %v2750 = vadd.f32 %v2024, %v2704
      %v2751 = vadd.f32 %v2025, %v2709
      %v2752 = vadd.f32 %v2026, %v2712
      %v2753 = vadd.f32 %v2027, %v2717
      %v2754 = vadd.f32 %v2028, %v2720
      %v2755 = vld [vmem:[%s1670] sm:$0xe]
      %v2756 = vld [vmem:[%s1670 + $0xc] sm:$0xe]
      %v2757 = vld [vmem:[%s1670 + $0x18] sm:$0xe]
      %v2758 = vld [vmem:[%s1670 + $0x24] sm:$0xe]
      %v2759 = vld [vmem:[%s1670 + $0x30] sm:$0xe]
      %v2760 = vld [vmem:[%s1670 + $0x3c] sm:$0xe]
      %v2761 = vld [vmem:[%s1670 + $0x48] sm:$0xe]
      %v2762 = vld [vmem:[%s1670 + $0x54] sm:$0xe]
      %v2763 = vld [vmem:[%s1670 + $0x60] sm:$0xe]
      %v2764 = vld [vmem:[%s1670 + $0x6c] sm:$0xe]
      %v2765 = vld [vmem:[%s1670 + $0x78] sm:$0xe]
      %v2766 = vld [vmem:[%s1670 + $0x84] sm:$0xe]
      %v2767 = vld [vmem:[%s1670 + $0x90] sm:$0xe]
      %v2768 = vld [vmem:[%s1670 + $0x9c] sm:$0xe]
      %v2769 = vld [vmem:[%s1670 + $0xa8] sm:$0xe]
      %v2770 = vld [vmem:[%s1670 + $0xb4] sm:$0xe]
      %v2819 = vrot.slane %v2755, 5
      %v2820 = vrot.slane %v2819, 4
      %v2821 = vrot.slane %v2030, 5
      %v2822 = vsel %vm1260, %v2820, %v2821
      %v2823 = vrot.slane %v2821, 4
      %v2824 = vrot.slane %v2031, 5
      %v2825 = vsel %vm1260, %v2823, %v2824
      %v2826 = vrot.slane %v2756, 5
      %v2827 = vrot.slane %v2826, 4
      %v2828 = vrot.slane %v2033, 5
      %v2829 = vsel %vm1260, %v2827, %v2828
      %v2830 = vrot.slane %v2828, 4
      %v2831 = vrot.slane %v2034, 5
      %v2832 = vsel %vm1260, %v2830, %v2831
      %v2833 = vrot.slane %v2757, 5
      %v2834 = vrot.slane %v2833, 4
      %v2835 = vrot.slane %v2036, 5
      %v2836 = vsel %vm1260, %v2834, %v2835
      %v2837 = vrot.slane %v2835, 4
      %v2838 = vrot.slane %v2037, 5
      %v2839 = vsel %vm1260, %v2837, %v2838
      %v2840 = vrot.slane %v2758, 5
      %v2841 = vrot.slane %v2840, 4
      %v2842 = vrot.slane %v2039, 5
      %v2843 = vsel %vm1260, %v2841, %v2842
      %v2844 = vrot.slane %v2842, 4
      %v2845 = vrot.slane %v2040, 5
      %v2846 = vsel %vm1260, %v2844, %v2845
      %v2847 = vrot.slane %v2759, 5
      %v2848 = vrot.slane %v2847, 4
      %v2849 = vrot.slane %v2042, 5
      %v2850 = vsel %vm1260, %v2848, %v2849
      %v2851 = vrot.slane %v2849, 4
      %v2852 = vrot.slane %v2043, 5
      %v2853 = vsel %vm1260, %v2851, %v2852
      %v2854 = vrot.slane %v2760, 5
      %v2855 = vrot.slane %v2854, 4
      %v2856 = vrot.slane %v2045, 5
      %v2857 = vsel %vm1260, %v2855, %v2856
      %v2858 = vrot.slane %v2856, 4
      %v2859 = vrot.slane %v2046, 5
      %v2860 = vsel %vm1260, %v2858, %v2859
      %v2861 = vrot.slane %v2761, 5
      %v2862 = vrot.slane %v2861, 4
      %v2863 = vrot.slane %v2048, 5
      %v2864 = vsel %vm1260, %v2862, %v2863
      %v2865 = vrot.slane %v2863, 4
      %v2866 = vrot.slane %v2049, 5
      %v2867 = vsel %vm1260, %v2865, %v2866
      %v2868 = vrot.slane %v2762, 5
      %v2869 = vrot.slane %v2868, 4
      %v2870 = vrot.slane %v2051, 5
      %v2871 = vsel %vm1260, %v2869, %v2870
      %v2872 = vrot.slane %v2870, 4
      %v2873 = vrot.slane %v2052, 5
      %v2874 = vsel %vm1260, %v2872, %v2873
      %v2875 = vrot.slane %v2763, 5
      %v2876 = vrot.slane %v2875, 4
      %v2877 = vrot.slane %v2054, 5
      %v2878 = vsel %vm1260, %v2876, %v2877
      %v2879 = vrot.slane %v2877, 4
      %v2880 = vrot.slane %v2055, 5
      %v2881 = vsel %vm1260, %v2879, %v2880
      %v2882 = vrot.slane %v2764, 5
      %v2883 = vrot.slane %v2882, 4
      %v2884 = vrot.slane %v2057, 5
      %v2885 = vsel %vm1260, %v2883, %v2884
      %v2886 = vrot.slane %v2884, 4
      %v2887 = vrot.slane %v2058, 5
      %v2888 = vsel %vm1260, %v2886, %v2887
      %v2889 = vrot.slane %v2765, 5
      %v2890 = vrot.slane %v2889, 4
      %v2891 = vrot.slane %v2060, 5
      %v2892 = vsel %vm1260, %v2890, %v2891
      %v2893 = vrot.slane %v2891, 4
      %v2894 = vrot.slane %v2061, 5
      %v2895 = vsel %vm1260, %v2893, %v2894
      %v2896 = vrot.slane %v2766, 5
      %v2897 = vrot.slane %v2896, 4
      %v2898 = vrot.slane %v2063, 5
      %v2899 = vsel %vm1260, %v2897, %v2898
      %v2900 = vrot.slane %v2898, 4
      %v2901 = vrot.slane %v2064, 5
      %v2902 = vsel %vm1260, %v2900, %v2901
      %v2903 = vrot.slane %v2767, 5
      %v2904 = vrot.slane %v2903, 4
      %v2905 = vrot.slane %v2066, 5
      %v2906 = vsel %vm1260, %v2904, %v2905
      %v2907 = vrot.slane %v2905, 4
      %v2908 = vrot.slane %v2067, 5
      %v2909 = vsel %vm1260, %v2907, %v2908
      %v2910 = vrot.slane %v2768, 5
      %v2911 = vrot.slane %v2910, 4
      %v2912 = vrot.slane %v2069, 5
      %v2913 = vsel %vm1260, %v2911, %v2912
      %v2914 = vrot.slane %v2912, 4
      %v2915 = vrot.slane %v2070, 5
      %v2916 = vsel %vm1260, %v2914, %v2915
      %v2917 = vrot.slane %v2769, 5
      %v2918 = vrot.slane %v2917, 4
      %v2919 = vrot.slane %v2072, 5
      %v2920 = vsel %vm1260, %v2918, %v2919
      %v2921 = vrot.slane %v2919, 4
      %v2922 = vrot.slane %v2073, 5
      %v2923 = vsel %vm1260, %v2921, %v2922
      %v2924 = vrot.slane %v2770, 5
      %v2925 = vrot.slane %v2924, 4
      %v2926 = vrot.slane %v2075, 5
      %v2927 = vsel %vm1260, %v2925, %v2926
      %v2928 = vrot.slane %v2926, 4
      %v2929 = vrot.slane %v2076, 5
      %v2930 = vsel %vm1260, %v2928, %v2929
      %s2931 = scalar_lea.vmem %s1, 10
      %v2932 = vld [vmem:[%s2931] sm:$0x3]
      %v2933 = vunpack.c.l.b16 %v2822
      %v2934 = vunpack.c.l.b16 %v2825
      %v2935 = vunpack.c.l.b16 %v2829
      %v2936 = vunpack.c.l.b16 %v2832
      %v2937 = vunpack.c.l.b16 %v2836
      %v2938 = vunpack.c.l.b16 %v2839
      %v2939 = vunpack.c.l.b16 %v2843
      %v2940 = vunpack.c.l.b16 %v2846
      %v2941 = vunpack.c.l.b16 %v2850
      %v2942 = vunpack.c.l.b16 %v2853
      %v2943 = vunpack.c.l.b16 %v2857
      %v2944 = vunpack.c.l.b16 %v2860
      %v2945 = vunpack.c.l.b16 %v2864
      %v2946 = vunpack.c.l.b16 %v2867
      %v2947 = vunpack.c.l.b16 %v2871
      %v2948 = vunpack.c.l.b16 %v2874
      %v2949 = vunpack.c.l.b16 %v2878
      %v2950 = vunpack.c.l.b16 %v2881
      %v2951 = vunpack.c.l.b16 %v2885
      %v2952 = vunpack.c.l.b16 %v2888
      %v2953 = vunpack.c.l.b16 %v2892
      %v2954 = vunpack.c.l.b16 %v2895
      %v2955 = vunpack.c.l.b16 %v2899
      %v2956 = vunpack.c.l.b16 %v2902
      %v2957 = vunpack.c.l.b16 %v2906
      %v2958 = vunpack.c.l.b16 %v2909
      %v2959 = vunpack.c.l.b16 %v2913
      %v2960 = vunpack.c.l.b16 %v2916
      %v2961 = vunpack.c.l.b16 %v2920
      %v2962 = vunpack.c.l.b16 %v2923
      %v2963 = vunpack.c.l.b16 %v2927
      %v2964 = vunpack.c.l.b16 %v2930
      %v2965 = vpack.c.b16 %v2934, %v2933
      %v2966 = vpack.c.b16 %v2936, %v2935
      %v2967 = vpack.c.b16 %v2938, %v2937
      %v2968 = vpack.c.b16 %v2940, %v2939
      %v2969 = vpack.c.b16 %v2942, %v2941
      %v2970 = vpack.c.b16 %v2944, %v2943
      %v2971 = vpack.c.b16 %v2946, %v2945
      %v2972 = vpack.c.b16 %v2948, %v2947
      %v2973 = vpack.c.b16 %v2950, %v2949
      %v2974 = vpack.c.b16 %v2952, %v2951
      %v2975 = vpack.c.b16 %v2954, %v2953
      %v2976 = vpack.c.b16 %v2956, %v2955
      %v2977 = vpack.c.b16 %v2958, %v2957
      %v2978 = vpack.c.b16 %v2960, %v2959
      %v2979 = vpack.c.b16 %v2962, %v2961
      %v2980 = vpack.c.b16 %v2964, %v2963
      %v2982 = vsel %vm704, %v2965, 0
      %v2985 = vsel %vm704, %v2966, 0
      %v2988 = vsel %vm704, %v2967, 0
      %v2991 = vsel %vm704, %v2968, 0
      %v2994 = vsel %vm704, %v2969, 0
      %v2997 = vsel %vm704, %v2970, 0
      %v3000 = vsel %vm704, %v2971, 0
      %v3003 = vsel %vm704, %v2972, 0
      %v3006 = vsel %vm704, %v2973, 0
      %v3009 = vsel %vm704, %v2974, 0
      %v3012 = vsel %vm704, %v2975, 0
      %v3015 = vsel %vm704, %v2976, 0
      %v3018 = vsel %vm704, %v2977, 0
      %v3021 = vsel %vm704, %v2978, 0
      %v3024 = vsel %vm704, %v2979, 0
      %v3027 = vsel %vm704, %v2980, 0
      %v3030 = vsel %vm753, %v2932, 0
      %3032 = vmatprep.subr.bf16.mxu0 0
      %3033 = vmatpush1.bf16.msra.mxu0 %v3030
      %3034 = vmatprep.subr.bf16.mxu0 0
      %3035 = vmatpush1.bf16.msra.mxu0 0
      %3036 = vmatprep.subr.bf16.mxu0 0
      %3037 = vmatpush1.bf16.msra.mxu0 0
      %3038 = vmatprep.subr.bf16.mxu0 0
      %3039 = vmatpush1.bf16.msra.mxu0 0
      %3040 = vmatprep.subr.bf16.mxu0 0
      %3041 = vmatpush1.bf16.msra.mxu0 0
      %3042 = vmatprep.subr.bf16.mxu0 0
      %3043 = vmatpush1.bf16.msra.mxu0 0
      %3044 = vmatprep.subr.bf16.mxu0 0
      %3045 = vmatpush1.bf16.msra.mxu0 0
      %3046 = vmatprep.subr.bf16.mxu0 0
      %3047 = vmatpush1.bf16.msra.mxu0 0
      %3048 = vmatprep.subr.bf16.mxu0 0
      %3049 = vmatpush1.bf16.msra.mxu0 0
      %3050 = vmatprep.subr.bf16.mxu0 0
      %3051 = vmatpush1.bf16.msra.mxu0 0
      %3052 = vmatprep.subr.bf16.mxu0 0
      %3053 = vmatpush1.bf16.msra.mxu0 0
      %3054 = vmatprep.subr.bf16.mxu0 0
      %3055 = vmatpush1.bf16.msra.mxu0 0
      %3056 = vmatprep.subr.bf16.mxu0 0
      %3057 = vmatpush1.bf16.msra.mxu0 0
      %3058 = vmatprep.subr.bf16.mxu0 0
      %3059 = vmatpush1.bf16.msra.mxu0 0
      %3060 = vmatprep.subr.bf16.mxu0 0
      %3061 = vmatpush1.bf16.msra.mxu0 0
      %3062 = vmatprep.subr.bf16.mxu0 0
      %3063 = vmatpush1.bf16.msra.mxu0 0
      %3064 = vmatprep.mubr.bf16.mxu0 0
      %3065 = vmatmul.mubr.bf16.gmra.mrb[0].mxu0 %v2982
      %v3066 = vpop.f32.mrb[0].mxu0
      %v3067 = vadd.f32 0.0, %v3066
      %v3068 = vpop.f32.mrb[0].mxu0
      %v3069 = vpop.f32.mrb[0].mxu0
      %v3070 = vadd.f32 0.0, %v3069
      %v3071 = vpop.f32.mrb[0].mxu0
      %3072 = vmatprep.mubr.bf16.mxu0 0
      %3073 = vmatmul.mubr.bf16.gmra.mrb[0].mxu0 %v2985
      %v3074 = vpop.f32.mrb[0].mxu0
      %v3075 = vadd.f32 0.0, %v3074
      %v3076 = vpop.f32.mrb[0].mxu0
      %v3077 = vpop.f32.mrb[0].mxu0
      %v3078 = vadd.f32 0.0, %v3077
      %v3079 = vpop.f32.mrb[0].mxu0
      %3080 = vmatprep.mubr.bf16.mxu0 0
      %3081 = vmatmul.mubr.bf16.gmra.mrb[0].mxu0 %v2988
      %v3082 = vpop.f32.mrb[0].mxu0
      %v3083 = vadd.f32 0.0, %v3082
      %v3084 = vpop.f32.mrb[0].mxu0
      %v3085 = vpop.f32.mrb[0].mxu0
      %v3086 = vadd.f32 0.0, %v3085
      %v3087 = vpop.f32.mrb[0].mxu0
      %3088 = vmatprep.mubr.bf16.mxu0 0
      %3089 = vmatmul.mubr.bf16.gmra.mrb[0].mxu0 %v2991
      %v3090 = vpop.f32.mrb[0].mxu0
      %v3091 = vadd.f32 0.0, %v3090
      %v3092 = vpop.f32.mrb[0].mxu0
      %v3093 = vpop.f32.mrb[0].mxu0
      %v3094 = vadd.f32 0.0, %v3093
      %v3095 = vpop.f32.mrb[0].mxu0
      %3096 = vmatprep.mubr.bf16.mxu0 0
      %3097 = vmatmul.mubr.bf16.gmra.mrb[0].mxu0 %v2994
      %v3098 = vpop.f32.mrb[0].mxu0
      %v3099 = vadd.f32 0.0, %v3098
      %v3100 = vpop.f32.mrb[0].mxu0
      %v3101 = vpop.f32.mrb[0].mxu0
      %v3102 = vadd.f32 0.0, %v3101
      %v3103 = vpop.f32.mrb[0].mxu0
      %3104 = vmatprep.mubr.bf16.mxu0 0
      %3105 = vmatmul.mubr.bf16.gmra.mrb[0].mxu0 %v2997
      %v3106 = vpop.f32.mrb[0].mxu0
      %v3107 = vadd.f32 0.0, %v3106
      %v3108 = vpop.f32.mrb[0].mxu0
      %v3109 = vpop.f32.mrb[0].mxu0
      %v3110 = vadd.f32 0.0, %v3109
      %v3111 = vpop.f32.mrb[0].mxu0
      %3112 = vmatprep.mubr.bf16.mxu0 0
      %3113 = vmatmul.mubr.bf16.gmra.mrb[0].mxu0 %v3000
      %v3114 = vpop.f32.mrb[0].mxu0
      %v3115 = vadd.f32 0.0, %v3114
      %v3116 = vpop.f32.mrb[0].mxu0
      %v3117 = vpop.f32.mrb[0].mxu0
      %v3118 = vadd.f32 0.0, %v3117
      %v3119 = vpop.f32.mrb[0].mxu0
      %3120 = vmatprep.mubr.bf16.mxu0 0
      %3121 = vmatmul.mubr.bf16.gmra.mrb[0].mxu0 %v3003
      %v3122 = vpop.f32.mrb[0].mxu0
      %v3123 = vadd.f32 0.0, %v3122
      %v3124 = vpop.f32.mrb[0].mxu0
      %v3125 = vpop.f32.mrb[0].mxu0
      %v3126 = vadd.f32 0.0, %v3125
      %v3127 = vpop.f32.mrb[0].mxu0
      %3128 = vmatprep.mubr.bf16.mxu0 0
      %3129 = vmatmul.mubr.bf16.gmra.mrb[0].mxu0 %v3006
      %v3130 = vpop.f32.mrb[0].mxu0
      %v3131 = vadd.f32 0.0, %v3130
      %v3132 = vpop.f32.mrb[0].mxu0
      %v3133 = vpop.f32.mrb[0].mxu0
      %v3134 = vadd.f32 0.0, %v3133
      %v3135 = vpop.f32.mrb[0].mxu0
      %3136 = vmatprep.mubr.bf16.mxu0 0
      %3137 = vmatmul.mubr.bf16.gmra.mrb[0].mxu0 %v3009
      %v3138 = vpop.f32.mrb[0].mxu0
      %v3139 = vadd.f32 0.0, %v3138
      %v3140 = vpop.f32.mrb[0].mxu0
      %v3141 = vpop.f32.mrb[0].mxu0
      %v3142 = vadd.f32 0.0, %v3141
      %v3143 = vpop.f32.mrb[0].mxu0
      %3144 = vmatprep.mubr.bf16.mxu0 0
      %3145 = vmatmul.mubr.bf16.gmra.mrb[0].mxu0 %v3012
      %v3146 = vpop.f32.mrb[0].mxu0
      %v3147 = vadd.f32 0.0, %v3146
      %v3148 = vpop.f32.mrb[0].mxu0
      %v3149 = vpop.f32.mrb[0].mxu0
      %v3150 = vadd.f32 0.0, %v3149
      %v3151 = vpop.f32.mrb[0].mxu0
      %3152 = vmatprep.mubr.bf16.mxu0 0
      %3153 = vmatmul.mubr.bf16.gmra.mrb[0].mxu0 %v3015
      %v3154 = vpop.f32.mrb[0].mxu0
      %v3155 = vadd.f32 0.0, %v3154
      %v3156 = vpop.f32.mrb[0].mxu0
      %v3157 = vpop.f32.mrb[0].mxu0
      %v3158 = vadd.f32 0.0, %v3157
      %v3159 = vpop.f32.mrb[0].mxu0
      %3160 = vmatprep.mubr.bf16.mxu0 0
      %3161 = vmatmul.mubr.bf16.gmra.mrb[0].mxu0 %v3018
      %v3162 = vpop.f32.mrb[0].mxu0
      %v3163 = vadd.f32 0.0, %v3162
      %v3164 = vpop.f32.mrb[0].mxu0
      %v3165 = vpop.f32.mrb[0].mxu0
      %v3166 = vadd.f32 0.0, %v3165
      %v3167 = vpop.f32.mrb[0].mxu0
      %3168 = vmatprep.mubr.bf16.mxu0 0
      %3169 = vmatmul.mubr.bf16.gmra.mrb[0].mxu0 %v3021
      %v3170 = vpop.f32.mrb[0].mxu0
      %v3171 = vadd.f32 0.0, %v3170
      %v3172 = vpop.f32.mrb[0].mxu0
      %v3173 = vpop.f32.mrb[0].mxu0
      %v3174 = vadd.f32 0.0, %v3173
      %v3175 = vpop.f32.mrb[0].mxu0
      %3176 = vmatprep.mubr.bf16.mxu0 0
      %3177 = vmatmul.mubr.bf16.gmra.mrb[0].mxu0 %v3024
      %v3178 = vpop.f32.mrb[0].mxu0
      %v3179 = vadd.f32 0.0, %v3178
      %v3180 = vpop.f32.mrb[0].mxu0
      %v3181 = vpop.f32.mrb[0].mxu0
      %v3182 = vadd.f32 0.0, %v3181
      %v3183 = vpop.f32.mrb[0].mxu0
      %3184 = vmatprep.mubr.bf16.mxu0 0
      %3185 = vmatmul.mubr.bf16.gmra.mrb[0].mxu0 %v3027
      %v3186 = vpop.f32.mrb[0].mxu0
      %v3187 = vadd.f32 0.0, %v3186
      %v3188 = vpop.f32.mrb[0].mxu0
      %v3189 = vpop.f32.mrb[0].mxu0
      %v3190 = vadd.f32 0.0, %v3189
      %v3191 = vpop.f32.mrb[0].mxu0
      %3192 = vdwg.mxu0
      %v3193 = vadd.f32 %v2723, %v3067
      %v3194 = vadd.f32 %v2724, %v3070
      %v3195 = vadd.f32 %v2725, %v3075
      %v3196 = vadd.f32 %v2726, %v3078
      %v3197 = vadd.f32 %v2727, %v3083
      %v3198 = vadd.f32 %v2728, %v3086
      %v3199 = vadd.f32 %v2729, %v3091
      %v3200 = vadd.f32 %v2730, %v3094
      %v3201 = vadd.f32 %v2731, %v3099
      %v3202 = vadd.f32 %v2732, %v3102
      %v3203 = vadd.f32 %v2733, %v3107
      %v3204 = vadd.f32 %v2734, %v3110
      %v3205 = vadd.f32 %v2735, %v3115
      %v3206 = vadd.f32 %v2736, %v3118
      %v3207 = vadd.f32 %v2737, %v3123
      %v3208 = vadd.f32 %v2738, %v3126
      %v3209 = vadd.f32 %v2739, %v3131
      %v3210 = vadd.f32 %v2740, %v3134
      %v3211 = vadd.f32 %v2741, %v3139
      %v3212 = vadd.f32 %v2742, %v3142
      %v3213 = vadd.f32 %v2743, %v3147
      %v3214 = vadd.f32 %v2744, %v3150
      %v3215 = vadd.f32 %v2745, %v3155
      %v3216 = vadd.f32 %v2746, %v3158
      %v3217 = vadd.f32 %v2747, %v3163
      %v3218 = vadd.f32 %v2748, %v3166
      %v3219 = vadd.f32 %v2749, %v3171
      %v3220 = vadd.f32 %v2750, %v3174
      %v3221 = vadd.f32 %v2751, %v3179
      %v3222 = vadd.f32 %v2752, %v3182
      %v3223 = vadd.f32 %v2753, %v3187
      %v3224 = vadd.f32 %v2754, %v3190
      %s3225 = sadd.s32 %s214, 2
      %s3226 = smul.u32 %s3225, 3
      %s3227 = smul.addr %s3226, 4
      %s3228 = scalar_lea.vmem %s195, %s3227
      %v3229 = vld [vmem:[%s3228] sm:$0xf]
      %v3230 = vld [vmem:[%s3228 + $0x4] sm:$0xf]
      %v3231 = vld [vmem:[%s3228 + $0xc] sm:$0xf]
      %v3232 = vld [vmem:[%s3228 + $0x10] sm:$0xf]
      %v3233 = vld [vmem:[%s3228 + $0x18] sm:$0xf]
      %v3234 = vld [vmem:[%s3228 + $0x1c] sm:$0xf]
      %v3235 = vld [vmem:[%s3228 + $0x24] sm:$0xf]
      %v3236 = vld [vmem:[%s3228 + $0x28] sm:$0xf]
      %v3237 = vld [vmem:[%s3228 + $0x30] sm:$0xf]
      %v3238 = vld [vmem:[%s3228 + $0x34] sm:$0xf]
      %v3239 = vld [vmem:[%s3228 + $0x3c] sm:$0xf]
      %v3240 = vld [vmem:[%s3228 + $0x40] sm:$0xf]
      %v3241 = vld [vmem:[%s3228 + $0x48] sm:$0xf]
      %v3242 = vld [vmem:[%s3228 + $0x4c] sm:$0xf]
      %v3243 = vld [vmem:[%s3228 + $0x54] sm:$0xf]
      %v3244 = vld [vmem:[%s3228 + $0x58] sm:$0xf]
      %v3245 = vld [vmem:[%s3228 + $0x60] sm:$0xf]
      %v3246 = vld [vmem:[%s3228 + $0x64] sm:$0xf]
      %v3247 = vld [vmem:[%s3228 + $0x6c] sm:$0xf]
      %v3248 = vld [vmem:[%s3228 + $0x70] sm:$0xf]
      %v3249 = vld [vmem:[%s3228 + $0x78] sm:$0xf]
      %v3250 = vld [vmem:[%s3228 + $0x7c] sm:$0xf]
      %v3251 = vld [vmem:[%s3228 + $0x84] sm:$0xf]
      %v3252 = vld [vmem:[%s3228 + $0x88] sm:$0xf]
      %v3253 = vld [vmem:[%s3228 + $0x90] sm:$0xf]
      %v3254 = vld [vmem:[%s3228 + $0x94] sm:$0xf]
      %v3255 = vld [vmem:[%s3228 + $0x9c] sm:$0xf]
      %v3256 = vld [vmem:[%s3228 + $0xa0] sm:$0xf]
      %v3257 = vld [vmem:[%s3228 + $0xa8] sm:$0xf]
      %v3258 = vld [vmem:[%s3228 + $0xac] sm:$0xf]
      %v3259 = vld [vmem:[%s3228 + $0xb4] sm:$0xf]
      %v3260 = vld [vmem:[%s3228 + $0xb8] sm:$0xf]
      %s3261 = scalar_lea.vmem %s1, 12
      %v3262 = vld [vmem:[%s3261] sm:$0x3]
      %v3295 = vunpack.c.l.b16 %v3229
      %v3296 = vunpack.c.l.b16 %v3230
      %v3297 = vunpack.c.l.b16 %v3231
      %v3298 = vunpack.c.l.b16 %v3232
      %v3299 = vunpack.c.l.b16 %v3233
      %v3300 = vunpack.c.l.b16 %v3234
      %v3301 = vunpack.c.l.b16 %v3235
      %v3302 = vunpack.c.l.b16 %v3236
      %v3303 = vunpack.c.l.b16 %v3237
      %v3304 = vunpack.c.l.b16 %v3238
      %v3305 = vunpack.c.l.b16 %v3239
      %v3306 = vunpack.c.l.b16 %v3240
      %v3307 = vunpack.c.l.b16 %v3241
      %v3308 = vunpack.c.l.b16 %v3242
      %v3309 = vunpack.c.l.b16 %v3243
      %v3310 = vunpack.c.l.b16 %v3244
      %v3311 = vunpack.c.l.b16 %v3245
      %v3312 = vunpack.c.l.b16 %v3246
      %v3313 = vunpack.c.l.b16 %v3247
      %v3314 = vunpack.c.l.b16 %v3248
      %v3315 = vunpack.c.l.b16 %v3249
      %v3316 = vunpack.c.l.b16 %v3250
      %v3317 = vunpack.c.l.b16 %v3251
      %v3318 = vunpack.c.l.b16 %v3252
      %v3319 = vunpack.c.l.b16 %v3253
      %v3320 = vunpack.c.l.b16 %v3254
      %v3321 = vunpack.c.l.b16 %v3255
      %v3322 = vunpack.c.l.b16 %v3256
      %v3323 = vunpack.c.l.b16 %v3257
      %v3324 = vunpack.c.l.b16 %v3258
      %v3325 = vunpack.c.l.b16 %v3259
      %v3326 = vunpack.c.l.b16 %v3260
      %v3327 = vpack.c.b16 %v3296, %v3295
      %v3328 = vpack.c.b16 %v3298, %v3297
      %v3329 = vpack.c.b16 %v3300, %v3299
      %v3330 = vpack.c.b16 %v3302, %v3301
      %v3331 = vpack.c.b16 %v3304, %v3303
      %v3332 = vpack.c.b16 %v3306, %v3305
      %v3333 = vpack.c.b16 %v3308, %v3307
      %v3334 = vpack.c.b16 %v3310, %v3309
      %v3335 = vpack.c.b16 %v3312, %v3311
      %v3336 = vpack.c.b16 %v3314, %v3313
      %v3337 = vpack.c.b16 %v3316, %v3315
      %v3338 = vpack.c.b16 %v3318, %v3317
      %v3339 = vpack.c.b16 %v3320, %v3319
      %v3340 = vpack.c.b16 %v3322, %v3321
      %v3341 = vpack.c.b16 %v3324, %v3323
      %v3342 = vpack.c.b16 %v3326, %v3325
      %v3344 = vsel %vm704, %v3327, 0
      %v3347 = vsel %vm704, %v3328, 0
      %v3350 = vsel %vm704, %v3329, 0
      %v3353 = vsel %vm704, %v3330, 0
      %v3356 = vsel %vm704, %v3331, 0
      %v3359 = vsel %vm704, %v3332, 0
      %v3362 = vsel %vm704, %v3333, 0
      %v3365 = vsel %vm704, %v3334, 0
      %v3368 = vsel %vm704, %v3335, 0
      %v3371 = vsel %vm704, %v3336, 0
      %v3374 = vsel %vm704, %v3337, 0
      %v3377 = vsel %vm704, %v3338, 0
      %v3380 = vsel %vm704, %v3339, 0
      %v3383 = vsel %vm704, %v3340, 0
      %v3386 = vsel %vm704, %v3341, 0
      %v3389 = vsel %vm704, %v3342, 0
      %v3392 = vsel %vm753, %v3262, 0
      %3394 = vmatprep.subr.bf16.mxu0 0
      %3395 = vmatpush1.bf16.msra.mxu0 %v3392
      %3396 = vmatprep.subr.bf16.mxu0 0
      %3397 = vmatpush1.bf16.msra.mxu0 0
      %3398 = vmatprep.subr.bf16.mxu0 0
      %3399 = vmatpush1.bf16.msra.mxu0 0
      %3400 = vmatprep.subr.bf16.mxu0 0
      %3401 = vmatpush1.bf16.msra.mxu0 0
      %3402 = vmatprep.subr.bf16.mxu0 0
      %3403 = vmatpush1.bf16.msra.mxu0 0
      %3404 = vmatprep.subr.bf16.mxu0 0
      %3405 = vmatpush1.bf16.msra.mxu0 0
      %3406 = vmatprep.subr.bf16.mxu0 0
      %3407 = vmatpush1.bf16.msra.mxu0 0
      %3408 = vmatprep.subr.bf16.mxu0 0
      %3409 = vmatpush1.bf16.msra.mxu0 0
      %3410 = vmatprep.subr.bf16.mxu0 0
      %3411 = vmatpush1.bf16.msra.mxu0 0
      %3412 = vmatprep.subr.bf16.mxu0 0
      %3413 = vmatpush1.bf16.msra.mxu0 0
      %3414 = vmatprep.subr.bf16.mxu0 0
      %3415 = vmatpush1.bf16.msra.mxu0 0
      %3416 = vmatprep.subr.bf16.mxu0 0
      %3417 = vmatpush1.bf16.msra.mxu0 0
      %3418 = vmatprep.subr.bf16.mxu0 0
      %3419 = vmatpush1.bf16.msra.mxu0 0
      %3420 = vmatprep.subr.bf16.mxu0 0
      %3421 = vmatpush1.bf16.msra.mxu0 0
      %3422 = vmatprep.subr.bf16.mxu0 0
      %3423 = vmatpush1.bf16.msra.mxu0 0
      %3424 = vmatprep.subr.bf16.mxu0 0
      %3425 = vmatpush1.bf16.msra.mxu0 0
      %3426 = vmatprep.mubr.bf16.mxu0 0
      %3427 = vmatmul.mubr.bf16.gmra.mrb[0].mxu0 %v3344
      %v3428 = vpop.f32.mrb[0].mxu0
      %v3429 = vadd.f32 0.0, %v3428
      %v3430 = vpop.f32.mrb[0].mxu0
      %v3431 = vpop.f32.mrb[0].mxu0
      %v3432 = vadd.f32 0.0, %v3431
      %v3433 = vpop.f32.mrb[0].mxu0
      %3434 = vmatprep.mubr.bf16.mxu0 0
      %3435 = vmatmul.mubr.bf16.gmra.mrb[0].mxu0 %v3347
      %v3436 = vpop.f32.mrb[0].mxu0
      %v3437 = vadd.f32 0.0, %v3436
      %v3438 = vpop.f32.mrb[0].mxu0
      %v3439 = vpop.f32.mrb[0].mxu0
      %v3440 = vadd.f32 0.0, %v3439
      %v3441 = vpop.f32.mrb[0].mxu0
      %3442 = vmatprep.mubr.bf16.mxu0 0
      %3443 = vmatmul.mubr.bf16.gmra.mrb[0].mxu0 %v3350
      %v3444 = vpop.f32.mrb[0].mxu0
      %v3445 = vadd.f32 0.0, %v3444
      %v3446 = vpop.f32.mrb[0].mxu0
      %v3447 = vpop.f32.mrb[0].mxu0
      %v3448 = vadd.f32 0.0, %v3447
      %v3449 = vpop.f32.mrb[0].mxu0
      %3450 = vmatprep.mubr.bf16.mxu0 0
      %3451 = vmatmul.mubr.bf16.gmra.mrb[0].mxu0 %v3353
      %v3452 = vpop.f32.mrb[0].mxu0
      %v3453 = vadd.f32 0.0, %v3452
      %v3454 = vpop.f32.mrb[0].mxu0
      %v3455 = vpop.f32.mrb[0].mxu0
      %v3456 = vadd.f32 0.0, %v3455
      %v3457 = vpop.f32.mrb[0].mxu0
      %3458 = vmatprep.mubr.bf16.mxu0 0
      %3459 = vmatmul.mubr.bf16.gmra.mrb[0].mxu0 %v3356
      %v3460 = vpop.f32.mrb[0].mxu0
      %v3461 = vadd.f32 0.0, %v3460
      %v3462 = vpop.f32.mrb[0].mxu0
      %v3463 = vpop.f32.mrb[0].mxu0
      %v3464 = vadd.f32 0.0, %v3463
      %v3465 = vpop.f32.mrb[0].mxu0
      %3466 = vmatprep.mubr.bf16.mxu0 0
      %3467 = vmatmul.mubr.bf16.gmra.mrb[0].mxu0 %v3359
      %v3468 = vpop.f32.mrb[0].mxu0
      %v3469 = vadd.f32 0.0, %v3468
      %v3470 = vpop.f32.mrb[0].mxu0
      %v3471 = vpop.f32.mrb[0].mxu0
      %v3472 = vadd.f32 0.0, %v3471
      %v3473 = vpop.f32.mrb[0].mxu0
      %3474 = vmatprep.mubr.bf16.mxu0 0
      %3475 = vmatmul.mubr.bf16.gmra.mrb[0].mxu0 %v3362
      %v3476 = vpop.f32.mrb[0].mxu0
      %v3477 = vadd.f32 0.0, %v3476
      %v3478 = vpop.f32.mrb[0].mxu0
      %v3479 = vpop.f32.mrb[0].mxu0
      %v3480 = vadd.f32 0.0, %v3479
      %v3481 = vpop.f32.mrb[0].mxu0
      %3482 = vmatprep.mubr.bf16.mxu0 0
      %3483 = vmatmul.mubr.bf16.gmra.mrb[0].mxu0 %v3365
      %v3484 = vpop.f32.mrb[0].mxu0
      %v3485 = vadd.f32 0.0, %v3484
      %v3486 = vpop.f32.mrb[0].mxu0
      %v3487 = vpop.f32.mrb[0].mxu0
      %v3488 = vadd.f32 0.0, %v3487
      %v3489 = vpop.f32.mrb[0].mxu0
      %3490 = vmatprep.mubr.bf16.mxu0 0
      %3491 = vmatmul.mubr.bf16.gmra.mrb[0].mxu0 %v3368
      %v3492 = vpop.f32.mrb[0].mxu0
      %v3493 = vadd.f32 0.0, %v3492
      %v3494 = vpop.f32.mrb[0].mxu0
      %v3495 = vpop.f32.mrb[0].mxu0
      %v3496 = vadd.f32 0.0, %v3495
      %v3497 = vpop.f32.mrb[0].mxu0
      %3498 = vmatprep.mubr.bf16.mxu0 0
      %3499 = vmatmul.mubr.bf16.gmra.mrb[0].mxu0 %v3371
      %v3500 = vpop.f32.mrb[0].mxu0
      %v3501 = vadd.f32 0.0, %v3500
      %v3502 = vpop.f32.mrb[0].mxu0
      %v3503 = vpop.f32.mrb[0].mxu0
      %v3504 = vadd.f32 0.0, %v3503
      %v3505 = vpop.f32.mrb[0].mxu0
      %3506 = vmatprep.mubr.bf16.mxu0 0
      %3507 = vmatmul.mubr.bf16.gmra.mrb[0].mxu0 %v3374
      %v3508 = vpop.f32.mrb[0].mxu0
      %v3509 = vadd.f32 0.0, %v3508
      %v3510 = vpop.f32.mrb[0].mxu0
      %v3511 = vpop.f32.mrb[0].mxu0
      %v3512 = vadd.f32 0.0, %v3511
      %v3513 = vpop.f32.mrb[0].mxu0
      %3514 = vmatprep.mubr.bf16.mxu0 0
      %3515 = vmatmul.mubr.bf16.gmra.mrb[0].mxu0 %v3377
      %v3516 = vpop.f32.mrb[0].mxu0
      %v3517 = vadd.f32 0.0, %v3516
      %v3518 = vpop.f32.mrb[0].mxu0
      %v3519 = vpop.f32.mrb[0].mxu0
      %v3520 = vadd.f32 0.0, %v3519
      %v3521 = vpop.f32.mrb[0].mxu0
      %3522 = vmatprep.mubr.bf16.mxu0 0
      %3523 = vmatmul.mubr.bf16.gmra.mrb[0].mxu0 %v3380
      %v3524 = vpop.f32.mrb[0].mxu0
      %v3525 = vadd.f32 0.0, %v3524
      %v3526 = vpop.f32.mrb[0].mxu0
      %v3527 = vpop.f32.mrb[0].mxu0
      %v3528 = vadd.f32 0.0, %v3527
      %v3529 = vpop.f32.mrb[0].mxu0
      %3530 = vmatprep.mubr.bf16.mxu0 0
      %3531 = vmatmul.mubr.bf16.gmra.mrb[0].mxu0 %v3383
      %v3532 = vpop.f32.mrb[0].mxu0
      %v3533 = vadd.f32 0.0, %v3532
      %v3534 = vpop.f32.mrb[0].mxu0
      %v3535 = vpop.f32.mrb[0].mxu0
      %v3536 = vadd.f32 0.0, %v3535
      %v3537 = vpop.f32.mrb[0].mxu0
      %3538 = vmatprep.mubr.bf16.mxu0 0
      %3539 = vmatmul.mubr.bf16.gmra.mrb[0].mxu0 %v3386
      %v3540 = vpop.f32.mrb[0].mxu0
      %v3541 = vadd.f32 0.0, %v3540
      %v3542 = vpop.f32.mrb[0].mxu0
      %v3543 = vpop.f32.mrb[0].mxu0
      %v3544 = vadd.f32 0.0, %v3543
      %v3545 = vpop.f32.mrb[0].mxu0
      %3546 = vmatprep.mubr.bf16.mxu0 0
      %3547 = vmatmul.mubr.bf16.gmra.mrb[0].mxu0 %v3389
      %v3548 = vpop.f32.mrb[0].mxu0
      %v3549 = vadd.f32 0.0, %v3548
      %v3550 = vpop.f32.mrb[0].mxu0
      %v3551 = vpop.f32.mrb[0].mxu0
      %v3552 = vadd.f32 0.0, %v3551
      %v3553 = vpop.f32.mrb[0].mxu0
      %3554 = vdwg.mxu0
      %v3555 = vadd.f32 %v3193, %v3429
      %v3556 = vadd.f32 %v3194, %v3432
      %v3557 = vadd.f32 %v3195, %v3437
      %v3558 = vadd.f32 %v3196, %v3440
      %v3559 = vadd.f32 %v3197, %v3445
      %v3560 = vadd.f32 %v3198, %v3448
      %v3561 = vadd.f32 %v3199, %v3453
      %v3562 = vadd.f32 %v3200, %v3456
      %v3563 = vadd.f32 %v3201, %v3461
      %v3564 = vadd.f32 %v3202, %v3464
      %v3565 = vadd.f32 %v3203, %v3469
      %v3566 = vadd.f32 %v3204, %v3472
      %v3567 = vadd.f32 %v3205, %v3477
      %v3568 = vadd.f32 %v3206, %v3480
      %v3569 = vadd.f32 %v3207, %v3485
      %v3570 = vadd.f32 %v3208, %v3488
      %v3571 = vadd.f32 %v3209, %v3493
      %v3572 = vadd.f32 %v3210, %v3496
      %v3573 = vadd.f32 %v3211, %v3501
      %v3574 = vadd.f32 %v3212, %v3504
      %v3575 = vadd.f32 %v3213, %v3509
      %v3576 = vadd.f32 %v3214, %v3512
      %v3577 = vadd.f32 %v3215, %v3517
      %v3578 = vadd.f32 %v3216, %v3520
      %v3579 = vadd.f32 %v3217, %v3525
      %v3580 = vadd.f32 %v3218, %v3528
      %v3581 = vadd.f32 %v3219, %v3533
      %v3582 = vadd.f32 %v3220, %v3536
      %v3583 = vadd.f32 %v3221, %v3541
      %v3584 = vadd.f32 %v3222, %v3544
      %v3585 = vadd.f32 %v3223, %v3549
      %v3586 = vadd.f32 %v3224, %v3552
      %v3587 = vld [vmem:[%s3228] sm:$0xf]
      %v3588 = vld [vmem:[%s3228 + $0x4] sm:$0xf]
      %v3589 = vld [vmem:[%s3228 + $0x8] sm:$0x1]
      %v3590 = vld [vmem:[%s3228 + $0xc] sm:$0xf]
      %v3591 = vld [vmem:[%s3228 + $0x10] sm:$0xf]
      %v3592 = vld [vmem:[%s3228 + $0x14] sm:$0x1]
      %v3593 = vld [vmem:[%s3228 + $0x18] sm:$0xf]
      %v3594 = vld [vmem:[%s3228 + $0x1c] sm:$0xf]
      %v3595 = vld [vmem:[%s3228 + $0x20] sm:$0x1]
      %v3596 = vld [vmem:[%s3228 + $0x24] sm:$0xf]
      %v3597 = vld [vmem:[%s3228 + $0x28] sm:$0xf]
      %v3598 = vld [vmem:[%s3228 + $0x2c] sm:$0x1]
      %v3599 = vld [vmem:[%s3228 + $0x30] sm:$0xf]
      %v3600 = vld [vmem:[%s3228 + $0x34] sm:$0xf]
      %v3601 = vld [vmem:[%s3228 + $0x38] sm:$0x1]
      %v3602 = vld [vmem:[%s3228 + $0x3c] sm:$0xf]
      %v3603 = vld [vmem:[%s3228 + $0x40] sm:$0xf]
      %v3604 = vld [vmem:[%s3228 + $0x44] sm:$0x1]
      %v3605 = vld [vmem:[%s3228 + $0x48] sm:$0xf]
      %v3606 = vld [vmem:[%s3228 + $0x4c] sm:$0xf]
      %v3607 = vld [vmem:[%s3228 + $0x50] sm:$0x1]
      %v3608 = vld [vmem:[%s3228 + $0x54] sm:$0xf]
      %v3609 = vld [vmem:[%s3228 + $0x58] sm:$0xf]
      %v3610 = vld [vmem:[%s3228 + $0x5c] sm:$0x1]
      %v3611 = vld [vmem:[%s3228 + $0x60] sm:$0xf]
      %v3612 = vld [vmem:[%s3228 + $0x64] sm:$0xf]
      %v3613 = vld [vmem:[%s3228 + $0x68] sm:$0x1]
      %v3614 = vld [vmem:[%s3228 + $0x6c] sm:$0xf]
      %v3615 = vld [vmem:[%s3228 + $0x70] sm:$0xf]
      %v3616 = vld [vmem:[%s3228 + $0x74] sm:$0x1]
      %v3617 = vld [vmem:[%s3228 + $0x78] sm:$0xf]
      %v3618 = vld [vmem:[%s3228 + $0x7c] sm:$0xf]
      %v3619 = vld [vmem:[%s3228 + $0x80] sm:$0x1]
      %v3620 = vld [vmem:[%s3228 + $0x84] sm:$0xf]
      %v3621 = vld [vmem:[%s3228 + $0x88] sm:$0xf]
      %v3622 = vld [vmem:[%s3228 + $0x8c] sm:$0x1]
      %v3623 = vld [vmem:[%s3228 + $0x90] sm:$0xf]
      %v3624 = vld [vmem:[%s3228 + $0x94] sm:$0xf]
      %v3625 = vld [vmem:[%s3228 + $0x98] sm:$0x1]
      %v3626 = vld [vmem:[%s3228 + $0x9c] sm:$0xf]
      %v3627 = vld [vmem:[%s3228 + $0xa0] sm:$0xf]
      %v3628 = vld [vmem:[%s3228 + $0xa4] sm:$0x1]
      %v3629 = vld [vmem:[%s3228 + $0xa8] sm:$0xf]
      %v3630 = vld [vmem:[%s3228 + $0xac] sm:$0xf]
      %v3631 = vld [vmem:[%s3228 + $0xb0] sm:$0x1]
      %v3632 = vld [vmem:[%s3228 + $0xb4] sm:$0xf]
      %v3633 = vld [vmem:[%s3228 + $0xb8] sm:$0xf]
      %v3634 = vld [vmem:[%s3228 + $0xbc] sm:$0x1]
      %v3636 = vshrl.u32 %v3587, 16
      %v3638 = vrot.slane %v3636, 4
      %v3639 = vshll.u32 %v3587, 16
      %v3641 = vrot.slane %v3639, 5
      %v3642 = vor.u32 %v3638, %v3641
      %v3643 = vrot.slane %v3642, 4
      %v3645 = vshll.u32 %v3588, 16
      %v3647 = vrot.slane %v3645, 5
      %v3648 = vsel %vm269, %v3643, %v3647
      %v3649 = vshrl.u32 %v3588, 16
      %v3651 = vrot.slane %v3649, 4
      %v3652 = vor.u32 %v3651, %v3647
      %v3653 = vrot.slane %v3652, 4
      %v3655 = vshll.u32 %v3589, 16
      %v3657 = vrot.slane %v3655, 5
      %v3658 = vsel %vm269, %v3653, %v3657
      %v3660 = vshrl.u32 %v3590, 16
      %v3662 = vrot.slane %v3660, 4
      %v3663 = vshll.u32 %v3590, 16
      %v3665 = vrot.slane %v3663, 5
      %v3666 = vor.u32 %v3662, %v3665
      %v3667 = vrot.slane %v3666, 4
      %v3669 = vshll.u32 %v3591, 16
      %v3671 = vrot.slane %v3669, 5
      %v3672 = vsel %vm269, %v3667, %v3671
      %v3673 = vshrl.u32 %v3591, 16
      %v3675 = vrot.slane %v3673, 4
      %v3676 = vor.u32 %v3675, %v3671
      %v3677 = vrot.slane %v3676, 4
      %v3679 = vshll.u32 %v3592, 16
      %v3681 = vrot.slane %v3679, 5
      %v3682 = vsel %vm269, %v3677, %v3681
      %v3684 = vshrl.u32 %v3593, 16
      %v3686 = vrot.slane %v3684, 4
      %v3687 = vshll.u32 %v3593, 16
      %v3689 = vrot.slane %v3687, 5
      %v3690 = vor.u32 %v3686, %v3689
      %v3691 = vrot.slane %v3690, 4
      %v3693 = vshll.u32 %v3594, 16
      %v3695 = vrot.slane %v3693, 5
      %v3696 = vsel %vm269, %v3691, %v3695
      %v3697 = vshrl.u32 %v3594, 16
      %v3699 = vrot.slane %v3697, 4
      %v3700 = vor.u32 %v3699, %v3695
      %v3701 = vrot.slane %v3700, 4
      %v3703 = vshll.u32 %v3595, 16
      %v3705 = vrot.slane %v3703, 5
      %v3706 = vsel %vm269, %v3701, %v3705
      %v3708 = vshrl.u32 %v3596, 16
      %v3710 = vrot.slane %v3708, 4
      %v3711 = vshll.u32 %v3596, 16
      %v3713 = vrot.slane %v3711, 5
      %v3714 = vor.u32 %v3710, %v3713
      %v3715 = vrot.slane %v3714, 4
      %v3717 = vshll.u32 %v3597, 16
      %v3719 = vrot.slane %v3717, 5
      %v3720 = vsel %vm269, %v3715, %v3719
      %v3721 = vshrl.u32 %v3597, 16
      %v3723 = vrot.slane %v3721, 4
      %v3724 = vor.u32 %v3723, %v3719
      %v3725 = vrot.slane %v3724, 4
      %v3727 = vshll.u32 %v3598, 16
      %v3729 = vrot.slane %v3727, 5
      %v3730 = vsel %vm269, %v3725, %v3729
      %v3732 = vshrl.u32 %v3599, 16
      %v3734 = vrot.slane %v3732, 4
      %v3735 = vshll.u32 %v3599, 16
      %v3737 = vrot.slane %v3735, 5
      %v3738 = vor.u32 %v3734, %v3737
      %v3739 = vrot.slane %v3738, 4
      %v3741 = vshll.u32 %v3600, 16
      %v3743 = vrot.slane %v3741, 5
      %v3744 = vsel %vm269, %v3739, %v3743
      %v3745 = vshrl.u32 %v3600, 16
      %v3747 = vrot.slane %v3745, 4
      %v3748 = vor.u32 %v3747, %v3743
      %v3749 = vrot.slane %v3748, 4
      %v3751 = vshll.u32 %v3601, 16
      %v3753 = vrot.slane %v3751, 5
      %v3754 = vsel %vm269, %v3749, %v3753
      %v3756 = vshrl.u32 %v3602, 16
      %v3758 = vrot.slane %v3756, 4
      %v3759 = vshll.u32 %v3602, 16
      %v3761 = vrot.slane %v3759, 5
      %v3762 = vor.u32 %v3758, %v3761
      %v3763 = vrot.slane %v3762, 4
      %v3765 = vshll.u32 %v3603, 16
      %v3767 = vrot.slane %v3765, 5
      %v3768 = vsel %vm269, %v3763, %v3767
      %v3769 = vshrl.u32 %v3603, 16
      %v3771 = vrot.slane %v3769, 4
      %v3772 = vor.u32 %v3771, %v3767
      %v3773 = vrot.slane %v3772, 4
      %v3775 = vshll.u32 %v3604, 16
      %v3777 = vrot.slane %v3775, 5
      %v3778 = vsel %vm269, %v3773, %v3777
      %v3780 = vshrl.u32 %v3605, 16
      %v3782 = vrot.slane %v3780, 4
      %v3783 = vshll.u32 %v3605, 16
      %v3785 = vrot.slane %v3783, 5
      %v3786 = vor.u32 %v3782, %v3785
      %v3787 = vrot.slane %v3786, 4
      %v3789 = vshll.u32 %v3606, 16
      %v3791 = vrot.slane %v3789, 5
      %v3792 = vsel %vm269, %v3787, %v3791
      %v3793 = vshrl.u32 %v3606, 16
      %v3795 = vrot.slane %v3793, 4
      %v3796 = vor.u32 %v3795, %v3791
      %v3797 = vrot.slane %v3796, 4
      %v3799 = vshll.u32 %v3607, 16
      %v3801 = vrot.slane %v3799, 5
      %v3802 = vsel %vm269, %v3797, %v3801
      %v3804 = vshrl.u32 %v3608, 16
      %v3806 = vrot.slane %v3804, 4
      %v3807 = vshll.u32 %v3608, 16
      %v3809 = vrot.slane %v3807, 5
      %v3810 = vor.u32 %v3806, %v3809
      %v3811 = vrot.slane %v3810, 4
      %v3813 = vshll.u32 %v3609, 16
      %v3815 = vrot.slane %v3813, 5
      %v3816 = vsel %vm269, %v3811, %v3815
      %v3817 = vshrl.u32 %v3609, 16
      %v3819 = vrot.slane %v3817, 4
      %v3820 = vor.u32 %v3819, %v3815
      %v3821 = vrot.slane %v3820, 4
      %v3823 = vshll.u32 %v3610, 16
      %v3825 = vrot.slane %v3823, 5
      %v3826 = vsel %vm269, %v3821, %v3825
      %v3828 = vshrl.u32 %v3611, 16
      %v3830 = vrot.slane %v3828, 4
      %v3831 = vshll.u32 %v3611, 16
      %v3833 = vrot.slane %v3831, 5
      %v3834 = vor.u32 %v3830, %v3833
      %v3835 = vrot.slane %v3834, 4
      %v3837 = vshll.u32 %v3612, 16
      %v3839 = vrot.slane %v3837, 5
      %v3840 = vsel %vm269, %v3835, %v3839
      %v3841 = vshrl.u32 %v3612, 16
      %v3843 = vrot.slane %v3841, 4
      %v3844 = vor.u32 %v3843, %v3839
      %v3845 = vrot.slane %v3844, 4
      %v3847 = vshll.u32 %v3613, 16
      %v3849 = vrot.slane %v3847, 5
      %v3850 = vsel %vm269, %v3845, %v3849
      %v3852 = vshrl.u32 %v3614, 16
      %v3854 = vrot.slane %v3852, 4
      %v3855 = vshll.u32 %v3614, 16
      %v3857 = vrot.slane %v3855, 5
      %v3858 = vor.u32 %v3854, %v3857
      %v3859 = vrot.slane %v3858, 4
      %v3861 = vshll.u32 %v3615, 16
      %v3863 = vrot.slane %v3861, 5
      %v3864 = vsel %vm269, %v3859, %v3863
      %v3865 = vshrl.u32 %v3615, 16
      %v3867 = vrot.slane %v3865, 4
      %v3868 = vor.u32 %v3867, %v3863
      %v3869 = vrot.slane %v3868, 4
      %v3871 = vshll.u32 %v3616, 16
      %v3873 = vrot.slane %v3871, 5
      %v3874 = vsel %vm269, %v3869, %v3873
      %v3876 = vshrl.u32 %v3617, 16
      %v3878 = vrot.slane %v3876, 4
      %v3879 = vshll.u32 %v3617, 16
      %v3881 = vrot.slane %v3879, 5
      %v3882 = vor.u32 %v3878, %v3881
      %v3883 = vrot.slane %v3882, 4
      %v3885 = vshll.u32 %v3618, 16
      %v3887 = vrot.slane %v3885, 5
      %v3888 = vsel %vm269, %v3883, %v3887
      %v3889 = vshrl.u32 %v3618, 16
      %v3891 = vrot.slane %v3889, 4
      %v3892 = vor.u32 %v3891, %v3887
      %v3893 = vrot.slane %v3892, 4
      %v3895 = vshll.u32 %v3619, 16
      %v3897 = vrot.slane %v3895, 5
      %v3898 = vsel %vm269, %v3893, %v3897
      %v3900 = vshrl.u32 %v3620, 16
      %v3902 = vrot.slane %v3900, 4
      %v3903 = vshll.u32 %v3620, 16
      %v3905 = vrot.slane %v3903, 5
      %v3906 = vor.u32 %v3902, %v3905
      %v3907 = vrot.slane %v3906, 4
      %v3909 = vshll.u32 %v3621, 16
      %v3911 = vrot.slane %v3909, 5
      %v3912 = vsel %vm269, %v3907, %v3911
      %v3913 = vshrl.u32 %v3621, 16
      %v3915 = vrot.slane %v3913, 4
      %v3916 = vor.u32 %v3915, %v3911
      %v3917 = vrot.slane %v3916, 4
      %v3919 = vshll.u32 %v3622, 16
      %v3921 = vrot.slane %v3919, 5
      %v3922 = vsel %vm269, %v3917, %v3921
      %v3924 = vshrl.u32 %v3623, 16
      %v3926 = vrot.slane %v3924, 4
      %v3927 = vshll.u32 %v3623, 16
      %v3929 = vrot.slane %v3927, 5
      %v3930 = vor.u32 %v3926, %v3929
      %v3931 = vrot.slane %v3930, 4
      %v3933 = vshll.u32 %v3624, 16
      %v3935 = vrot.slane %v3933, 5
      %v3936 = vsel %vm269, %v3931, %v3935
      %v3937 = vshrl.u32 %v3624, 16
      %v3939 = vrot.slane %v3937, 4
      %v3940 = vor.u32 %v3939, %v3935
      %v3941 = vrot.slane %v3940, 4
      %v3943 = vshll.u32 %v3625, 16
      %v3945 = vrot.slane %v3943, 5
      %v3946 = vsel %vm269, %v3941, %v3945
      %v3948 = vshrl.u32 %v3626, 16
      %v3950 = vrot.slane %v3948, 4
      %v3951 = vshll.u32 %v3626, 16
      %v3953 = vrot.slane %v3951, 5
      %v3954 = vor.u32 %v3950, %v3953
      %v3955 = vrot.slane %v3954, 4
      %v3957 = vshll.u32 %v3627, 16
      %v3959 = vrot.slane %v3957, 5
      %v3960 = vsel %vm269, %v3955, %v3959
      %v3961 = vshrl.u32 %v3627, 16
      %v3963 = vrot.slane %v3961, 4
      %v3964 = vor.u32 %v3963, %v3959
      %v3965 = vrot.slane %v3964, 4
      %v3967 = vshll.u32 %v3628, 16
      %v3969 = vrot.slane %v3967, 5
      %v3970 = vsel %vm269, %v3965, %v3969
      %v3972 = vshrl.u32 %v3629, 16
      %v3974 = vrot.slane %v3972, 4
      %v3975 = vshll.u32 %v3629, 16
      %v3977 = vrot.slane %v3975, 5
      %v3978 = vor.u32 %v3974, %v3977
      %v3979 = vrot.slane %v3978, 4
      %v3981 = vshll.u32 %v3630, 16
      %v3983 = vrot.slane %v3981, 5
      %v3984 = vsel %vm269, %v3979, %v3983
      %v3985 = vshrl.u32 %v3630, 16
      %v3987 = vrot.slane %v3985, 4
      %v3988 = vor.u32 %v3987, %v3983
      %v3989 = vrot.slane %v3988, 4
      %v3991 = vshll.u32 %v3631, 16
      %v3993 = vrot.slane %v3991, 5
      %v3994 = vsel %vm269, %v3989, %v3993
      %v3996 = vshrl.u32 %v3632, 16
      %v3998 = vrot.slane %v3996, 4
      %v3999 = vshll.u32 %v3632, 16
      %v4001 = vrot.slane %v3999, 5
      %v4002 = vor.u32 %v3998, %v4001
      %v4003 = vrot.slane %v4002, 4
      %v4005 = vshll.u32 %v3633, 16
      %v4007 = vrot.slane %v4005, 5
      %v4008 = vsel %vm269, %v4003, %v4007
      %v4009 = vshrl.u32 %v3633, 16
      %v4011 = vrot.slane %v4009, 4
      %v4012 = vor.u32 %v4011, %v4007
      %v4013 = vrot.slane %v4012, 4
      %v4015 = vshll.u32 %v3634, 16
      %v4017 = vrot.slane %v4015, 5
      %v4018 = vsel %vm269, %v4013, %v4017
      %s4019 = scalar_lea.vmem %s1, 14
      %v4020 = vld [vmem:[%s4019] sm:$0x3]
      %v4021 = vunpack.c.l.b16 %v3648
      %v4022 = vunpack.c.l.b16 %v3658
      %v4023 = vunpack.c.l.b16 %v3672
      %v4024 = vunpack.c.l.b16 %v3682
      %v4025 = vunpack.c.l.b16 %v3696
      %v4026 = vunpack.c.l.b16 %v3706
      %v4027 = vunpack.c.l.b16 %v3720
      %v4028 = vunpack.c.l.b16 %v3730
      %v4029 = vunpack.c.l.b16 %v3744
      %v4030 = vunpack.c.l.b16 %v3754
      %v4031 = vunpack.c.l.b16 %v3768
      %v4032 = vunpack.c.l.b16 %v3778
      %v4033 = vunpack.c.l.b16 %v3792
      %v4034 = vunpack.c.l.b16 %v3802
      %v4035 = vunpack.c.l.b16 %v3816
      %v4036 = vunpack.c.l.b16 %v3826
      %v4037 = vunpack.c.l.b16 %v3840
      %v4038 = vunpack.c.l.b16 %v3850
      %v4039 = vunpack.c.l.b16 %v3864
      %v4040 = vunpack.c.l.b16 %v3874
      %v4041 = vunpack.c.l.b16 %v3888
      %v4042 = vunpack.c.l.b16 %v3898
      %v4043 = vunpack.c.l.b16 %v3912
      %v4044 = vunpack.c.l.b16 %v3922
      %v4045 = vunpack.c.l.b16 %v3936
      %v4046 = vunpack.c.l.b16 %v3946
      %v4047 = vunpack.c.l.b16 %v3960
      %v4048 = vunpack.c.l.b16 %v3970
      %v4049 = vunpack.c.l.b16 %v3984
      %v4050 = vunpack.c.l.b16 %v3994
      %v4051 = vunpack.c.l.b16 %v4008
      %v4052 = vunpack.c.l.b16 %v4018
      %v4053 = vpack.c.b16 %v4022, %v4021
      %v4054 = vpack.c.b16 %v4024, %v4023
      %v4055 = vpack.c.b16 %v4026, %v4025
      %v4056 = vpack.c.b16 %v4028, %v4027
      %v4057 = vpack.c.b16 %v4030, %v4029
      %v4058 = vpack.c.b16 %v4032, %v4031
      %v4059 = vpack.c.b16 %v4034, %v4033
      %v4060 = vpack.c.b16 %v4036, %v4035
      %v4061 = vpack.c.b16 %v4038, %v4037
      %v4062 = vpack.c.b16 %v4040, %v4039
      %v4063 = vpack.c.b16 %v4042, %v4041
      %v4064 = vpack.c.b16 %v4044, %v4043
      %v4065 = vpack.c.b16 %v4046, %v4045
      %v4066 = vpack.c.b16 %v4048, %v4047
      %v4067 = vpack.c.b16 %v4050, %v4049
      %v4068 = vpack.c.b16 %v4052, %v4051
      %v4070 = vsel %vm704, %v4053, 0
      %v4073 = vsel %vm704, %v4054, 0
      %v4076 = vsel %vm704, %v4055, 0
      %v4079 = vsel %vm704, %v4056, 0
      %v4082 = vsel %vm704, %v4057, 0
      %v4085 = vsel %vm704, %v4058, 0
      %v4088 = vsel %vm704, %v4059, 0
      %v4091 = vsel %vm704, %v4060, 0
      %v4094 = vsel %vm704, %v4061, 0
      %v4097 = vsel %vm704, %v4062, 0
      %v4100 = vsel %vm704, %v4063, 0
      %v4103 = vsel %vm704, %v4064, 0
      %v4106 = vsel %vm704, %v4065, 0
      %v4109 = vsel %vm704, %v4066, 0
      %v4112 = vsel %vm704, %v4067, 0
      %v4115 = vsel %vm704, %v4068, 0
      %v4118 = vsel %vm753, %v4020, 0
      %4120 = vmatprep.subr.bf16.mxu0 0
      %4121 = vmatpush1.bf16.msra.mxu0 %v4118
      %4122 = vmatprep.subr.bf16.mxu0 0
      %4123 = vmatpush1.bf16.msra.mxu0 0
      %4124 = vmatprep.subr.bf16.mxu0 0
      %4125 = vmatpush1.bf16.msra.mxu0 0
      %4126 = vmatprep.subr.bf16.mxu0 0
      %4127 = vmatpush1.bf16.msra.mxu0 0
      %4128 = vmatprep.subr.bf16.mxu0 0
      %4129 = vmatpush1.bf16.msra.mxu0 0
      %4130 = vmatprep.subr.bf16.mxu0 0
      %4131 = vmatpush1.bf16.msra.mxu0 0
      %4132 = vmatprep.subr.bf16.mxu0 0
      %4133 = vmatpush1.bf16.msra.mxu0 0
      %4134 = vmatprep.subr.bf16.mxu0 0
      %4135 = vmatpush1.bf16.msra.mxu0 0
      %4136 = vmatprep.subr.bf16.mxu0 0
      %4137 = vmatpush1.bf16.msra.mxu0 0
      %4138 = vmatprep.subr.bf16.mxu0 0
      %4139 = vmatpush1.bf16.msra.mxu0 0
      %4140 = vmatprep.subr.bf16.mxu0 0
      %4141 = vmatpush1.bf16.msra.mxu0 0
      %4142 = vmatprep.subr.bf16.mxu0 0
      %4143 = vmatpush1.bf16.msra.mxu0 0
      %4144 = vmatprep.subr.bf16.mxu0 0
      %4145 = vmatpush1.bf16.msra.mxu0 0
      %4146 = vmatprep.subr.bf16.mxu0 0
      %4147 = vmatpush1.bf16.msra.mxu0 0
      %4148 = vmatprep.subr.bf16.mxu0 0
      %4149 = vmatpush1.bf16.msra.mxu0 0
      %4150 = vmatprep.subr.bf16.mxu0 0
      %4151 = vmatpush1.bf16.msra.mxu0 0
      %4152 = vmatprep.mubr.bf16.mxu0 0
      %4153 = vmatmul.mubr.bf16.gmra.mrb[0].mxu0 %v4070
      %v4154 = vpop.f32.mrb[0].mxu0
      %v4155 = vadd.f32 0.0, %v4154
      %v4156 = vpop.f32.mrb[0].mxu0
      %v4157 = vpop.f32.mrb[0].mxu0
      %v4158 = vadd.f32 0.0, %v4157
      %v4159 = vpop.f32.mrb[0].mxu0
      %4160 = vmatprep.mubr.bf16.mxu0 0
      %4161 = vmatmul.mubr.bf16.gmra.mrb[0].mxu0 %v4073
      %v4162 = vpop.f32.mrb[0].mxu0
      %v4163 = vadd.f32 0.0, %v4162
      %v4164 = vpop.f32.mrb[0].mxu0
      %v4165 = vpop.f32.mrb[0].mxu0
      %v4166 = vadd.f32 0.0, %v4165
      %v4167 = vpop.f32.mrb[0].mxu0
      %4168 = vmatprep.mubr.bf16.mxu0 0
      %4169 = vmatmul.mubr.bf16.gmra.mrb[0].mxu0 %v4076
      %v4170 = vpop.f32.mrb[0].mxu0
      %v4171 = vadd.f32 0.0, %v4170
      %v4172 = vpop.f32.mrb[0].mxu0
      %v4173 = vpop.f32.mrb[0].mxu0
      %v4174 = vadd.f32 0.0, %v4173
      %v4175 = vpop.f32.mrb[0].mxu0
      %4176 = vmatprep.mubr.bf16.mxu0 0
      %4177 = vmatmul.mubr.bf16.gmra.mrb[0].mxu0 %v4079
      %v4178 = vpop.f32.mrb[0].mxu0
      %v4179 = vadd.f32 0.0, %v4178
      %v4180 = vpop.f32.mrb[0].mxu0
      %v4181 = vpop.f32.mrb[0].mxu0
      %v4182 = vadd.f32 0.0, %v4181
      %v4183 = vpop.f32.mrb[0].mxu0
      %4184 = vmatprep.mubr.bf16.mxu0 0
      %4185 = vmatmul.mubr.bf16.gmra.mrb[0].mxu0 %v4082
      %v4186 = vpop.f32.mrb[0].mxu0
      %v4187 = vadd.f32 0.0, %v4186
      %v4188 = vpop.f32.mrb[0].mxu0
      %v4189 = vpop.f32.mrb[0].mxu0
      %v4190 = vadd.f32 0.0, %v4189
      %v4191 = vpop.f32.mrb[0].mxu0
      %4192 = vmatprep.mubr.bf16.mxu0 0
      %4193 = vmatmul.mubr.bf16.gmra.mrb[0].mxu0 %v4085
      %v4194 = vpop.f32.mrb[0].mxu0
      %v4195 = vadd.f32 0.0, %v4194
      %v4196 = vpop.f32.mrb[0].mxu0
      %v4197 = vpop.f32.mrb[0].mxu0
      %v4198 = vadd.f32 0.0, %v4197
      %v4199 = vpop.f32.mrb[0].mxu0
      %4200 = vmatprep.mubr.bf16.mxu0 0
      %4201 = vmatmul.mubr.bf16.gmra.mrb[0].mxu0 %v4088
      %v4202 = vpop.f32.mrb[0].mxu0
      %v4203 = vadd.f32 0.0, %v4202
      %v4204 = vpop.f32.mrb[0].mxu0
      %v4205 = vpop.f32.mrb[0].mxu0
      %v4206 = vadd.f32 0.0, %v4205
      %v4207 = vpop.f32.mrb[0].mxu0
      %4208 = vmatprep.mubr.bf16.mxu0 0
      %4209 = vmatmul.mubr.bf16.gmra.mrb[0].mxu0 %v4091
      %v4210 = vpop.f32.mrb[0].mxu0
      %v4211 = vadd.f32 0.0, %v4210
      %v4212 = vpop.f32.mrb[0].mxu0
      %v4213 = vpop.f32.mrb[0].mxu0
      %v4214 = vadd.f32 0.0, %v4213
      %v4215 = vpop.f32.mrb[0].mxu0
      %4216 = vmatprep.mubr.bf16.mxu0 0
      %4217 = vmatmul.mubr.bf16.gmra.mrb[0].mxu0 %v4094
      %v4218 = vpop.f32.mrb[0].mxu0
      %v4219 = vadd.f32 0.0, %v4218
      %v4220 = vpop.f32.mrb[0].mxu0
      %v4221 = vpop.f32.mrb[0].mxu0
      %v4222 = vadd.f32 0.0, %v4221
      %v4223 = vpop.f32.mrb[0].mxu0
      %4224 = vmatprep.mubr.bf16.mxu0 0
      %4225 = vmatmul.mubr.bf16.gmra.mrb[0].mxu0 %v4097
      %v4226 = vpop.f32.mrb[0].mxu0
      %v4227 = vadd.f32 0.0, %v4226
      %v4228 = vpop.f32.mrb[0].mxu0
      %v4229 = vpop.f32.mrb[0].mxu0
      %v4230 = vadd.f32 0.0, %v4229
      %v4231 = vpop.f32.mrb[0].mxu0
      %4232 = vmatprep.mubr.bf16.mxu0 0
      %4233 = vmatmul.mubr.bf16.gmra.mrb[0].mxu0 %v4100
      %v4234 = vpop.f32.mrb[0].mxu0
      %v4235 = vadd.f32 0.0, %v4234
      %v4236 = vpop.f32.mrb[0].mxu0
      %v4237 = vpop.f32.mrb[0].mxu0
      %v4238 = vadd.f32 0.0, %v4237
      %v4239 = vpop.f32.mrb[0].mxu0
      %4240 = vmatprep.mubr.bf16.mxu0 0
      %4241 = vmatmul.mubr.bf16.gmra.mrb[0].mxu0 %v4103
      %v4242 = vpop.f32.mrb[0].mxu0
      %v4243 = vadd.f32 0.0, %v4242
      %v4244 = vpop.f32.mrb[0].mxu0
      %v4245 = vpop.f32.mrb[0].mxu0
      %v4246 = vadd.f32 0.0, %v4245
      %v4247 = vpop.f32.mrb[0].mxu0
      %4248 = vmatprep.mubr.bf16.mxu0 0
      %4249 = vmatmul.mubr.bf16.gmra.mrb[0].mxu0 %v4106
      %v4250 = vpop.f32.mrb[0].mxu0
      %v4251 = vadd.f32 0.0, %v4250
      %v4252 = vpop.f32.mrb[0].mxu0
      %v4253 = vpop.f32.mrb[0].mxu0
      %v4254 = vadd.f32 0.0, %v4253
      %v4255 = vpop.f32.mrb[0].mxu0
      %4256 = vmatprep.mubr.bf16.mxu0 0
      %4257 = vmatmul.mubr.bf16.gmra.mrb[0].mxu0 %v4109
      %v4258 = vpop.f32.mrb[0].mxu0
      %v4259 = vadd.f32 0.0, %v4258
      %v4260 = vpop.f32.mrb[0].mxu0
      %v4261 = vpop.f32.mrb[0].mxu0
      %v4262 = vadd.f32 0.0, %v4261
      %v4263 = vpop.f32.mrb[0].mxu0
      %4264 = vmatprep.mubr.bf16.mxu0 0
      %4265 = vmatmul.mubr.bf16.gmra.mrb[0].mxu0 %v4112
      %v4266 = vpop.f32.mrb[0].mxu0
      %v4267 = vadd.f32 0.0, %v4266
      %v4268 = vpop.f32.mrb[0].mxu0
      %v4269 = vpop.f32.mrb[0].mxu0
      %v4270 = vadd.f32 0.0, %v4269
      %v4271 = vpop.f32.mrb[0].mxu0
      %4272 = vmatprep.mubr.bf16.mxu0 0
      %4273 = vmatmul.mubr.bf16.gmra.mrb[0].mxu0 %v4115
      %v4274 = vpop.f32.mrb[0].mxu0
      %v4275 = vadd.f32 0.0, %v4274
      %v4276 = vpop.f32.mrb[0].mxu0
      %v4277 = vpop.f32.mrb[0].mxu0
      %v4278 = vadd.f32 0.0, %v4277
      %v4279 = vpop.f32.mrb[0].mxu0
      %4280 = vdwg.mxu0
      %v4281 = vadd.f32 %v3555, %v4155
      %v4282 = vadd.f32 %v3556, %v4158
      %v4283 = vadd.f32 %v3557, %v4163
      %v4284 = vadd.f32 %v3558, %v4166
      %v4285 = vadd.f32 %v3559, %v4171
      %v4286 = vadd.f32 %v3560, %v4174
      %v4287 = vadd.f32 %v3561, %v4179
      %v4288 = vadd.f32 %v3562, %v4182
      %v4289 = vadd.f32 %v3563, %v4187
      %v4290 = vadd.f32 %v3564, %v4190
      %v4291 = vadd.f32 %v3565, %v4195
      %v4292 = vadd.f32 %v3566, %v4198
      %v4293 = vadd.f32 %v3567, %v4203
      %v4294 = vadd.f32 %v3568, %v4206
      %v4295 = vadd.f32 %v3569, %v4211
      %v4296 = vadd.f32 %v3570, %v4214
      %v4297 = vadd.f32 %v3571, %v4219
      %v4298 = vadd.f32 %v3572, %v4222
      %v4299 = vadd.f32 %v3573, %v4227
      %v4300 = vadd.f32 %v3574, %v4230
      %v4301 = vadd.f32 %v3575, %v4235
      %v4302 = vadd.f32 %v3576, %v4238
      %v4303 = vadd.f32 %v3577, %v4243
      %v4304 = vadd.f32 %v3578, %v4246
      %v4305 = vadd.f32 %v3579, %v4251
      %v4306 = vadd.f32 %v3580, %v4254
      %v4307 = vadd.f32 %v3581, %v4259
      %v4308 = vadd.f32 %v3582, %v4262
      %v4309 = vadd.f32 %v3583, %v4267
      %v4310 = vadd.f32 %v3584, %v4270
      %v4311 = vadd.f32 %v3585, %v4275
      %v4312 = vadd.f32 %v3586, %v4278
      %v4313 = vld [vmem:[%s3228] sm:$0xe]
      %v4314 = vld [vmem:[%s3228 + $0xc] sm:$0xe]
      %v4315 = vld [vmem:[%s3228 + $0x18] sm:$0xe]
      %v4316 = vld [vmem:[%s3228 + $0x24] sm:$0xe]
      %v4317 = vld [vmem:[%s3228 + $0x30] sm:$0xe]
      %v4318 = vld [vmem:[%s3228 + $0x3c] sm:$0xe]
      %v4319 = vld [vmem:[%s3228 + $0x48] sm:$0xe]
      %v4320 = vld [vmem:[%s3228 + $0x54] sm:$0xe]
      %v4321 = vld [vmem:[%s3228 + $0x60] sm:$0xe]
      %v4322 = vld [vmem:[%s3228 + $0x6c] sm:$0xe]
      %v4323 = vld [vmem:[%s3228 + $0x78] sm:$0xe]
      %v4324 = vld [vmem:[%s3228 + $0x84] sm:$0xe]
      %v4325 = vld [vmem:[%s3228 + $0x90] sm:$0xe]
      %v4326 = vld [vmem:[%s3228 + $0x9c] sm:$0xe]
      %v4327 = vld [vmem:[%s3228 + $0xa8] sm:$0xe]
      %v4328 = vld [vmem:[%s3228 + $0xb4] sm:$0xe]
      %v4377 = vrot.slane %v4313, 5
      %v4378 = vrot.slane %v4377, 4
      %v4379 = vrot.slane %v3588, 5
      %v4380 = vsel %vm1260, %v4378, %v4379
      %v4381 = vrot.slane %v4379, 4
      %v4382 = vrot.slane %v3589, 5
      %v4383 = vsel %vm1260, %v4381, %v4382
      %v4384 = vrot.slane %v4314, 5
      %v4385 = vrot.slane %v4384, 4
      %v4386 = vrot.slane %v3591, 5
      %v4387 = vsel %vm1260, %v4385, %v4386
      %v4388 = vrot.slane %v4386, 4
      %v4389 = vrot.slane %v3592, 5
      %v4390 = vsel %vm1260, %v4388, %v4389
      %v4391 = vrot.slane %v4315, 5
      %v4392 = vrot.slane %v4391, 4
      %v4393 = vrot.slane %v3594, 5
      %v4394 = vsel %vm1260, %v4392, %v4393
      %v4395 = vrot.slane %v4393, 4
      %v4396 = vrot.slane %v3595, 5
      %v4397 = vsel %vm1260, %v4395, %v4396
      %v4398 = vrot.slane %v4316, 5
      %v4399 = vrot.slane %v4398, 4
      %v4400 = vrot.slane %v3597, 5
      %v4401 = vsel %vm1260, %v4399, %v4400
      %v4402 = vrot.slane %v4400, 4
      %v4403 = vrot.slane %v3598, 5
      %v4404 = vsel %vm1260, %v4402, %v4403
      %v4405 = vrot.slane %v4317, 5
      %v4406 = vrot.slane %v4405, 4
      %v4407 = vrot.slane %v3600, 5
      %v4408 = vsel %vm1260, %v4406, %v4407
      %v4409 = vrot.slane %v4407, 4
      %v4410 = vrot.slane %v3601, 5
      %v4411 = vsel %vm1260, %v4409, %v4410
      %v4412 = vrot.slane %v4318, 5
      %v4413 = vrot.slane %v4412, 4
      %v4414 = vrot.slane %v3603, 5
      %v4415 = vsel %vm1260, %v4413, %v4414
      %v4416 = vrot.slane %v4414, 4
      %v4417 = vrot.slane %v3604, 5
      %v4418 = vsel %vm1260, %v4416, %v4417
      %v4419 = vrot.slane %v4319, 5
      %v4420 = vrot.slane %v4419, 4
      %v4421 = vrot.slane %v3606, 5
      %v4422 = vsel %vm1260, %v4420, %v4421
      %v4423 = vrot.slane %v4421, 4
      %v4424 = vrot.slane %v3607, 5
      %v4425 = vsel %vm1260, %v4423, %v4424
      %v4426 = vrot.slane %v4320, 5
      %v4427 = vrot.slane %v4426, 4
      %v4428 = vrot.slane %v3609, 5
      %v4429 = vsel %vm1260, %v4427, %v4428
      %v4430 = vrot.slane %v4428, 4
      %v4431 = vrot.slane %v3610, 5
      %v4432 = vsel %vm1260, %v4430, %v4431
      %v4433 = vrot.slane %v4321, 5
      %v4434 = vrot.slane %v4433, 4
      %v4435 = vrot.slane %v3612, 5
      %v4436 = vsel %vm1260, %v4434, %v4435
      %v4437 = vrot.slane %v4435, 4
      %v4438 = vrot.slane %v3613, 5
      %v4439 = vsel %vm1260, %v4437, %v4438
      %v4440 = vrot.slane %v4322, 5
      %v4441 = vrot.slane %v4440, 4
      %v4442 = vrot.slane %v3615, 5
      %v4443 = vsel %vm1260, %v4441, %v4442
      %v4444 = vrot.slane %v4442, 4
      %v4445 = vrot.slane %v3616, 5
      %v4446 = vsel %vm1260, %v4444, %v4445
      %v4447 = vrot.slane %v4323, 5
      %v4448 = vrot.slane %v4447, 4
      %v4449 = vrot.slane %v3618, 5
      %v4450 = vsel %vm1260, %v4448, %v4449
      %v4451 = vrot.slane %v4449, 4
      %v4452 = vrot.slane %v3619, 5
      %v4453 = vsel %vm1260, %v4451, %v4452
      %v4454 = vrot.slane %v4324, 5
      %v4455 = vrot.slane %v4454, 4
      %v4456 = vrot.slane %v3621, 5
      %v4457 = vsel %vm1260, %v4455, %v4456
      %v4458 = vrot.slane %v4456, 4
      %v4459 = vrot.slane %v3622, 5
      %v4460 = vsel %vm1260, %v4458, %v4459
      %v4461 = vrot.slane %v4325, 5
      %v4462 = vrot.slane %v4461, 4
      %v4463 = vrot.slane %v3624, 5
      %v4464 = vsel %vm1260, %v4462, %v4463
      %v4465 = vrot.slane %v4463, 4
      %v4466 = vrot.slane %v3625, 5
      %v4467 = vsel %vm1260, %v4465, %v4466
      %v4468 = vrot.slane %v4326, 5
      %v4469 = vrot.slane %v4468, 4
      %v4470 = vrot.slane %v3627, 5
      %v4471 = vsel %vm1260, %v4469, %v4470
      %v4472 = vrot.slane %v4470, 4
      %v4473 = vrot.slane %v3628, 5
      %v4474 = vsel %vm1260, %v4472, %v4473
      %v4475 = vrot.slane %v4327, 5
      %v4476 = vrot.slane %v4475, 4
      %v4477 = vrot.slane %v3630, 5
      %v4478 = vsel %vm1260, %v4476, %v4477
      %v4479 = vrot.slane %v4477, 4
      %v4480 = vrot.slane %v3631, 5
      %v4481 = vsel %vm1260, %v4479, %v4480
      %v4482 = vrot.slane %v4328, 5
      %v4483 = vrot.slane %v4482, 4
      %v4484 = vrot.slane %v3633, 5
      %v4485 = vsel %vm1260, %v4483, %v4484
      %v4486 = vrot.slane %v4484, 4
      %v4487 = vrot.slane %v3634, 5
      %v4488 = vsel %vm1260, %v4486, %v4487
      %s4489 = scalar_lea.vmem %s1, 16
      %v4490 = vld [vmem:[%s4489] sm:$0x3]
      %v4491 = vunpack.c.l.b16 %v4380
      %v4492 = vunpack.c.l.b16 %v4383
      %v4493 = vunpack.c.l.b16 %v4387
      %v4494 = vunpack.c.l.b16 %v4390
      %v4495 = vunpack.c.l.b16 %v4394
      %v4496 = vunpack.c.l.b16 %v4397
      %v4497 = vunpack.c.l.b16 %v4401
      %v4498 = vunpack.c.l.b16 %v4404
      %v4499 = vunpack.c.l.b16 %v4408
      %v4500 = vunpack.c.l.b16 %v4411
      %v4501 = vunpack.c.l.b16 %v4415
      %v4502 = vunpack.c.l.b16 %v4418
      %v4503 = vunpack.c.l.b16 %v4422
      %v4504 = vunpack.c.l.b16 %v4425
      %v4505 = vunpack.c.l.b16 %v4429
      %v4506 = vunpack.c.l.b16 %v4432
      %v4507 = vunpack.c.l.b16 %v4436
      %v4508 = vunpack.c.l.b16 %v4439
      %v4509 = vunpack.c.l.b16 %v4443
      %v4510 = vunpack.c.l.b16 %v4446
      %v4511 = vunpack.c.l.b16 %v4450
      %v4512 = vunpack.c.l.b16 %v4453
      %v4513 = vunpack.c.l.b16 %v4457
      %v4514 = vunpack.c.l.b16 %v4460
      %v4515 = vunpack.c.l.b16 %v4464
      %v4516 = vunpack.c.l.b16 %v4467
      %v4517 = vunpack.c.l.b16 %v4471
      %v4518 = vunpack.c.l.b16 %v4474
      %v4519 = vunpack.c.l.b16 %v4478
      %v4520 = vunpack.c.l.b16 %v4481
      %v4521 = vunpack.c.l.b16 %v4485
      %v4522 = vunpack.c.l.b16 %v4488
      %v4523 = vpack.c.b16 %v4492, %v4491
      %v4524 = vpack.c.b16 %v4494, %v4493
      %v4525 = vpack.c.b16 %v4496, %v4495
      %v4526 = vpack.c.b16 %v4498, %v4497
      %v4527 = vpack.c.b16 %v4500, %v4499
      %v4528 = vpack.c.b16 %v4502, %v4501
      %v4529 = vpack.c.b16 %v4504, %v4503
      %v4530 = vpack.c.b16 %v4506, %v4505
      %v4531 = vpack.c.b16 %v4508, %v4507
      %v4532 = vpack.c.b16 %v4510, %v4509
      %v4533 = vpack.c.b16 %v4512, %v4511
      %v4534 = vpack.c.b16 %v4514, %v4513
      %v4535 = vpack.c.b16 %v4516, %v4515
      %v4536 = vpack.c.b16 %v4518, %v4517
      %v4537 = vpack.c.b16 %v4520, %v4519
      %v4538 = vpack.c.b16 %v4522, %v4521
      %v4540 = vsel %vm704, %v4523, 0
      %v4543 = vsel %vm704, %v4524, 0
      %v4546 = vsel %vm704, %v4525, 0
      %v4549 = vsel %vm704, %v4526, 0
      %v4552 = vsel %vm704, %v4527, 0
      %v4555 = vsel %vm704, %v4528, 0
      %v4558 = vsel %vm704, %v4529, 0
      %v4561 = vsel %vm704, %v4530, 0
      %v4564 = vsel %vm704, %v4531, 0
      %v4567 = vsel %vm704, %v4532, 0
      %v4570 = vsel %vm704, %v4533, 0
      %v4573 = vsel %vm704, %v4534, 0
      %v4576 = vsel %vm704, %v4535, 0
      %v4579 = vsel %vm704, %v4536, 0
      %v4582 = vsel %vm704, %v4537, 0
      %v4585 = vsel %vm704, %v4538, 0
      %v4588 = vsel %vm753, %v4490, 0
      %4590 = vmatprep.subr.bf16.mxu0 0
      %4591 = vmatpush1.bf16.msra.mxu0 %v4588
      %4592 = vmatprep.subr.bf16.mxu0 0
      %4593 = vmatpush1.bf16.msra.mxu0 0
      %4594 = vmatprep.subr.bf16.mxu0 0
      %4595 = vmatpush1.bf16.msra.mxu0 0
      %4596 = vmatprep.subr.bf16.mxu0 0
      %4597 = vmatpush1.bf16.msra.mxu0 0
      %4598 = vmatprep.subr.bf16.mxu0 0
      %4599 = vmatpush1.bf16.msra.mxu0 0
      %4600 = vmatprep.subr.bf16.mxu0 0
      %4601 = vmatpush1.bf16.msra.mxu0 0
      %4602 = vmatprep.subr.bf16.mxu0 0
      %4603 = vmatpush1.bf16.msra.mxu0 0
      %4604 = vmatprep.subr.bf16.mxu0 0
      %4605 = vmatpush1.bf16.msra.mxu0 0
      %4606 = vmatprep.subr.bf16.mxu0 0
      %4607 = vmatpush1.bf16.msra.mxu0 0
      %4608 = vmatprep.subr.bf16.mxu0 0
      %4609 = vmatpush1.bf16.msra.mxu0 0
      %4610 = vmatprep.subr.bf16.mxu0 0
      %4611 = vmatpush1.bf16.msra.mxu0 0
      %4612 = vmatprep.subr.bf16.mxu0 0
      %4613 = vmatpush1.bf16.msra.mxu0 0
      %4614 = vmatprep.subr.bf16.mxu0 0
      %4615 = vmatpush1.bf16.msra.mxu0 0
      %4616 = vmatprep.subr.bf16.mxu0 0
      %4617 = vmatpush1.bf16.msra.mxu0 0
      %4618 = vmatprep.subr.bf16.mxu0 0
      %4619 = vmatpush1.bf16.msra.mxu0 0
      %4620 = vmatprep.subr.bf16.mxu0 0
      %4621 = vmatpush1.bf16.msra.mxu0 0
      %4622 = vmatprep.mubr.bf16.mxu0 0
      %4623 = vmatmul.mubr.bf16.gmra.mrb[0].mxu0 %v4540
      %v4624 = vpop.f32.mrb[0].mxu0
      %v4625 = vadd.f32 0.0, %v4624
      %v4626 = vpop.f32.mrb[0].mxu0
      %v4627 = vpop.f32.mrb[0].mxu0
      %v4628 = vadd.f32 0.0, %v4627
      %v4629 = vpop.f32.mrb[0].mxu0
      %4630 = vmatprep.mubr.bf16.mxu0 0
      %4631 = vmatmul.mubr.bf16.gmra.mrb[0].mxu0 %v4543
      %v4632 = vpop.f32.mrb[0].mxu0
      %v4633 = vadd.f32 0.0, %v4632
      %v4634 = vpop.f32.mrb[0].mxu0
      %v4635 = vpop.f32.mrb[0].mxu0
      %v4636 = vadd.f32 0.0, %v4635
      %v4637 = vpop.f32.mrb[0].mxu0
      %4638 = vmatprep.mubr.bf16.mxu0 0
      %4639 = vmatmul.mubr.bf16.gmra.mrb[0].mxu0 %v4546
      %v4640 = vpop.f32.mrb[0].mxu0
      %v4641 = vadd.f32 0.0, %v4640
      %v4642 = vpop.f32.mrb[0].mxu0
      %v4643 = vpop.f32.mrb[0].mxu0
      %v4644 = vadd.f32 0.0, %v4643
      %v4645 = vpop.f32.mrb[0].mxu0
      %4646 = vmatprep.mubr.bf16.mxu0 0
      %4647 = vmatmul.mubr.bf16.gmra.mrb[0].mxu0 %v4549
      %v4648 = vpop.f32.mrb[0].mxu0
      %v4649 = vadd.f32 0.0, %v4648
      %v4650 = vpop.f32.mrb[0].mxu0
      %v4651 = vpop.f32.mrb[0].mxu0
      %v4652 = vadd.f32 0.0, %v4651
      %v4653 = vpop.f32.mrb[0].mxu0
      %4654 = vmatprep.mubr.bf16.mxu0 0
      %4655 = vmatmul.mubr.bf16.gmra.mrb[0].mxu0 %v4552
      %v4656 = vpop.f32.mrb[0].mxu0
      %v4657 = vadd.f32 0.0, %v4656
      %v4658 = vpop.f32.mrb[0].mxu0
      %v4659 = vpop.f32.mrb[0].mxu0
      %v4660 = vadd.f32 0.0, %v4659
      %v4661 = vpop.f32.mrb[0].mxu0
      %4662 = vmatprep.mubr.bf16.mxu0 0
      %4663 = vmatmul.mubr.bf16.gmra.mrb[0].mxu0 %v4555
      %v4664 = vpop.f32.mrb[0].mxu0
      %v4665 = vadd.f32 0.0, %v4664
      %v4666 = vpop.f32.mrb[0].mxu0
      %v4667 = vpop.f32.mrb[0].mxu0
      %v4668 = vadd.f32 0.0, %v4667
      %v4669 = vpop.f32.mrb[0].mxu0
      %4670 = vmatprep.mubr.bf16.mxu0 0
      %4671 = vmatmul.mubr.bf16.gmra.mrb[0].mxu0 %v4558
      %v4672 = vpop.f32.mrb[0].mxu0
      %v4673 = vadd.f32 0.0, %v4672
      %v4674 = vpop.f32.mrb[0].mxu0
      %v4675 = vpop.f32.mrb[0].mxu0
      %v4676 = vadd.f32 0.0, %v4675
      %v4677 = vpop.f32.mrb[0].mxu0
      %4678 = vmatprep.mubr.bf16.mxu0 0
      %4679 = vmatmul.mubr.bf16.gmra.mrb[0].mxu0 %v4561
      %v4680 = vpop.f32.mrb[0].mxu0
      %v4681 = vadd.f32 0.0, %v4680
      %v4682 = vpop.f32.mrb[0].mxu0
      %v4683 = vpop.f32.mrb[0].mxu0
      %v4684 = vadd.f32 0.0, %v4683
      %v4685 = vpop.f32.mrb[0].mxu0
      %4686 = vmatprep.mubr.bf16.mxu0 0
      %4687 = vmatmul.mubr.bf16.gmra.mrb[0].mxu0 %v4564
      %v4688 = vpop.f32.mrb[0].mxu0
      %v4689 = vadd.f32 0.0, %v4688
      %v4690 = vpop.f32.mrb[0].mxu0
      %v4691 = vpop.f32.mrb[0].mxu0
      %v4692 = vadd.f32 0.0, %v4691
      %v4693 = vpop.f32.mrb[0].mxu0
      %4694 = vmatprep.mubr.bf16.mxu0 0
      %4695 = vmatmul.mubr.bf16.gmra.mrb[0].mxu0 %v4567
      %v4696 = vpop.f32.mrb[0].mxu0
      %v4697 = vadd.f32 0.0, %v4696
      %v4698 = vpop.f32.mrb[0].mxu0
      %v4699 = vpop.f32.mrb[0].mxu0
      %v4700 = vadd.f32 0.0, %v4699
      %v4701 = vpop.f32.mrb[0].mxu0
      %4702 = vmatprep.mubr.bf16.mxu0 0
      %4703 = vmatmul.mubr.bf16.gmra.mrb[0].mxu0 %v4570
      %v4704 = vpop.f32.mrb[0].mxu0
      %v4705 = vadd.f32 0.0, %v4704
      %v4706 = vpop.f32.mrb[0].mxu0
      %v4707 = vpop.f32.mrb[0].mxu0
      %v4708 = vadd.f32 0.0, %v4707
      %v4709 = vpop.f32.mrb[0].mxu0
      %4710 = vmatprep.mubr.bf16.mxu0 0
      %4711 = vmatmul.mubr.bf16.gmra.mrb[0].mxu0 %v4573
      %v4712 = vpop.f32.mrb[0].mxu0
      %v4713 = vadd.f32 0.0, %v4712
      %v4714 = vpop.f32.mrb[0].mxu0
      %v4715 = vpop.f32.mrb[0].mxu0
      %v4716 = vadd.f32 0.0, %v4715
      %v4717 = vpop.f32.mrb[0].mxu0
      %4718 = vmatprep.mubr.bf16.mxu0 0
      %4719 = vmatmul.mubr.bf16.gmra.mrb[0].mxu0 %v4576
      %v4720 = vpop.f32.mrb[0].mxu0
      %v4721 = vadd.f32 0.0, %v4720
      %v4722 = vpop.f32.mrb[0].mxu0
      %v4723 = vpop.f32.mrb[0].mxu0
      %v4724 = vadd.f32 0.0, %v4723
      %v4725 = vpop.f32.mrb[0].mxu0
      %4726 = vmatprep.mubr.bf16.mxu0 0
      %4727 = vmatmul.mubr.bf16.gmra.mrb[0].mxu0 %v4579
      %v4728 = vpop.f32.mrb[0].mxu0
      %v4729 = vadd.f32 0.0, %v4728
      %v4730 = vpop.f32.mrb[0].mxu0
      %v4731 = vpop.f32.mrb[0].mxu0
      %v4732 = vadd.f32 0.0, %v4731
      %v4733 = vpop.f32.mrb[0].mxu0
      %4734 = vmatprep.mubr.bf16.mxu0 0
      %4735 = vmatmul.mubr.bf16.gmra.mrb[0].mxu0 %v4582
      %v4736 = vpop.f32.mrb[0].mxu0
      %v4737 = vadd.f32 0.0, %v4736
      %v4738 = vpop.f32.mrb[0].mxu0
      %v4739 = vpop.f32.mrb[0].mxu0
      %v4740 = vadd.f32 0.0, %v4739
      %v4741 = vpop.f32.mrb[0].mxu0
      %4742 = vmatprep.mubr.bf16.mxu0 0
      %4743 = vmatmul.mubr.bf16.gmra.mrb[0].mxu0 %v4585
      %v4744 = vpop.f32.mrb[0].mxu0
      %v4745 = vadd.f32 0.0, %v4744
      %v4746 = vpop.f32.mrb[0].mxu0
      %v4747 = vpop.f32.mrb[0].mxu0
      %v4748 = vadd.f32 0.0, %v4747
      %v4749 = vpop.f32.mrb[0].mxu0
      %4750 = vdwg.mxu0
      %v4751 = vadd.f32 %v4281, %v4625
      %v4752 = vadd.f32 %v4282, %v4628
      %v4753 = vadd.f32 %v4283, %v4633
      %v4754 = vadd.f32 %v4284, %v4636
      %v4755 = vadd.f32 %v4285, %v4641
      %v4756 = vadd.f32 %v4286, %v4644
      %v4757 = vadd.f32 %v4287, %v4649
      %v4758 = vadd.f32 %v4288, %v4652
      %v4759 = vadd.f32 %v4289, %v4657
      %v4760 = vadd.f32 %v4290, %v4660
      %v4761 = vadd.f32 %v4291, %v4665
      %v4762 = vadd.f32 %v4292, %v4668
      %v4763 = vadd.f32 %v4293, %v4673
      %v4764 = vadd.f32 %v4294, %v4676
      %v4765 = vadd.f32 %v4295, %v4681
      %v4766 = vadd.f32 %v4296, %v4684
      %v4767 = vadd.f32 %v4297, %v4689
      %v4768 = vadd.f32 %v4298, %v4692
      %v4769 = vadd.f32 %v4299, %v4697
      %v4770 = vadd.f32 %v4300, %v4700
      %v4771 = vadd.f32 %v4301, %v4705
      %v4772 = vadd.f32 %v4302, %v4708
      %v4773 = vadd.f32 %v4303, %v4713
      %v4774 = vadd.f32 %v4304, %v4716
      %v4775 = vadd.f32 %v4305, %v4721
      %v4776 = vadd.f32 %v4306, %v4724
      %v4777 = vadd.f32 %v4307, %v4729
      %v4778 = vadd.f32 %v4308, %v4732
      %v4779 = vadd.f32 %v4309, %v4737
      %v4780 = vadd.f32 %v4310, %v4740
      %v4781 = vadd.f32 %v4311, %v4745
      %v4782 = vadd.f32 %v4312, %v4748
      %v4783 = vpack.c.bf16 %v4752, %v4751
      %v4784 = vpack.c.bf16 %v4754, %v4753
      %v4785 = vpack.c.bf16 %v4756, %v4755
      %v4786 = vpack.c.bf16 %v4758, %v4757
      %v4787 = vpack.c.bf16 %v4760, %v4759
      %v4788 = vpack.c.bf16 %v4762, %v4761
      %v4789 = vpack.c.bf16 %v4764, %v4763
      %v4790 = vpack.c.bf16 %v4766, %v4765
      %v4791 = vpack.c.bf16 %v4768, %v4767
      %v4792 = vpack.c.bf16 %v4770, %v4769
      %v4793 = vpack.c.bf16 %v4772, %v4771
      %v4794 = vpack.c.bf16 %v4774, %v4773
      %v4795 = vpack.c.bf16 %v4776, %v4775
      %v4796 = vpack.c.bf16 %v4778, %v4777
      %v4797 = vpack.c.bf16 %v4780, %v4779
      %v4798 = vpack.c.bf16 %v4782, %v4781
      %v4815 = vunpack.c.l.b16 %v4783
      %v4816 = vunpack.c.h.b16 %v4783
      %v4817 = vunpack.c.l.b16 %v4784
      %v4818 = vunpack.c.h.b16 %v4784
      %v4819 = vunpack.c.l.b16 %v4785
      %v4820 = vunpack.c.h.b16 %v4785
      %v4821 = vunpack.c.l.b16 %v4786
      %v4822 = vunpack.c.h.b16 %v4786
      %v4823 = vunpack.c.l.b16 %v4787
      %v4824 = vunpack.c.h.b16 %v4787
      %v4825 = vunpack.c.l.b16 %v4788
      %v4826 = vunpack.c.h.b16 %v4788
      %v4827 = vunpack.c.l.b16 %v4789
      %v4828 = vunpack.c.h.b16 %v4789
      %v4829 = vunpack.c.l.b16 %v4790
      %v4830 = vunpack.c.h.b16 %v4790
      %v4831 = vunpack.c.l.b16 %v4791
      %v4832 = vunpack.c.h.b16 %v4791
      %v4833 = vunpack.c.l.b16 %v4792
      %v4834 = vunpack.c.h.b16 %v4792
      %v4835 = vunpack.c.l.b16 %v4793
      %v4836 = vunpack.c.h.b16 %v4793
      %v4837 = vunpack.c.l.b16 %v4794
      %v4838 = vunpack.c.h.b16 %v4794
      %v4839 = vunpack.c.l.b16 %v4795
      %v4840 = vunpack.c.h.b16 %v4795
      %v4841 = vunpack.c.l.b16 %v4796
      %v4842 = vunpack.c.h.b16 %v4796
      %v4843 = vunpack.c.l.b16 %v4797
      %v4844 = vunpack.c.h.b16 %v4797
      %v4845 = vunpack.c.l.b16 %v4798
      %v4846 = vunpack.c.h.b16 %v4798
      %v4847 = vpack.c.b16 %v4815, %v4815
      %v4848 = vpack.c.b16 %v4816, %v4816
      %v4849 = vpack.c.b16 %v4817, %v4817
      %v4850 = vpack.c.b16 %v4818, %v4818
      %v4851 = vpack.c.b16 %v4819, %v4819
      %v4852 = vpack.c.b16 %v4820, %v4820
      %v4853 = vpack.c.b16 %v4821, %v4821
      %v4854 = vpack.c.b16 %v4822, %v4822
      %v4855 = vpack.c.b16 %v4823, %v4823
      %v4856 = vpack.c.b16 %v4824, %v4824
      %v4857 = vpack.c.b16 %v4825, %v4825
      %v4858 = vpack.c.b16 %v4826, %v4826
      %v4859 = vpack.c.b16 %v4827, %v4827
      %v4860 = vpack.c.b16 %v4828, %v4828
      %v4861 = vpack.c.b16 %v4829, %v4829
      %v4862 = vpack.c.b16 %v4830, %v4830
      %v4863 = vpack.c.b16 %v4831, %v4831
      %v4864 = vpack.c.b16 %v4832, %v4832
      %v4865 = vpack.c.b16 %v4833, %v4833
      %v4866 = vpack.c.b16 %v4834, %v4834
      %v4867 = vpack.c.b16 %v4835, %v4835
      %v4868 = vpack.c.b16 %v4836, %v4836
      %v4869 = vpack.c.b16 %v4837, %v4837
      %v4870 = vpack.c.b16 %v4838, %v4838
      %v4871 = vpack.c.b16 %v4839, %v4839
      %v4872 = vpack.c.b16 %v4840, %v4840
      %v4873 = vpack.c.b16 %v4841, %v4841
      %v4874 = vpack.c.b16 %v4842, %v4842
      %v4875 = vpack.c.b16 %v4843, %v4843
      %v4876 = vpack.c.b16 %v4844, %v4844
      %v4877 = vpack.c.b16 %v4845, %v4845
      %v4878 = vpack.c.b16 %v4846, %v4846
      %vm4911 = vcmask 60416
      %4912 = vst.msk [vmem:[%s204] sm:$0xf] %vm4911, %v4847
      %4913 = vst.msk [vmem:[%s204 + $0x4] sm:$0xf] %vm4911, %v4848
      %4914 = vst.msk [vmem:[%s204 + $0x8] sm:$0xf] %vm4911, %v4849
      %4915 = vst.msk [vmem:[%s204 + $0xc] sm:$0xf] %vm4911, %v4850
      %4916 = vst.msk [vmem:[%s204 + $0x10] sm:$0xf] %vm4911, %v4851
      %4917 = vst.msk [vmem:[%s204 + $0x14] sm:$0xf] %vm4911, %v4852
      %4918 = vst.msk [vmem:[%s204 + $0x18] sm:$0xf] %vm4911, %v4853
      %4919 = vst.msk [vmem:[%s204 + $0x1c] sm:$0xf] %vm4911, %v4854
      %4920 = vst.msk [vmem:[%s204 + $0x20] sm:$0xf] %vm4911, %v4855
      %4921 = vst.msk [vmem:[%s204 + $0x24] sm:$0xf] %vm4911, %v4856
      %4922 = vst.msk [vmem:[%s204 + $0x28] sm:$0xf] %vm4911, %v4857
      %4923 = vst.msk [vmem:[%s204 + $0x2c] sm:$0xf] %vm4911, %v4858
      %4924 = vst.msk [vmem:[%s204 + $0x30] sm:$0xf] %vm4911, %v4859
      %4925 = vst.msk [vmem:[%s204 + $0x34] sm:$0xf] %vm4911, %v4860
      %4926 = vst.msk [vmem:[%s204 + $0x38] sm:$0xf] %vm4911, %v4861
      %4927 = vst.msk [vmem:[%s204 + $0x3c] sm:$0xf] %vm4911, %v4862
      %4928 = vst.msk [vmem:[%s204 + $0x40] sm:$0xf] %vm4911, %v4863
      %4929 = vst.msk [vmem:[%s204 + $0x44] sm:$0xf] %vm4911, %v4864
      %4930 = vst.msk [vmem:[%s204 + $0x48] sm:$0xf] %vm4911, %v4865
      %4931 = vst.msk [vmem:[%s204 + $0x4c] sm:$0xf] %vm4911, %v4866
      %4932 = vst.msk [vmem:[%s204 + $0x50] sm:$0xf] %vm4911, %v4867
      %4933 = vst.msk [vmem:[%s204 + $0x54] sm:$0xf] %vm4911, %v4868
      %4934 = vst.msk [vmem:[%s204 + $0x58] sm:$0xf] %vm4911, %v4869
      %4935 = vst.msk [vmem:[%s204 + $0x5c] sm:$0xf] %vm4911, %v4870
      %4936 = vst.msk [vmem:[%s204 + $0x60] sm:$0xf] %vm4911, %v4871
      %4937 = vst.msk [vmem:[%s204 + $0x64] sm:$0xf] %vm4911, %v4872
      %4938 = vst.msk [vmem:[%s204 + $0x68] sm:$0xf] %vm4911, %v4873
      %4939 = vst.msk [vmem:[%s204 + $0x6c] sm:$0xf] %vm4911, %v4874
      %4940 = vst.msk [vmem:[%s204 + $0x70] sm:$0xf] %vm4911, %v4875
      %4941 = vst.msk [vmem:[%s204 + $0x74] sm:$0xf] %vm4911, %v4876
      %4942 = vst.msk [vmem:[%s204 + $0x78] sm:$0xf] %vm4911, %v4877
      %4943 = vst.msk [vmem:[%s204 + $0x7c] sm:$0xf] %vm4911, %v4878
      %vm4944 = vcmask 64512
      %v4945 = vsel %vm4944, %v4751, 0.0
      %v4946 = vsel %vm4944, %v4752, 0.0
      %v4947 = vadd.f32 %v4945, %v4946
      %v4948 = vsel %vm4944, %v4753, 0.0
      %v4949 = vadd.f32 %v4947, %v4948
      %v4950 = vsel %vm4944, %v4754, 0.0
      %v4951 = vadd.f32 %v4949, %v4950
      %v4952 = vsel %vm4944, %v4755, 0.0
      %v4953 = vadd.f32 %v4951, %v4952
      %v4954 = vsel %vm4944, %v4756, 0.0
      %v4955 = vadd.f32 %v4953, %v4954
      %v4956 = vsel %vm4944, %v4757, 0.0
      %v4957 = vadd.f32 %v4955, %v4956
      %v4958 = vsel %vm4944, %v4758, 0.0
      %v4959 = vadd.f32 %v4957, %v4958
      %v4960 = vsel %vm4944, %v4759, 0.0
      %v4961 = vadd.f32 %v4959, %v4960
      %v4962 = vsel %vm4944, %v4760, 0.0
      %v4963 = vadd.f32 %v4961, %v4962
      %v4964 = vsel %vm4944, %v4761, 0.0
      %v4965 = vadd.f32 %v4963, %v4964
      %v4966 = vsel %vm4944, %v4762, 0.0
      %v4967 = vadd.f32 %v4965, %v4966
      %v4968 = vsel %vm4944, %v4763, 0.0
      %v4969 = vadd.f32 %v4967, %v4968
      %v4970 = vsel %vm4944, %v4764, 0.0
      %v4971 = vadd.f32 %v4969, %v4970
      %v4972 = vsel %vm4944, %v4765, 0.0
      %v4973 = vadd.f32 %v4971, %v4972
      %v4974 = vsel %vm4944, %v4766, 0.0
      %v4975 = vadd.f32 %v4973, %v4974
      %v4976 = vsel %vm4944, %v4767, 0.0
      %v4977 = vadd.f32 %v4975, %v4976
      %v4978 = vsel %vm4944, %v4768, 0.0
      %v4979 = vadd.f32 %v4977, %v4978
      %v4980 = vsel %vm4944, %v4769, 0.0
      %v4981 = vadd.f32 %v4979, %v4980
      %v4982 = vsel %vm4944, %v4770, 0.0
      %v4983 = vadd.f32 %v4981, %v4982
      %v4984 = vsel %vm4944, %v4771, 0.0
      %v4985 = vadd.f32 %v4983, %v4984
      %v4986 = vsel %vm4944, %v4772, 0.0
      %v4987 = vadd.f32 %v4985, %v4986
      %v4988 = vsel %vm4944, %v4773, 0.0
      %v4989 = vadd.f32 %v4987, %v4988
      %v4990 = vsel %vm4944, %v4774, 0.0
      %v4991 = vadd.f32 %v4989, %v4990
      %v4992 = vsel %vm4944, %v4775, 0.0
      %v4993 = vadd.f32 %v4991, %v4992
      %v4994 = vsel %vm4944, %v4776, 0.0
      %v4995 = vadd.f32 %v4993, %v4994
      %v4996 = vsel %vm4944, %v4777, 0.0
      %v4997 = vadd.f32 %v4995, %v4996
      %v4998 = vsel %vm4944, %v4778, 0.0
      %v4999 = vadd.f32 %v4997, %v4998
      %v5000 = vsel %vm4944, %v4779, 0.0
      %v5001 = vadd.f32 %v4999, %v5000
      %v5002 = vsel %vm4944, %v4780, 0.0
      %v5003 = vadd.f32 %v5001, %v5002
      %v5004 = vsel %vm4944, %v4781, 0.0
      %v5005 = vadd.f32 %v5003, %v5004
      %v5006 = vsel %vm4944, %v4782, 0.0
      %v5007 = vadd.f32 %v5005, %v5006
      %v5008 = vrot.slane %v5007, 4
      %v5009 = vadd.f32 %v5007, %v5008
      %v5010 = vrot.slane %v5009, 2
      %v5011 = vadd.f32 %v5009, %v5010
      %v5012 = vrot.slane %v5011, 1
      %v5013 = vadd.f32 %v5011, %v5012
      %vm5014 = vcmask 57344
      %5015 = vst.msk [vmem:[%s212] sm:$0x1] %vm5014, %v5013
      %v5016 = vmul.f32 %v4751, %v4751
      %v5017 = vmul.f32 %v4752, %v4752
      %v5018 = vmul.f32 %v4753, %v4753
      %v5019 = vmul.f32 %v4754, %v4754
      %v5020 = vmul.f32 %v4755, %v4755
      %v5021 = vmul.f32 %v4756, %v4756
      %v5022 = vmul.f32 %v4757, %v4757
      %v5023 = vmul.f32 %v4758, %v4758
      %v5024 = vmul.f32 %v4759, %v4759
      %v5025 = vmul.f32 %v4760, %v4760
      %v5026 = vmul.f32 %v4761, %v4761
      %v5027 = vmul.f32 %v4762, %v4762
      %v5028 = vmul.f32 %v4763, %v4763
      %v5029 = vmul.f32 %v4764, %v4764
      %v5030 = vmul.f32 %v4765, %v4765
      %v5031 = vmul.f32 %v4766, %v4766
      %v5032 = vmul.f32 %v4767, %v4767
      %v5033 = vmul.f32 %v4768, %v4768
      %v5034 = vmul.f32 %v4769, %v4769
      %v5035 = vmul.f32 %v4770, %v4770
      %v5036 = vmul.f32 %v4771, %v4771
      %v5037 = vmul.f32 %v4772, %v4772
      %v5038 = vmul.f32 %v4773, %v4773
      %v5039 = vmul.f32 %v4774, %v4774
      %v5040 = vmul.f32 %v4775, %v4775
      %v5041 = vmul.f32 %v4776, %v4776
      %v5042 = vmul.f32 %v4777, %v4777
      %v5043 = vmul.f32 %v4778, %v4778
      %v5044 = vmul.f32 %v4779, %v4779
      %v5045 = vmul.f32 %v4780, %v4780
      %v5046 = vmul.f32 %v4781, %v4781
      %v5047 = vmul.f32 %v4782, %v4782
      %v5048 = vsel %vm4944, %v5016, 0.0
      %v5049 = vsel %vm4944, %v5017, 0.0
      %v5050 = vadd.f32 %v5048, %v5049
      %v5051 = vsel %vm4944, %v5018, 0.0
      %v5052 = vadd.f32 %v5050, %v5051
      %v5053 = vsel %vm4944, %v5019, 0.0
      %v5054 = vadd.f32 %v5052, %v5053
      %v5055 = vsel %vm4944, %v5020, 0.0
      %v5056 = vadd.f32 %v5054, %v5055
      %v5057 = vsel %vm4944, %v5021, 0.0
      %v5058 = vadd.f32 %v5056, %v5057
      %v5059 = vsel %vm4944, %v5022, 0.0
      %v5060 = vadd.f32 %v5058, %v5059
      %v5061 = vsel %vm4944, %v5023, 0.0
      %v5062 = vadd.f32 %v5060, %v5061
      %v5063 = vsel %vm4944, %v5024, 0.0
      %v5064 = vadd.f32 %v5062, %v5063
      %v5065 = vsel %vm4944, %v5025, 0.0
      %v5066 = vadd.f32 %v5064, %v5065
      %v5067 = vsel %vm4944, %v5026, 0.0
      %v5068 = vadd.f32 %v5066, %v5067
      %v5069 = vsel %vm4944, %v5027, 0.0
      %v5070 = vadd.f32 %v5068, %v5069
      %v5071 = vsel %vm4944, %v5028, 0.0
      %v5072 = vadd.f32 %v5070, %v5071
      %v5073 = vsel %vm4944, %v5029, 0.0
      %v5074 = vadd.f32 %v5072, %v5073
      %v5075 = vsel %vm4944, %v5030, 0.0
      %v5076 = vadd.f32 %v5074, %v5075
      %v5077 = vsel %vm4944, %v5031, 0.0
      %v5078 = vadd.f32 %v5076, %v5077
      %v5079 = vsel %vm4944, %v5032, 0.0
      %v5080 = vadd.f32 %v5078, %v5079
      %v5081 = vsel %vm4944, %v5033, 0.0
      %v5082 = vadd.f32 %v5080, %v5081
      %v5083 = vsel %vm4944, %v5034, 0.0
      %v5084 = vadd.f32 %v5082, %v5083
      %v5085 = vsel %vm4944, %v5035, 0.0
      %v5086 = vadd.f32 %v5084, %v5085
      %v5087 = vsel %vm4944, %v5036, 0.0
      %v5088 = vadd.f32 %v5086, %v5087
      %v5089 = vsel %vm4944, %v5037, 0.0
      %v5090 = vadd.f32 %v5088, %v5089
      %v5091 = vsel %vm4944, %v5038, 0.0
      %v5092 = vadd.f32 %v5090, %v5091
      %v5093 = vsel %vm4944, %v5039, 0.0
      %v5094 = vadd.f32 %v5092, %v5093
      %v5095 = vsel %vm4944, %v5040, 0.0
      %v5096 = vadd.f32 %v5094, %v5095
      %v5097 = vsel %vm4944, %v5041, 0.0
      %v5098 = vadd.f32 %v5096, %v5097
      %v5099 = vsel %vm4944, %v5042, 0.0
      %v5100 = vadd.f32 %v5098, %v5099
      %v5101 = vsel %vm4944, %v5043, 0.0
      %v5102 = vadd.f32 %v5100, %v5101
      %v5103 = vsel %vm4944, %v5044, 0.0
      %v5104 = vadd.f32 %v5102, %v5103
      %v5105 = vsel %vm4944, %v5045, 0.0
      %v5106 = vadd.f32 %v5104, %v5105
      %v5107 = vsel %vm4944, %v5046, 0.0
      %v5108 = vadd.f32 %v5106, %v5107
      %v5109 = vsel %vm4944, %v5047, 0.0
      %v5110 = vadd.f32 %v5108, %v5109
      %v5111 = vrot.slane %v5110, 4
      %v5112 = vadd.f32 %v5110, %v5111
      %v5113 = vrot.slane %v5112, 2
      %v5114 = vadd.f32 %v5112, %v5113
      %v5115 = vrot.slane %v5114, 1
      %v5116 = vadd.f32 %v5114, %v5115
      %5117 = vst.msk [vmem:[%s212 + $0x1] sm:$0x1] %vm5014, %v5116
      %s5118 = smul.u32 32, %s20
      %p5119 = scmp.lt.s32.totalorder %s19, 1
      %s5120 = scalar_select %p5119, %s19, 1
      %p5121 = scmp.lt.s32.totalorder %s5118, 31
      %s5122 = scalar_select %p5121, %s5118, 31
      %s5123 = smul.addr %s5120, 32
      %s5124 = sadd.s32 %s5122, %s5123
      %s5125 = smul.addr %s5124, 4
      %s5126 = scalar_lea.vmem %s2, %s5125
      %p5127 = scmp.lt.s32.totalorder %s19, 1
      %s5128 = scalar_select %p5127, %s19, 1
      %p5129 = scmp.lt.s32.totalorder %s20, 0
      %s5130 = scalar_select %p5129, %s20, 0
      %s5131 = sadd.s32 %s5130, %s5128
      %s5132 = smul.addr %s5131, 2
      %s5133 = scalar_lea.vmem %s3, %s5132
      // Predicated region
      $region29: #{_lambda_.2} parent=27 // pred_check
        %p5134 = pneg %p94
      $region30: #{_lambda_.2} parent=27 // pred_check_branch
        %5136 = sbr.rel (%p5134) target = $region32
      $region31: #{_lambda_.2} parent=27 // pred_region
        %s5137 = smul.u32 32, %s20
      $region32: #{_lambda_.2} parent=27 // pred_fallthru
        _
      // Predicated region
      $region33: #{_lambda_.2} parent=27 // pred_check
        %p5138 = pneg %p122
      $region34: #{_lambda_.2} parent=27 // pred_check_branch
        %5140 = sbr.rel (%p5138) target = $region36
      $region35: #{_lambda_.2} parent=27 // pred_region
        _
      $region36: #{_lambda_.2} parent=27 // pred_fallthru
        _
    $region28: #{_lambda_.2} parent=5 // pred_fallthru
      _
    %p5141 = scmp.le.s32.totalorder 2, %s10
    // Predicated region
    $region37: #{_lambda_.2} parent=5 // pred_check
      %p5142 = pneg %p5141
    $region38: #{_lambda_.2} parent=5 // pred_check_branch
      %5144 = sbr.rel (%p5142) target = $region40
    $region39: #{_lambda_.2} parent=5 // pred_region
      %s5145 = ssub.s32 %s10, 2
      // Predicated region
      $region41: #{_lambda_.2} parent=39 // pred_check
        %p5146 = pneg %p100
      $region42: #{_lambda_.2} parent=39 // pred_check_branch
        %5148 = sbr.rel (%p5146) target = $region44
      $region43: #{_lambda_.2} parent=39 // pred_region
        %s5149 = smul.u32 32, %s22
        %p5150 = scmp.lt.s32.totalorder %s21, 1
        %s5151 = scalar_select %p5150, %s21, 1
        %p5152 = scmp.lt.s32.totalorder %s5149, 31
        %s5153 = scalar_select %p5152, %s5149, 31
        %s5154 = smul.addr %s5151, 32
        %s5155 = sadd.s32 %s5153, %s5154
        %s5156 = smul.addr %s5155, 4
        %s5157 = scalar_lea.vmem %s2, %s5156
      $region44: #{_lambda_.2} parent=39 // pred_fallthru
        _
      // Predicated region
      $region45: #{_lambda_.2} parent=39 // pred_check
        %p5158 = pneg %p128
      $region46: #{_lambda_.2} parent=39 // pred_check_branch
        %5160 = sbr.rel (%p5158) target = $region48
      $region47: #{_lambda_.2} parent=39 // pred_region
        %p5161 = scmp.lt.s32.totalorder %s21, 1
        %s5162 = scalar_select %p5161, %s21, 1
        %p5163 = scmp.lt.s32.totalorder %s22, 0
        %s5164 = scalar_select %p5163, %s22, 0
        %s5165 = sadd.s32 %s5164, %s5162
        %s5166 = smul.addr %s5165, 2
        %s5167 = scalar_lea.vmem %s3, %s5166
      $region48: #{_lambda_.2} parent=39 // pred_fallthru
        _
    $region40: #{_lambda_.2} parent=5 // pred_fallthru
      _
  $region6: #{_lambda_.2} parent=0 // loop_footer
    %s14 = sadd.s32 1, %s10
  $region7: #{_lambda_.2} parent=0 // loop_footer_branch
    %9 = sbr.rel target = $region3
  $region8: #{_lambda_.2} parent=0 // loop_exit
    _

</llo_original>
